<compile_context>
chip_gen: v7x
topology: tpu7x:2x2x1
jax: 0.10.0
libtpu: 0.0.40
codegen_flags: <defaults>
</compile_context>

<pallas_src>
import jax
import jax.numpy as jnp
from jax.experimental import pallas as pl
from jax.experimental.pallas import tpu as pltpu

INPUT_DIM = 482
LATENT_DIM = 2
HIDDEN_DIM = 8

Z_PAD = 128          # lane-dense width for the z output stream
TB_MAX = 1024        # batch tile rows (fits the v5e 16 MiB scoped-VMEM default)


def _round_up(n, m):
    return ((n + m - 1) // m) * m


def autoencoder_kernel(x_ref,
                       w1_ref, b1_ref,
                       w2_ref, b2_ref,
                       w3_ref, b3_ref,
                       w4_ref, b4_ref,
                       xhat_ref, z_ref):
    x = x_ref[...]                                   # (tb, 482)

    # ---- encoder ----
    # Linear(482->8): wide-K matmul on the MXU (compute hidden under DMA,
    # so exact-f32 precision is free).
    h1 = jnp.dot(x, w1_ref[...],
                 preferred_element_type=jnp.float32,
                 precision=jax.lax.Precision.HIGHEST) + b1_ref[...]
    h1 = jnp.maximum(h1, 0.0)                        # ReLU, (tb, 8)

    # Linear(8->2), padded to 128 output lanes: N=2 matmul would waste a full
    # MXU pass -> VPU broadcast-FMAs into a lane-dense (tb, 128) result whose
    # columns >= 2 are exactly zero (w2/b2 are zero-padded).
    z = b2_ref[...] + h1[:, 0:1] * w2_ref[0:1, :]    # (tb, 128)
    for j in range(1, HIDDEN_DIM):
        z = z + h1[:, j:j + 1] * w2_ref[j:j + 1, :]

    # ---- decoder ----
    # Linear(2->8): K=2 -> VPU broadcast-FMAs using the two live z columns.
    h2 = b3_ref[...] + z[:, 0:1] * w3_ref[0:1, :]    # (tb, 8)
    h2 = h2 + z[:, 1:2] * w3_ref[1:2, :]
    h2 = jnp.maximum(h2, 0.0)                        # ReLU

    # Linear(8->482): wide-N matmul on the MXU.
    x_hat = jnp.dot(h2, w4_ref[...],
                    preferred_element_type=jnp.float32,
                    precision=jax.lax.Precision.HIGHEST) + b4_ref[...]

    z_ref[...] = z.astype(z_ref.dtype)
    xhat_ref[...] = x_hat.astype(xhat_ref.dtype)


def autoencoder_forward(x, params):
    """x: (B, INPUT_DIM) f32 -> (x_hat: (B, INPUT_DIM), z: (B, LATENT_DIM))."""
    B = x.shape[0]
    w1, b1, w2, b2, w3, b3, w4, b4 = params

    # Tiny head padded to 128 output lanes once (zero pad: numerically inert).
    w2_p = jnp.pad(w2, ((0, 0), (0, Z_PAD - LATENT_DIM)))   # (8, 128)
    b2_p = jnp.pad(b2, ((0, 0), (0, Z_PAD - LATENT_DIM)))   # (1, 128)

    # ---- batch tiling ----
    # >= 2 grid steps so the parallel axis shards across both v7x TensorCores;
    # tile rows rounded up to 8 (sublane rule) to minimize batch padding.
    n_tiles = max(2, pl.cdiv(B, TB_MAX))
    tb = _round_up(pl.cdiv(B, n_tiles), 8)
    b_pad = n_tiles * tb
    x_in = x if b_pad == B else jnp.pad(x, ((0, b_pad - B), (0, 0)))
    grid = (n_tiles,)

    # Streaming specs: x / x_hat / z tiled over the batch grid.
    # Last block dim == full array dim (482) -> no feature padding needed.
    x_spec = pl.BlockSpec((tb, INPUT_DIM), lambda i: (i, 0))
    xhat_spec = pl.BlockSpec((tb, INPUT_DIM), lambda i: (i, 0))
    z_spec = pl.BlockSpec((tb, Z_PAD), lambda i: (i, 0))

    # Resident specs: constant block index -> DMA'd once, reused every step.
    def resident(arr):
        return pl.BlockSpec(arr.shape, lambda i: (0, 0))

    param_arrays = (w1, b1, w2_p, b2_p, w3, b3, w4, b4)
    param_specs = [resident(p) for p in param_arrays]

    out_shape = (
        jax.ShapeDtypeStruct((b_pad, INPUT_DIM), jnp.float32),  # x_hat
        jax.ShapeDtypeStruct((b_pad, Z_PAD), jnp.float32),      # z (lane-dense)
    )

    x_hat_p, z_p = pl.pallas_call(
        autoencoder_kernel,
        out_shape=out_shape,
        grid=grid,
        in_specs=[x_spec] + param_specs,
        out_specs=(xhat_spec, z_spec),
        compiler_params=pltpu.CompilerParams(
            dimension_semantics=("parallel",),
        ),
    )(x_in, *param_arrays)

    x_hat = x_hat_p if b_pad == B else x_hat_p[:B]
    z = z_p[:B, :LATENT_DIM]
    return x_hat, z


def init_params(key):
    """Deterministic init mirroring the nn.Linear shapes of the PyTorch module."""
    ks = jax.random.split(key, 8)

    def lin(kw, kb, fan_in, fan_out):
        bound = 1.0 / jnp.sqrt(jnp.float32(fan_in))
        w = jax.random.uniform(kw, (fan_in, fan_out), jnp.float32, -bound, bound)
        b = jax.random.uniform(kb, (1, fan_out), jnp.float32, -bound, bound)
        return w, b

    w1, b1 = lin(ks[0], ks[1], INPUT_DIM, HIDDEN_DIM)    # encoder Linear(482, 8)
    w2, b2 = lin(ks[2], ks[3], HIDDEN_DIM, LATENT_DIM)   # encoder Linear(8, 2)
    w3, b3 = lin(ks[4], ks[5], LATENT_DIM, HIDDEN_DIM)   # decoder Linear(2, 8)
    w4, b4 = lin(ks[6], ks[7], HIDDEN_DIM, INPUT_DIM)    # decoder Linear(8, 482)
    return (w1, b1, w2, b2, w3, b3, w4, b4)


def reference_forward(x, params):
    w1, b1, w2, b2, w3, b3, w4, b4 = params
    h1 = jnp.maximum(x @ w1 + b1, 0.0)
    z = h1 @ w2 + b2
    h2 = jnp.maximum(z @ w3 + b3, 0.0)
    x_hat = h2 @ w4 + b4
    return x_hat, z


if __name__ == "__main__":
    key = jax.random.PRNGKey(0)
    k_params, k_x = jax.random.split(key)

    params = init_params(k_params)
    B = 8
    x = jax.random.normal(k_x, (B, INPUT_DIM), jnp.float32)

    x_hat, z = autoencoder_forward(x, params)
    jax.block_until_ready((x_hat, z))

    # correctness check against plain-JAX reference
    x_hat_ref, z_ref = reference_forward(x, params)
    assert x_hat.shape == (B, INPUT_DIM) and z.shape == (B, LATENT_DIM)
    assert jnp.allclose(x_hat, x_hat_ref, atol=1e-4, rtol=1e-4)
    assert jnp.allclose(z, z_ref, atol=1e-4, rtol=1e-4)

    print("KERNEL_OK")
</pallas_src>

<mosaic_0001>
module attributes {stable_mosaic.version = 11 : i64} {
  func.func @autoencoder_kernel(%arg0: i32, %arg1: memref<8x482xf32, #tpu.memory_space<vmem>>, %arg2: memref<482x8xf32, #tpu.memory_space<vmem>>, %arg3: memref<1x8xf32, #tpu.memory_space<vmem>>, %arg4: memref<8x128xf32, #tpu.memory_space<vmem>>, %arg5: memref<1x128xf32, #tpu.memory_space<vmem>>, %arg6: memref<2x8xf32, #tpu.memory_space<vmem>>, %arg7: memref<1x8xf32, #tpu.memory_space<vmem>>, %arg8: memref<8x482xf32, #tpu.memory_space<vmem>>, %arg9: memref<1x482xf32, #tpu.memory_space<vmem>>, %arg10: memref<8x482xf32, #tpu.memory_space<vmem>>, %arg11: memref<8x128xf32, #tpu.memory_space<vmem>>) attributes {dimension_semantics = [#tpu.dimension_semantics<parallel>], iteration_bounds = array<i64: 2>, scalar_prefetch = 0 : i64, scratch_operands = 0 : i64, tpu.core_type = #tpu.core_type<tc>, window_params = [{transform_indices = @transform_0, window_bounds = array<i64: 8, 482>}, {pipeline_mode = #tpu.pipeline_mode<synchronous>, transform_indices = @transform_1, window_bounds = array<i64: 482, 8>}, {pipeline_mode = #tpu.pipeline_mode<synchronous>, transform_indices = @transform_2, window_bounds = array<i64: 1, 8>}, {pipeline_mode = #tpu.pipeline_mode<synchronous>, transform_indices = @transform_3, window_bounds = array<i64: 8, 128>}, {pipeline_mode = #tpu.pipeline_mode<synchronous>, transform_indices = @transform_4, window_bounds = array<i64: 1, 128>}, {pipeline_mode = #tpu.pipeline_mode<synchronous>, transform_indices = @transform_5, window_bounds = array<i64: 2, 8>}, {pipeline_mode = #tpu.pipeline_mode<synchronous>, transform_indices = @transform_6, window_bounds = array<i64: 1, 8>}, {pipeline_mode = #tpu.pipeline_mode<synchronous>, transform_indices = @transform_7, window_bounds = array<i64: 8, 482>}, {pipeline_mode = #tpu.pipeline_mode<synchronous>, transform_indices = @transform_8, window_bounds = array<i64: 1, 482>}, {transform_indices = @transform_9, window_bounds = array<i64: 8, 482>}, {transform_indices = @transform_10, window_bounds = array<i64: 8, 128>}]} {
    %c0 = arith.constant 0 : index
    %c0_0 = arith.constant 0 : index
    %0 = vector.load %arg1[%c0, %c0_0] : memref<8x482xf32, #tpu.memory_space<vmem>>, vector<8x482xf32>
    %c0_1 = arith.constant 0 : index
    %c0_2 = arith.constant 0 : index
    %1 = vector.load %arg2[%c0_1, %c0_2] : memref<482x8xf32, #tpu.memory_space<vmem>>, vector<482x8xf32>
    %cst = arith.constant dense<0.000000e+00> : vector<8x8xf32>
    %2 = tpu.matmul %0, %1, %cst {dimension_numbers = #tpu.dot_dimension_numbers<[1], [0], [0], [1], [0, 0, 1, 1], [], []>, precision = #tpu.contract_precision<fp32>} : vector<8x482xf32>, vector<482x8xf32>, vector<8x8xf32> -> vector<8x8xf32>
    %c0_3 = arith.constant 0 : index
    %c0_4 = arith.constant 0 : index
    %3 = vector.load %arg3[%c0_3, %c0_4] : memref<1x8xf32, #tpu.memory_space<vmem>>, vector<1x8xf32>
    %4 = vector.broadcast %3 : vector<1x8xf32> to vector<8x8xf32>
    %5 = arith.addf %2, %4 : vector<8x8xf32>
    %cst_5 = arith.constant 0.000000e+00 : f32
    %6 = vector.broadcast %cst_5 : f32 to vector<8x8xf32>
    %7 = arith.maximumf %5, %6 : vector<8x8xf32>
    %c0_6 = arith.constant 0 : index
    %c0_7 = arith.constant 0 : index
    %8 = vector.load %arg5[%c0_6, %c0_7] : memref<1x128xf32, #tpu.memory_space<vmem>>, vector<1x128xf32>
    %9 = vector.extract_strided_slice %7 {offsets = [0, 0], sizes = [8, 1], strides = [1, 1]} : vector<8x8xf32> to vector<8x1xf32>
    %c0_8 = arith.constant 0 : index
    %c0_9 = arith.constant 0 : index
    %10 = vector.load %arg4[%c0_8, %c0_9] : memref<8x128xf32, #tpu.memory_space<vmem>>, vector<1x128xf32>
    %11 = vector.broadcast %9 : vector<8x1xf32> to vector<8x128xf32>
    %12 = vector.broadcast %10 : vector<1x128xf32> to vector<8x128xf32>
    %13 = arith.mulf %11, %12 : vector<8x128xf32>
    %14 = vector.broadcast %8 : vector<1x128xf32> to vector<8x128xf32>
    %15 = arith.addf %14, %13 : vector<8x128xf32>
    %16 = vector.extract_strided_slice %7 {offsets = [0, 1], sizes = [8, 1], strides = [1, 1]} : vector<8x8xf32> to vector<8x1xf32>
    %c1 = arith.constant 1 : index
    %c0_10 = arith.constant 0 : index
    %17 = vector.load %arg4[%c1, %c0_10] : memref<8x128xf32, #tpu.memory_space<vmem>>, vector<1x128xf32>
    %18 = vector.broadcast %16 : vector<8x1xf32> to vector<8x128xf32>
    %19 = vector.broadcast %17 : vector<1x128xf32> to vector<8x128xf32>
    %20 = arith.mulf %18, %19 : vector<8x128xf32>
    %21 = arith.addf %15, %20 : vector<8x128xf32>
    %22 = vector.extract_strided_slice %7 {offsets = [0, 2], sizes = [8, 1], strides = [1, 1]} : vector<8x8xf32> to vector<8x1xf32>
    %c2 = arith.constant 2 : index
    %c0_11 = arith.constant 0 : index
    %23 = vector.load %arg4[%c2, %c0_11] : memref<8x128xf32, #tpu.memory_space<vmem>>, vector<1x128xf32>
    %24 = vector.broadcast %22 : vector<8x1xf32> to vector<8x128xf32>
    %25 = vector.broadcast %23 : vector<1x128xf32> to vector<8x128xf32>
    %26 = arith.mulf %24, %25 : vector<8x128xf32>
    %27 = arith.addf %21, %26 : vector<8x128xf32>
    %28 = vector.extract_strided_slice %7 {offsets = [0, 3], sizes = [8, 1], strides = [1, 1]} : vector<8x8xf32> to vector<8x1xf32>
    %c3 = arith.constant 3 : index
    %c0_12 = arith.constant 0 : index
    %29 = vector.load %arg4[%c3, %c0_12] : memref<8x128xf32, #tpu.memory_space<vmem>>, vector<1x128xf32>
    %30 = vector.broadcast %28 : vector<8x1xf32> to vector<8x128xf32>
    %31 = vector.broadcast %29 : vector<1x128xf32> to vector<8x128xf32>
    %32 = arith.mulf %30, %31 : vector<8x128xf32>
    %33 = arith.addf %27, %32 : vector<8x128xf32>
    %34 = vector.extract_strided_slice %7 {offsets = [0, 4], sizes = [8, 1], strides = [1, 1]} : vector<8x8xf32> to vector<8x1xf32>
    %c4 = arith.constant 4 : index
    %c0_13 = arith.constant 0 : index
    %35 = vector.load %arg4[%c4, %c0_13] : memref<8x128xf32, #tpu.memory_space<vmem>>, vector<1x128xf32>
    %36 = vector.broadcast %34 : vector<8x1xf32> to vector<8x128xf32>
    %37 = vector.broadcast %35 : vector<1x128xf32> to vector<8x128xf32>
    %38 = arith.mulf %36, %37 : vector<8x128xf32>
    %39 = arith.addf %33, %38 : vector<8x128xf32>
    %40 = vector.extract_strided_slice %7 {offsets = [0, 5], sizes = [8, 1], strides = [1, 1]} : vector<8x8xf32> to vector<8x1xf32>
    %c5 = arith.constant 5 : index
    %c0_14 = arith.constant 0 : index
    %41 = vector.load %arg4[%c5, %c0_14] : memref<8x128xf32, #tpu.memory_space<vmem>>, vector<1x128xf32>
    %42 = vector.broadcast %40 : vector<8x1xf32> to vector<8x128xf32>
    %43 = vector.broadcast %41 : vector<1x128xf32> to vector<8x128xf32>
    %44 = arith.mulf %42, %43 : vector<8x128xf32>
    %45 = arith.addf %39, %44 : vector<8x128xf32>
    %46 = vector.extract_strided_slice %7 {offsets = [0, 6], sizes = [8, 1], strides = [1, 1]} : vector<8x8xf32> to vector<8x1xf32>
    %c6 = arith.constant 6 : index
    %c0_15 = arith.constant 0 : index
    %47 = vector.load %arg4[%c6, %c0_15] : memref<8x128xf32, #tpu.memory_space<vmem>>, vector<1x128xf32>
    %48 = vector.broadcast %46 : vector<8x1xf32> to vector<8x128xf32>
    %49 = vector.broadcast %47 : vector<1x128xf32> to vector<8x128xf32>
    %50 = arith.mulf %48, %49 : vector<8x128xf32>
    %51 = arith.addf %45, %50 : vector<8x128xf32>
    %52 = vector.extract_strided_slice %7 {offsets = [0, 7], sizes = [8, 1], strides = [1, 1]} : vector<8x8xf32> to vector<8x1xf32>
    %c7 = arith.constant 7 : index
    %c0_16 = arith.constant 0 : index
    %53 = vector.load %arg4[%c7, %c0_16] : memref<8x128xf32, #tpu.memory_space<vmem>>, vector<1x128xf32>
    %54 = vector.broadcast %52 : vector<8x1xf32> to vector<8x128xf32>
    %55 = vector.broadcast %53 : vector<1x128xf32> to vector<8x128xf32>
    %56 = arith.mulf %54, %55 : vector<8x128xf32>
    %57 = arith.addf %51, %56 : vector<8x128xf32>
    %c0_17 = arith.constant 0 : index
    %c0_18 = arith.constant 0 : index
    %58 = vector.load %arg7[%c0_17, %c0_18] : memref<1x8xf32, #tpu.memory_space<vmem>>, vector<1x8xf32>
    %59 = vector.extract_strided_slice %57 {offsets = [0, 0], sizes = [8, 1], strides = [1, 1]} : vector<8x128xf32> to vector<8x1xf32>
    %c0_19 = arith.constant 0 : index
    %c0_20 = arith.constant 0 : index
    %60 = vector.load %arg6[%c0_19, %c0_20] : memref<2x8xf32, #tpu.memory_space<vmem>>, vector<1x8xf32>
    %61 = vector.broadcast %59 : vector<8x1xf32> to vector<8x8xf32>
    %62 = vector.broadcast %60 : vector<1x8xf32> to vector<8x8xf32>
    %63 = arith.mulf %61, %62 : vector<8x8xf32>
    %64 = vector.broadcast %58 : vector<1x8xf32> to vector<8x8xf32>
    %65 = arith.addf %64, %63 : vector<8x8xf32>
    %66 = vector.extract_strided_slice %57 {offsets = [0, 1], sizes = [8, 1], strides = [1, 1]} : vector<8x128xf32> to vector<8x1xf32>
    %c1_21 = arith.constant 1 : index
    %c0_22 = arith.constant 0 : index
    %67 = vector.load %arg6[%c1_21, %c0_22] : memref<2x8xf32, #tpu.memory_space<vmem>>, vector<1x8xf32>
    %68 = vector.broadcast %66 : vector<8x1xf32> to vector<8x8xf32>
    %69 = vector.broadcast %67 : vector<1x8xf32> to vector<8x8xf32>
    %70 = arith.mulf %68, %69 : vector<8x8xf32>
    %71 = arith.addf %65, %70 : vector<8x8xf32>
    %cst_23 = arith.constant 0.000000e+00 : f32
    %72 = vector.broadcast %cst_23 : f32 to vector<8x8xf32>
    %73 = arith.maximumf %71, %72 : vector<8x8xf32>
    %c0_24 = arith.constant 0 : index
    %c0_25 = arith.constant 0 : index
    %74 = vector.load %arg8[%c0_24, %c0_25] : memref<8x482xf32, #tpu.memory_space<vmem>>, vector<8x482xf32>
    %cst_26 = arith.constant dense<0.000000e+00> : vector<8x482xf32>
    %75 = tpu.matmul %73, %74, %cst_26 {dimension_numbers = #tpu.dot_dimension_numbers<[1], [0], [0], [1], [0, 0, 1, 1], [], []>, precision = #tpu.contract_precision<fp32>} : vector<8x8xf32>, vector<8x482xf32>, vector<8x482xf32> -> vector<8x482xf32>
    %c0_27 = arith.constant 0 : index
    %c0_28 = arith.constant 0 : index
    %76 = vector.load %arg9[%c0_27, %c0_28] : memref<1x482xf32, #tpu.memory_space<vmem>>, vector<1x482xf32>
    %77 = vector.broadcast %76 : vector<1x482xf32> to vector<8x482xf32>
    %78 = arith.addf %75, %77 : vector<8x482xf32>
    %c0_29 = arith.constant 0 : index
    %c0_30 = arith.constant 0 : index
    %79 = vector.load %arg11[%c0_29, %c0_30] : memref<8x128xf32, #tpu.memory_space<vmem>>, vector<8x128xf32>
    tpu.vector_store %arg11[%c0_29, %c0_30], %57 {strides = array<i32>} : memref<8x128xf32, #tpu.memory_space<vmem>>, vector<8x128xf32>,
    %c0_31 = arith.constant 0 : index
    %c0_32 = arith.constant 0 : index
    %80 = vector.load %arg10[%c0_31, %c0_32] : memref<8x482xf32, #tpu.memory_space<vmem>>, vector<8x482xf32>
    tpu.vector_store %arg10[%c0_31, %c0_32], %78 {strides = array<i32>} : memref<8x482xf32, #tpu.memory_space<vmem>>, vector<8x482xf32>,
    return
  }
  func.func @transform_0(%arg0: i32) -> (i32, i32) {
    %c0_i32 = arith.constant 0 : i32
    %c0_i32_0 = arith.constant 0 : i32
    return %arg0, %c0_i32 : i32, i32
  }
  func.func @transform_1(%arg0: i32) -> (i32, i32) {
    %c0_i32 = arith.constant 0 : i32
    %c0_i32_0 = arith.constant 0 : i32
    %c0_i32_1 = arith.constant 0 : i32
    return %c0_i32, %c0_i32_0 : i32, i32
  }
  func.func @transform_2(%arg0: i32) -> (i32, i32) {
    %c0_i32 = arith.constant 0 : i32
    %c0_i32_0 = arith.constant 0 : i32
    %c0_i32_1 = arith.constant 0 : i32
    return %c0_i32, %c0_i32_0 : i32, i32
  }
  func.func @transform_3(%arg0: i32) -> (i32, i32) {
    %c0_i32 = arith.constant 0 : i32
    %c0_i32_0 = arith.constant 0 : i32
    %c0_i32_1 = arith.constant 0 : i32
    return %c0_i32, %c0_i32_0 : i32, i32
  }
  func.func @transform_4(%arg0: i32) -> (i32, i32) {
    %c0_i32 = arith.constant 0 : i32
    %c0_i32_0 = arith.constant 0 : i32
    %c0_i32_1 = arith.constant 0 : i32
    return %c0_i32, %c0_i32_0 : i32, i32
  }
  func.func @transform_5(%arg0: i32) -> (i32, i32) {
    %c0_i32 = arith.constant 0 : i32
    %c0_i32_0 = arith.constant 0 : i32
    %c0_i32_1 = arith.constant 0 : i32
    return %c0_i32, %c0_i32_0 : i32, i32
  }
  func.func @transform_6(%arg0: i32) -> (i32, i32) {
    %c0_i32 = arith.constant 0 : i32
    %c0_i32_0 = arith.constant 0 : i32
    %c0_i32_1 = arith.constant 0 : i32
    return %c0_i32, %c0_i32_0 : i32, i32
  }
  func.func @transform_7(%arg0: i32) -> (i32, i32) {
    %c0_i32 = arith.constant 0 : i32
    %c0_i32_0 = arith.constant 0 : i32
    %c0_i32_1 = arith.constant 0 : i32
    return %c0_i32, %c0_i32_0 : i32, i32
  }
  func.func @transform_8(%arg0: i32) -> (i32, i32) {
    %c0_i32 = arith.constant 0 : i32
    %c0_i32_0 = arith.constant 0 : i32
    %c0_i32_1 = arith.constant 0 : i32
    return %c0_i32, %c0_i32_0 : i32, i32
  }
  func.func @transform_9(%arg0: i32) -> (i32, i32) {
    %c0_i32 = arith.constant 0 : i32
    %c0_i32_0 = arith.constant 0 : i32
    return %arg0, %c0_i32 : i32, i32
  }
  func.func @transform_10(%arg0: i32) -> (i32, i32) {
    %c0_i32 = arith.constant 0 : i32
    %c0_i32_0 = arith.constant 0 : i32
    return %arg0, %c0_i32 : i32, i32
  }
}

</mosaic_0001>

<llo_original>
// kernel: tpu_custom_call.1
$region0: #{tpu_custom_call.1}
  #allocation0 [shape = 'u32[]', space=smem, size = 0x4, offset = 0x4, fixed_abs, tag = 'smem constant byte address 0x4 - core index']
  #allocation1 [shape = 'u32[144,128]{1,0:T(1,128)}', space=vmem, size = 0x12000, scoped, tag = 'internal scratch']
  %s0 = inlined_call_operand.vmem [shape: f32[16,482], index: 0, kind: input, shape index: {}]
  %s1 = inlined_call_operand.vmem [shape: f32[482,8], index: 1, kind: input, shape index: {}]
  %s2 = inlined_call_operand.vmem [shape: f32[1,8], index: 2, kind: input, shape index: {}]
  %s3 = inlined_call_operand.vmem [shape: f32[8,128], index: 3, kind: input, shape index: {}]
  %s4 = inlined_call_operand.vmem [shape: f32[1,128], index: 4, kind: input, shape index: {}]
  %s5 = inlined_call_operand.vmem [shape: f32[2,8], index: 5, kind: input, shape index: {}]
  %s6 = inlined_call_operand.vmem [shape: f32[1,8], index: 6, kind: input, shape index: {}]
  %s7 = inlined_call_operand.vmem [shape: f32[8,482], index: 7, kind: input, shape index: {}]
  %s8 = inlined_call_operand.vmem [shape: f32[1,482], index: 8, kind: input, shape index: {}]
  %s9 = inlined_call_operand.hbm [shape: f32[16,482], index: 9, kind: output, shape index: {0}]
  %s10 = inlined_call_operand.hbm [shape: f32[16,128], index: 10, kind: output, shape index: {1}]
  %11 = xla_tuple %s9, %s10
  %s12 = sld [smem:[#allocation0]]
  $region77: #{tpu_custom_call.1} parent=0
    _
  %s14 = ssub.s32 1, %s12
  %s15 = scalar_select 0, %s14, %s12
  $region1: #{tpu_custom_call.1} parent=0
    #allocation2 [shape = 'u8[32768]{0}', space=vmem, size = 0x8000, scoped, tag = 'output window, operand 0']
    #allocation3 [shape = 's32[2]{0}', space=sflag, size = 0x8, scoped, tag = 'scoped memory for tpu_custom_call.1']
    #allocation4 [shape = 'u8[8192]{0}', space=vmem, size = 0x2000, scoped, tag = 'output window, operand 1']
    #allocation5 [shape = 's32[2]{0}', space=sflag, size = 0x8, scoped, tag = 'scoped memory for tpu_custom_call.1']
    %16 = vsyncpa [#allocation3], 0
    %s17 = scalar_lea.sflag [#allocation3], 1
    %18 = vsyncpa %s17, 0
    %19 = vsyncpa [#allocation5], 0
    %s20 = scalar_lea.sflag [#allocation5], 1
    %21 = vsyncpa %s20, 0
    loop: start=0, step=1, limit=4
    $region2: #{tpu_custom_call.1} parent=1 // loop_pre_header
      _
    $region3: #{tpu_custom_call.1} parent=1 // loop_header
      %s23 = sphi 0, %s27
      %p24 = scmp.ge.s32.totalorder %s23, 4
      %s33 = sphi 0, %s35
      %s36 = sphi 0, %s33
      %s37 = sphi 0, %s36
      %s53 = sphi 0, %s37
      %s57 = sphi 0, %s57
      %s59 = sphi 0, %s57
      %s60 = sphi 0, %s59
      %s74 = sphi 0, %s60
      %s78 = sphi 0, %s78
      %s80 = sphi 0, %s78
      %s81 = sphi 0, %s80
      %s95 = sphi 0, %s81
      %s99 = sphi 0, %s99
      %s101 = sphi 0, %s99
      %s102 = sphi 0, %s101
      %s116 = sphi 0, %s102
      %s120 = sphi 0, %s120
      %s122 = sphi 0, %s120
      %s123 = sphi 0, %s122
      %s137 = sphi 0, %s123
      %s141 = sphi 0, %s141
      %s143 = sphi 0, %s141
      %s144 = sphi 0, %s143
      %s158 = sphi 0, %s144
      %s162 = sphi 0, %s162
      %s164 = sphi 0, %s162
      %s165 = sphi 0, %s164
      %s179 = sphi 0, %s165
      %s183 = sphi 0, %s183
      %s185 = sphi 0, %s183
      %s186 = sphi 0, %s185
      %s200 = sphi 0, %s186
      %s204 = sphi 0, %s204
      %s206 = sphi 0, %s204
      %s207 = sphi 0, %s206
      %s221 = sphi 0, %s207
      %s227 = sphi 0, %s229
      %s230 = sphi 0, %s227
      %s231 = sphi 0, %s230
      %s247 = sphi 0, %s231
      %s253 = sphi 0, %s255
      %s256 = sphi 0, %s253
      %s257 = sphi 0, %s256
      %s273 = sphi 0, %s257
    $region4: #{tpu_custom_call.1} parent=1 // loop_header_branch
      %26 = sbr.rel (%p24) target = $region8
    $region5: #{tpu_custom_call.1} parent=1 // loop_body
      %s28 = ssub.s32 %s23, 1
      %s29 = ssub.s32 %s23, 2
      %s30 = sadd.s32 %s23, 1
      %s31 = ssub.s32 %s23, %s30
      %p32 = scmp.eq.s32.totalorder %s31, 0
      %s34 = sadd.s32 %s33, 1
      %s35 = scalar_select %p32, %s33, %s34
      %p38 = pneg %p32
      %p39 = scmp.eq.s32.totalorder %s23, 1
      %p40 = por %p38, %p39
      %p41 = scmp.ne.s32.totalorder %s33, %s36
      %p42 = scmp.eq.s32.totalorder %s23, 0
      %p43 = por %p41, %p42
      %p44 = scmp.ne.s32.totalorder %s33, %s36
      %p45 = scmp.eq.s32.totalorder %s28, 1
      %p46 = por %p44, %p45
      %p47 = scmp.ne.s32.totalorder %s36, %s37
      %p48 = scmp.eq.s32.totalorder %s28, 0
      %p49 = por %p47, %p48
      %p50 = scmp.ne.s32.totalorder %s36, %s37
      %p51 = scmp.eq.s32.totalorder %s29, 1
      %p52 = por %p50, %p51
      %p54 = scmp.ne.s32.totalorder %s37, %s53
      %p55 = scmp.eq.s32.totalorder %s29, 0
      %p56 = por %p54, %p55
      %s58 = sadd.s32 %s57, 1
      %p61 = scmp.eq.s32.totalorder %s23, 1
      %p62 = scmp.ne.s32.totalorder %s57, %s59
      %p63 = scmp.eq.s32.totalorder %s23, 0
      %p64 = por %p62, %p63
      %p65 = scmp.ne.s32.totalorder %s57, %s59
      %p66 = scmp.eq.s32.totalorder %s28, 1
      %p67 = por %p65, %p66
      %p68 = scmp.ne.s32.totalorder %s59, %s60
      %p69 = scmp.eq.s32.totalorder %s28, 0
      %p70 = por %p68, %p69
      %p71 = scmp.ne.s32.totalorder %s59, %s60
      %p72 = scmp.eq.s32.totalorder %s29, 1
      %p73 = por %p71, %p72
      %p75 = scmp.ne.s32.totalorder %s60, %s74
      %p76 = scmp.eq.s32.totalorder %s29, 0
      %p77 = por %p75, %p76
      %s79 = sadd.s32 %s78, 1
      %p82 = scmp.eq.s32.totalorder %s23, 1
      %p83 = scmp.ne.s32.totalorder %s78, %s80
      %p84 = scmp.eq.s32.totalorder %s23, 0
      %p85 = por %p83, %p84
      %p86 = scmp.ne.s32.totalorder %s78, %s80
      %p87 = scmp.eq.s32.totalorder %s28, 1
      %p88 = por %p86, %p87
      %p89 = scmp.ne.s32.totalorder %s80, %s81
      %p90 = scmp.eq.s32.totalorder %s28, 0
      %p91 = por %p89, %p90
      %p92 = scmp.ne.s32.totalorder %s80, %s81
      %p93 = scmp.eq.s32.totalorder %s29, 1
      %p94 = por %p92, %p93
      %p96 = scmp.ne.s32.totalorder %s81, %s95
      %p97 = scmp.eq.s32.totalorder %s29, 0
      %p98 = por %p96, %p97
      %s100 = sadd.s32 %s99, 1
      %p103 = scmp.eq.s32.totalorder %s23, 1
      %p104 = scmp.ne.s32.totalorder %s99, %s101
      %p105 = scmp.eq.s32.totalorder %s23, 0
      %p106 = por %p104, %p105
      %p107 = scmp.ne.s32.totalorder %s99, %s101
      %p108 = scmp.eq.s32.totalorder %s28, 1
      %p109 = por %p107, %p108
      %p110 = scmp.ne.s32.totalorder %s101, %s102
      %p111 = scmp.eq.s32.totalorder %s28, 0
      %p112 = por %p110, %p111
      %p113 = scmp.ne.s32.totalorder %s101, %s102
      %p114 = scmp.eq.s32.totalorder %s29, 1
      %p115 = por %p113, %p114
      %p117 = scmp.ne.s32.totalorder %s102, %s116
      %p118 = scmp.eq.s32.totalorder %s29, 0
      %p119 = por %p117, %p118
      %s121 = sadd.s32 %s120, 1
      %p124 = scmp.eq.s32.totalorder %s23, 1
      %p125 = scmp.ne.s32.totalorder %s120, %s122
      %p126 = scmp.eq.s32.totalorder %s23, 0
      %p127 = por %p125, %p126
      %p128 = scmp.ne.s32.totalorder %s120, %s122
      %p129 = scmp.eq.s32.totalorder %s28, 1
      %p130 = por %p128, %p129
      %p131 = scmp.ne.s32.totalorder %s122, %s123
      %p132 = scmp.eq.s32.totalorder %s28, 0
      %p133 = por %p131, %p132
      %p134 = scmp.ne.s32.totalorder %s122, %s123
      %p135 = scmp.eq.s32.totalorder %s29, 1
      %p136 = por %p134, %p135
      %p138 = scmp.ne.s32.totalorder %s123, %s137
      %p139 = scmp.eq.s32.totalorder %s29, 0
      %p140 = por %p138, %p139
      %s142 = sadd.s32 %s141, 1
      %p145 = scmp.eq.s32.totalorder %s23, 1
      %p146 = scmp.ne.s32.totalorder %s141, %s143
      %p147 = scmp.eq.s32.totalorder %s23, 0
      %p148 = por %p146, %p147
      %p149 = scmp.ne.s32.totalorder %s141, %s143
      %p150 = scmp.eq.s32.totalorder %s28, 1
      %p151 = por %p149, %p150
      %p152 = scmp.ne.s32.totalorder %s143, %s144
      %p153 = scmp.eq.s32.totalorder %s28, 0
      %p154 = por %p152, %p153
      %p155 = scmp.ne.s32.totalorder %s143, %s144
      %p156 = scmp.eq.s32.totalorder %s29, 1
      %p157 = por %p155, %p156
      %p159 = scmp.ne.s32.totalorder %s144, %s158
      %p160 = scmp.eq.s32.totalorder %s29, 0
      %p161 = por %p159, %p160
      %s163 = sadd.s32 %s162, 1
      %p166 = scmp.eq.s32.totalorder %s23, 1
      %p167 = scmp.ne.s32.totalorder %s162, %s164
      %p168 = scmp.eq.s32.totalorder %s23, 0
      %p169 = por %p167, %p168
      %p170 = scmp.ne.s32.totalorder %s162, %s164
      %p171 = scmp.eq.s32.totalorder %s28, 1
      %p172 = por %p170, %p171
      %p173 = scmp.ne.s32.totalorder %s164, %s165
      %p174 = scmp.eq.s32.totalorder %s28, 0
      %p175 = por %p173, %p174
      %p176 = scmp.ne.s32.totalorder %s164, %s165
      %p177 = scmp.eq.s32.totalorder %s29, 1
      %p178 = por %p176, %p177
      %p180 = scmp.ne.s32.totalorder %s165, %s179
      %p181 = scmp.eq.s32.totalorder %s29, 0
      %p182 = por %p180, %p181
      %s184 = sadd.s32 %s183, 1
      %p187 = scmp.eq.s32.totalorder %s23, 1
      %p188 = scmp.ne.s32.totalorder %s183, %s185
      %p189 = scmp.eq.s32.totalorder %s23, 0
      %p190 = por %p188, %p189
      %p191 = scmp.ne.s32.totalorder %s183, %s185
      %p192 = scmp.eq.s32.totalorder %s28, 1
      %p193 = por %p191, %p192
      %p194 = scmp.ne.s32.totalorder %s185, %s186
      %p195 = scmp.eq.s32.totalorder %s28, 0
      %p196 = por %p194, %p195
      %p197 = scmp.ne.s32.totalorder %s185, %s186
      %p198 = scmp.eq.s32.totalorder %s29, 1
      %p199 = por %p197, %p198
      %p201 = scmp.ne.s32.totalorder %s186, %s200
      %p202 = scmp.eq.s32.totalorder %s29, 0
      %p203 = por %p201, %p202
      %s205 = sadd.s32 %s204, 1
      %p208 = scmp.eq.s32.totalorder %s23, 1
      %p209 = scmp.ne.s32.totalorder %s204, %s206
      %p210 = scmp.eq.s32.totalorder %s23, 0
      %p211 = por %p209, %p210
      %p212 = scmp.ne.s32.totalorder %s204, %s206
      %p213 = scmp.eq.s32.totalorder %s28, 1
      %p214 = por %p212, %p213
      %p215 = scmp.ne.s32.totalorder %s206, %s207
      %p216 = scmp.eq.s32.totalorder %s28, 0
      %p217 = por %p215, %p216
      %p218 = scmp.ne.s32.totalorder %s206, %s207
      %p219 = scmp.eq.s32.totalorder %s29, 1
      %p220 = por %p218, %p219
      %p222 = scmp.ne.s32.totalorder %s207, %s221
      %p223 = scmp.eq.s32.totalorder %s29, 0
      %p224 = por %p222, %p223
      %s225 = ssub.s32 %s23, %s30
      %p226 = scmp.eq.s32.totalorder %s225, 0
      %s228 = sadd.s32 %s227, 1
      %s229 = scalar_select %p226, %s227, %s228
      %p232 = pneg %p226
      %p233 = scmp.eq.s32.totalorder %s23, 1
      %p234 = por %p232, %p233
      %p235 = scmp.ne.s32.totalorder %s227, %s230
      %p236 = scmp.eq.s32.totalorder %s23, 0
      %p237 = por %p235, %p236
      %p238 = scmp.ne.s32.totalorder %s227, %s230
      %p239 = scmp.eq.s32.totalorder %s28, 1
      %p240 = por %p238, %p239
      %p241 = scmp.ne.s32.totalorder %s230, %s231
      %p242 = scmp.eq.s32.totalorder %s28, 0
      %p243 = por %p241, %p242
      %p244 = scmp.ne.s32.totalorder %s230, %s231
      %p245 = scmp.eq.s32.totalorder %s29, 1
      %p246 = por %p244, %p245
      %p248 = scmp.ne.s32.totalorder %s231, %s247
      %p249 = scmp.eq.s32.totalorder %s29, 0
      %p250 = por %p248, %p249
      %s251 = ssub.s32 %s23, %s30
      %p252 = scmp.eq.s32.totalorder %s251, 0
      %s254 = sadd.s32 %s253, 1
      %s255 = scalar_select %p252, %s253, %s254
      %p258 = pneg %p252
      %p259 = scmp.eq.s32.totalorder %s23, 1
      %p260 = por %p258, %p259
      %p261 = scmp.ne.s32.totalorder %s253, %s256
      %p262 = scmp.eq.s32.totalorder %s23, 0
      %p263 = por %p261, %p262
      %p264 = scmp.ne.s32.totalorder %s253, %s256
      %p265 = scmp.eq.s32.totalorder %s28, 1
      %p266 = por %p264, %p265
      %p267 = scmp.ne.s32.totalorder %s256, %s257
      %p268 = scmp.eq.s32.totalorder %s28, 0
      %p269 = por %p267, %p268
      %p270 = scmp.ne.s32.totalorder %s256, %s257
      %p271 = scmp.eq.s32.totalorder %s29, 1
      %p272 = por %p270, %p271
      %p274 = scmp.ne.s32.totalorder %s257, %s273
      %p275 = scmp.eq.s32.totalorder %s29, 0
      %p276 = por %p274, %p275
      %p277 = scmp.le.s32.totalorder 1, %s23
      %p278 = scmp.lt.s32.totalorder %s23, 3
      %p279 = pnand %p277, %p278
      %p280 = pneg %p279
      // Predicated region
      $region9: #{tpu_custom_call.1} parent=5 // pred_check
        _
      $region10: #{tpu_custom_call.1} parent=5 // pred_check_branch
        %282 = sbr.rel (%p279) target = $region12
      $region11: #{tpu_custom_call.1} parent=5 // pred_region
        %s283 = ssub.s32 %s23, 1
        // Predicated region
        $region13: #{tpu_custom_call.1} parent=11 // pred_check
          %p284 = pneg %p70
        $region14: #{tpu_custom_call.1} parent=11 // pred_check_branch
          %286 = sbr.rel (%p284) target = $region16
        $region15: #{tpu_custom_call.1} parent=11 // pred_region
          _
        $region16: #{tpu_custom_call.1} parent=11 // pred_fallthru
          _
        // Predicated region
        $region17: #{tpu_custom_call.1} parent=11 // pred_check
          %p287 = pneg %p91
        $region18: #{tpu_custom_call.1} parent=11 // pred_check_branch
          %289 = sbr.rel (%p287) target = $region20
        $region19: #{tpu_custom_call.1} parent=11 // pred_region
          _
        $region20: #{tpu_custom_call.1} parent=11 // pred_fallthru
          _
        // Predicated region
        $region21: #{tpu_custom_call.1} parent=11 // pred_check
          %p290 = pneg %p112
        $region22: #{tpu_custom_call.1} parent=11 // pred_check_branch
          %292 = sbr.rel (%p290) target = $region24
        $region23: #{tpu_custom_call.1} parent=11 // pred_region
          _
        $region24: #{tpu_custom_call.1} parent=11 // pred_fallthru
          _
        // Predicated region
        $region25: #{tpu_custom_call.1} parent=11 // pred_check
          %p293 = pneg %p133
        $region26: #{tpu_custom_call.1} parent=11 // pred_check_branch
          %295 = sbr.rel (%p293) target = $region28
        $region27: #{tpu_custom_call.1} parent=11 // pred_region
          _
        $region28: #{tpu_custom_call.1} parent=11 // pred_fallthru
          _
        // Predicated region
        $region29: #{tpu_custom_call.1} parent=11 // pred_check
          %p296 = pneg %p154
        $region30: #{tpu_custom_call.1} parent=11 // pred_check_branch
          %298 = sbr.rel (%p296) target = $region32
        $region31: #{tpu_custom_call.1} parent=11 // pred_region
          _
        $region32: #{tpu_custom_call.1} parent=11 // pred_fallthru
          _
        // Predicated region
        $region33: #{tpu_custom_call.1} parent=11 // pred_check
          %p299 = pneg %p175
        $region34: #{tpu_custom_call.1} parent=11 // pred_check_branch
          %301 = sbr.rel (%p299) target = $region36
        $region35: #{tpu_custom_call.1} parent=11 // pred_region
          _
        $region36: #{tpu_custom_call.1} parent=11 // pred_fallthru
          _
        // Predicated region
        $region37: #{tpu_custom_call.1} parent=11 // pred_check
          %p302 = pneg %p196
        $region38: #{tpu_custom_call.1} parent=11 // pred_check_branch
          %304 = sbr.rel (%p302) target = $region40
        $region39: #{tpu_custom_call.1} parent=11 // pred_region
          _
        $region40: #{tpu_custom_call.1} parent=11 // pred_fallthru
          _
        // Predicated region
        $region41: #{tpu_custom_call.1} parent=11 // pred_check
          %p305 = pneg %p217
        $region42: #{tpu_custom_call.1} parent=11 // pred_check_branch
          %307 = sbr.rel (%p305) target = $region44
        $region43: #{tpu_custom_call.1} parent=11 // pred_region
          _
        $region44: #{tpu_custom_call.1} parent=11 // pred_fallthru
          _
      $region12: #{tpu_custom_call.1} parent=5 // pred_fallthru
        _
      %p308 = scmp.lt.s32.totalorder %s23, 2
      // Predicated region
      $region45: #{tpu_custom_call.1} parent=5 // pred_check
        %p309 = pneg %p308
      $region46: #{tpu_custom_call.1} parent=5 // pred_check_branch
        %311 = sbr.rel (%p309) target = $region48
      $region47: #{tpu_custom_call.1} parent=5 // pred_region
        // Predicated region
        $region49: #{tpu_custom_call.1} parent=47 // pred_check
          %p312 = pneg %p43
        $region50: #{tpu_custom_call.1} parent=47 // pred_check_branch
          %314 = sbr.rel (%p312) target = $region52
        $region51: #{tpu_custom_call.1} parent=47 // pred_region
          %p315 = scmp.lt.s32.totalorder %s23, 1
          %s316 = scalar_select %p315, %s23, 1
          %s317 = smul.addr %s316, 4
          %s318 = smul.addr %s317, 8
          %s319 = scalar_lea.vmem %s0, %s318
        $region52: #{tpu_custom_call.1} parent=47 // pred_fallthru
          _
      $region48: #{tpu_custom_call.1} parent=5 // pred_fallthru
        _
      %p320 = scmp.le.s32.totalorder 1, %s23
      %p321 = scmp.lt.s32.totalorder %s23, 3
      %p322 = pnand %p320, %p321
      %p323 = pneg %p322
      // Predicated region
      $region53: #{tpu_custom_call.1} parent=5 // pred_check
        _
      $region54: #{tpu_custom_call.1} parent=5 // pred_check_branch
        %325 = sbr.rel (%p322) target = $region56
      $region55: #{tpu_custom_call.1} parent=5 // pred_region
        %s326 = ssub.s32 %s23, 1
        %p327 = scmp.lt.s32.totalorder %s28, 1
        %s328 = scalar_select %p327, %s28, 1
        %s329 = smul.addr %s328, 4
        %s330 = smul.addr %s329, 8
        %s331 = scalar_lea.vmem %s0, %s330
        %p332 = pneg %p49
        %p333 = pneg %p46
        %p334 = pneg %p70
        %p335 = pneg %p67
        %p336 = pneg %p91
        %p337 = pneg %p88
        %p338 = pneg %p112
        %p339 = pneg %p109
        %p340 = pneg %p133
        %p341 = pneg %p130
        %p342 = pneg %p154
        %p343 = pneg %p151
        %p344 = pneg %p175
        %p345 = pneg %p172
        %p346 = pneg %p196
        %p347 = pneg %p193
        %p348 = pneg %p217
        %p349 = pneg %p214
        %p350 = pneg %p243
        %p351 = pneg %p240
        %s352 = sand.u32 %s230, 1
        %s353 = scalar_lea.sflag [#allocation3], %s352
        %s354 = sand.u32 %s230, 1
        %s355 = smul.addr %s354, 32
        %s356 = scalar_lea.vmem [#allocation2], %s355
        %p357 = pneg %p269
        %p358 = pneg %p266
        %s359 = sand.u32 %s256, 1
        %s360 = scalar_lea.sflag [#allocation5], %s359
        %s361 = sand.u32 %s256, 1
        %s362 = smul.addr %s361, 8
        %s363 = scalar_lea.vmem [#allocation4], %s362
        %p364 = scmp.lt.s32.totalorder %s28, 1
        %s365 = scalar_select %p364, %s28, 1
        %s366 = smul.addr %s365, 4
        %s367 = smul.addr %s366, 8
        %s368 = scalar_lea.vmem %s0, %s367
        %v369 = vld [vmem:[%s368] sm:$0xff]
        %v370 = vld [vmem:[%s368 + $0x8] sm:$0xff]
        %v371 = vld [vmem:[%s368 + $0x10] sm:$0xff]
        %v372 = vld [vmem:[%s368 + $0x18] sm:$0xff]
        %v373 = vld [vmem:[%s1] sm:$0xff]
        %v374 = vld [vmem:[%s1 + $0x8] sm:$0xff]
        %v375 = vld [vmem:[%s1 + $0x10] sm:$0xff]
        %v376 = vld [vmem:[%s1 + $0x18] sm:$0xff]
        %v377 = vld [vmem:[%s1 + $0x20] sm:$0xff]
        %v378 = vld [vmem:[%s1 + $0x28] sm:$0xff]
        %v379 = vld [vmem:[%s1 + $0x30] sm:$0xff]
        %v380 = vld [vmem:[%s1 + $0x38] sm:$0xff]
        %v381 = vld [vmem:[%s1 + $0x40] sm:$0xff]
        %v382 = vld [vmem:[%s1 + $0x48] sm:$0xff]
        %v383 = vld [vmem:[%s1 + $0x50] sm:$0xff]
        %v384 = vld [vmem:[%s1 + $0x58] sm:$0xff]
        %v385 = vld [vmem:[%s1 + $0x60] sm:$0xff]
        %v386 = vld [vmem:[%s1 + $0x68] sm:$0xff]
        %v387 = vld [vmem:[%s1 + $0x70] sm:$0xff]
        %v388 = vld [vmem:[%s1 + $0x78] sm:$0xff]
        %v389 = vld [vmem:[%s1 + $0x80] sm:$0xff]
        %v390 = vld [vmem:[%s1 + $0x88] sm:$0xff]
        %v391 = vld [vmem:[%s1 + $0x90] sm:$0xff]
        %v392 = vld [vmem:[%s1 + $0x98] sm:$0xff]
        %v393 = vld [vmem:[%s1 + $0xa0] sm:$0xff]
        %v394 = vld [vmem:[%s1 + $0xa8] sm:$0xff]
        %v395 = vld [vmem:[%s1 + $0xb0] sm:$0xff]
        %v396 = vld [vmem:[%s1 + $0xb8] sm:$0xff]
        %v397 = vld [vmem:[%s1 + $0xc0] sm:$0xff]
        %v398 = vld [vmem:[%s1 + $0xc8] sm:$0xff]
        %v399 = vld [vmem:[%s1 + $0xd0] sm:$0xff]
        %v400 = vld [vmem:[%s1 + $0xd8] sm:$0xff]
        %v401 = vld [vmem:[%s1 + $0xe0] sm:$0xff]
        %v402 = vld [vmem:[%s1 + $0xe8] sm:$0xff]
        %v403 = vld [vmem:[%s1 + $0xf0] sm:$0xff]
        %v404 = vld [vmem:[%s1 + $0xf8] sm:$0xff]
        %v405 = vld [vmem:[%s1 + $0x100] sm:$0xff]
        %v406 = vld [vmem:[%s1 + $0x108] sm:$0xff]
        %v407 = vld [vmem:[%s1 + $0x110] sm:$0xff]
        %v408 = vld [vmem:[%s1 + $0x118] sm:$0xff]
        %v409 = vld [vmem:[%s1 + $0x120] sm:$0xff]
        %v410 = vld [vmem:[%s1 + $0x128] sm:$0xff]
        %v411 = vld [vmem:[%s1 + $0x130] sm:$0xff]
        %v412 = vld [vmem:[%s1 + $0x138] sm:$0xff]
        %v413 = vld [vmem:[%s1 + $0x140] sm:$0xff]
        %v414 = vld [vmem:[%s1 + $0x148] sm:$0xff]
        %v415 = vld [vmem:[%s1 + $0x150] sm:$0xff]
        %v416 = vld [vmem:[%s1 + $0x158] sm:$0xff]
        %v417 = vld [vmem:[%s1 + $0x160] sm:$0xff]
        %v418 = vld [vmem:[%s1 + $0x168] sm:$0xff]
        %v419 = vld [vmem:[%s1 + $0x170] sm:$0xff]
        %v420 = vld [vmem:[%s1 + $0x178] sm:$0xff]
        %v421 = vld [vmem:[%s1 + $0x180] sm:$0xff]
        %v422 = vld [vmem:[%s1 + $0x188] sm:$0xff]
        %v423 = vld [vmem:[%s1 + $0x190] sm:$0xff]
        %v424 = vld [vmem:[%s1 + $0x198] sm:$0xff]
        %v425 = vld [vmem:[%s1 + $0x1a0] sm:$0xff]
        %v426 = vld [vmem:[%s1 + $0x1a8] sm:$0xff]
        %v427 = vld [vmem:[%s1 + $0x1b0] sm:$0xff]
        %v428 = vld [vmem:[%s1 + $0x1b8] sm:$0xff]
        %v429 = vld [vmem:[%s1 + $0x1c0] sm:$0xff]
        %v430 = vld [vmem:[%s1 + $0x1c8] sm:$0xff]
        %v431 = vld [vmem:[%s1 + $0x1d0] sm:$0xff]
        %v432 = vld [vmem:[%s1 + $0x1d8] sm:$0xff]
        %v433 = vld [vmem:[%s1 + $0x1e0] sm:$0x3]
        %v434 = vld [vmem:[%s2] sm:$0x1]
        %v436 = vlaneseq
        %v437 = vshrl.u32 %v436, 7
        %v438 = vsub.s32 0, %v437
        %v439 = vrot.slane %v434, %v438
        %vm441 = vcmask 801792
        %v443 = vsel %vm441, %v372, 0
        %vm445 = vcmask 1041408
        %v447 = vsel %vm445, %v433, 0
        %449 = vmatprep.subr.mxu0 0.0
        %v450 = vand.u32 %v373, 4294901760
        %451 = vmatpush1.msra.mxu0 %v450
        %452 = vmatprep.subr.mxu0 0.0
        %v453 = vand.u32 %v374, 4294901760
        %454 = vmatpush1.msra.mxu0 %v453
        %455 = vmatprep.subr.mxu0 0.0
        %v456 = vand.u32 %v375, 4294901760
        %457 = vmatpush1.msra.mxu0 %v456
        %458 = vmatprep.subr.mxu0 0.0
        %v459 = vand.u32 %v376, 4294901760
        %460 = vmatpush1.msra.mxu0 %v459
        %461 = vmatprep.subr.mxu0 0.0
        %v462 = vand.u32 %v377, 4294901760
        %463 = vmatpush1.msra.mxu0 %v462
        %464 = vmatprep.subr.mxu0 0.0
        %v465 = vand.u32 %v378, 4294901760
        %466 = vmatpush1.msra.mxu0 %v465
        %467 = vmatprep.subr.mxu0 0.0
        %v468 = vand.u32 %v379, 4294901760
        %469 = vmatpush1.msra.mxu0 %v468
        %470 = vmatprep.subr.mxu0 0.0
        %v471 = vand.u32 %v380, 4294901760
        %472 = vmatpush1.msra.mxu0 %v471
        %473 = vmatprep.subr.mxu0 0.0
        %v474 = vand.u32 %v381, 4294901760
        %475 = vmatpush1.msra.mxu0 %v474
        %476 = vmatprep.subr.mxu0 0.0
        %v477 = vand.u32 %v382, 4294901760
        %478 = vmatpush1.msra.mxu0 %v477
        %479 = vmatprep.subr.mxu0 0.0
        %v480 = vand.u32 %v383, 4294901760
        %481 = vmatpush1.msra.mxu0 %v480
        %482 = vmatprep.subr.mxu0 0.0
        %v483 = vand.u32 %v384, 4294901760
        %484 = vmatpush1.msra.mxu0 %v483
        %485 = vmatprep.subr.mxu0 0.0
        %v486 = vand.u32 %v385, 4294901760
        %487 = vmatpush1.msra.mxu0 %v486
        %488 = vmatprep.subr.mxu0 0.0
        %v489 = vand.u32 %v386, 4294901760
        %490 = vmatpush1.msra.mxu0 %v489
        %491 = vmatprep.subr.mxu0 0.0
        %v492 = vand.u32 %v387, 4294901760
        %493 = vmatpush1.msra.mxu0 %v492
        %494 = vmatprep.subr.mxu0 0.0
        %v495 = vand.u32 %v388, 4294901760
        %496 = vmatpush1.msra.mxu0 %v495
        %497 = vmatprep.subr.mxu0 0.0
        %v498 = vand.u32 %v389, 4294901760
        %499 = vmatpush1.msra.mxu0 %v498
        %500 = vmatprep.subr.mxu0 0.0
        %v501 = vand.u32 %v390, 4294901760
        %502 = vmatpush1.msra.mxu0 %v501
        %503 = vmatprep.subr.mxu0 0.0
        %v504 = vand.u32 %v391, 4294901760
        %505 = vmatpush1.msra.mxu0 %v504
        %506 = vmatprep.subr.mxu0 0.0
        %v507 = vand.u32 %v392, 4294901760
        %508 = vmatpush1.msra.mxu0 %v507
        %509 = vmatprep.subr.mxu0 0.0
        %v510 = vand.u32 %v393, 4294901760
        %511 = vmatpush1.msra.mxu0 %v510
        %512 = vmatprep.subr.mxu0 0.0
        %v513 = vand.u32 %v394, 4294901760
        %514 = vmatpush1.msra.mxu0 %v513
        %515 = vmatprep.subr.mxu0 0.0
        %v516 = vand.u32 %v395, 4294901760
        %517 = vmatpush1.msra.mxu0 %v516
        %518 = vmatprep.subr.mxu0 0.0
        %v519 = vand.u32 %v396, 4294901760
        %520 = vmatpush1.msra.mxu0 %v519
        %521 = vmatprep.subr.mxu0 0.0
        %v522 = vand.u32 %v397, 4294901760
        %523 = vmatpush1.msra.mxu0 %v522
        %524 = vmatprep.subr.mxu0 0.0
        %v525 = vand.u32 %v398, 4294901760
        %526 = vmatpush1.msra.mxu0 %v525
        %527 = vmatprep.subr.mxu0 0.0
        %v528 = vand.u32 %v399, 4294901760
        %529 = vmatpush1.msra.mxu0 %v528
        %530 = vmatprep.subr.mxu0 0.0
        %v531 = vand.u32 %v400, 4294901760
        %532 = vmatpush1.msra.mxu0 %v531
        %533 = vmatprep.subr.mxu0 0.0
        %v534 = vand.u32 %v401, 4294901760
        %535 = vmatpush1.msra.mxu0 %v534
        %536 = vmatprep.subr.mxu0 0.0
        %v537 = vand.u32 %v402, 4294901760
        %538 = vmatpush1.msra.mxu0 %v537
        %539 = vmatprep.subr.mxu0 0.0
        %v540 = vand.u32 %v403, 4294901760
        %541 = vmatpush1.msra.mxu0 %v540
        %542 = vmatprep.subr.mxu0 0.0
        %v543 = vand.u32 %v404, 4294901760
        %544 = vmatpush1.msra.mxu0 %v543
        %v545 = vand.u32 %v370, 4294901760
        %v546 = vsub.f32 %v370, %v545
        %v547 = vand.u32 %v546, 4294901760
        %v548 = vsub.f32 %v546, %v547
        %v549 = vand.u32 %v548, 4294901760
        %550 = vmatprep.mubr.f32.mxu0 %v549
        %v551 = vand.u32 %v369, 4294901760
        %v552 = vsub.f32 %v369, %v551
        %v553 = vand.u32 %v552, 4294901760
        %v554 = vsub.f32 %v552, %v553
        %v555 = vand.u32 %v554, 4294901760
        %556 = vmatmul.mubr.f32.gmra.mrb[0].mxu0 %v555
        %v557 = vpop.f32.mrb[0].mxu0
        %v558 = vadd.f32 %v439, %v557
        %v559 = vpop.f32.mrb[0].mxu0
        %560 = vdwg.mxu0
        %561 = vmatprep.subr.mxu0 0.0
        %v562 = vand.u32 %v373, 4294901760
        %v563 = vsub.f32 %v373, %v562
        %v564 = vand.u32 %v563, 4294901760
        %v565 = vsub.f32 %v563, %v564
        %v566 = vand.u32 %v565, 4294901760
        %567 = vmatpush1.msra.mxu0 %v566
        %568 = vmatprep.subr.mxu0 0.0
        %v569 = vand.u32 %v374, 4294901760
        %v570 = vsub.f32 %v374, %v569
        %v571 = vand.u32 %v570, 4294901760
        %v572 = vsub.f32 %v570, %v571
        %v573 = vand.u32 %v572, 4294901760
        %574 = vmatpush1.msra.mxu0 %v573
        %575 = vmatprep.subr.mxu0 0.0
        %v576 = vand.u32 %v375, 4294901760
        %v577 = vsub.f32 %v375, %v576
        %v578 = vand.u32 %v577, 4294901760
        %v579 = vsub.f32 %v577, %v578
        %v580 = vand.u32 %v579, 4294901760
        %581 = vmatpush1.msra.mxu0 %v580
        %582 = vmatprep.subr.mxu0 0.0
        %v583 = vand.u32 %v376, 4294901760
        %v584 = vsub.f32 %v376, %v583
        %v585 = vand.u32 %v584, 4294901760
        %v586 = vsub.f32 %v584, %v585
        %v587 = vand.u32 %v586, 4294901760
        %588 = vmatpush1.msra.mxu0 %v587
        %589 = vmatprep.subr.mxu0 0.0
        %v590 = vand.u32 %v377, 4294901760
        %v591 = vsub.f32 %v377, %v590
        %v592 = vand.u32 %v591, 4294901760
        %v593 = vsub.f32 %v591, %v592
        %v594 = vand.u32 %v593, 4294901760
        %595 = vmatpush1.msra.mxu0 %v594
        %596 = vmatprep.subr.mxu0 0.0
        %v597 = vand.u32 %v378, 4294901760
        %v598 = vsub.f32 %v378, %v597
        %v599 = vand.u32 %v598, 4294901760
        %v600 = vsub.f32 %v598, %v599
        %v601 = vand.u32 %v600, 4294901760
        %602 = vmatpush1.msra.mxu0 %v601
        %603 = vmatprep.subr.mxu0 0.0
        %v604 = vand.u32 %v379, 4294901760
        %v605 = vsub.f32 %v379, %v604
        %v606 = vand.u32 %v605, 4294901760
        %v607 = vsub.f32 %v605, %v606
        %v608 = vand.u32 %v607, 4294901760
        %609 = vmatpush1.msra.mxu0 %v608
        %610 = vmatprep.subr.mxu0 0.0
        %v611 = vand.u32 %v380, 4294901760
        %v612 = vsub.f32 %v380, %v611
        %v613 = vand.u32 %v612, 4294901760
        %v614 = vsub.f32 %v612, %v613
        %v615 = vand.u32 %v614, 4294901760
        %616 = vmatpush1.msra.mxu0 %v615
        %617 = vmatprep.subr.mxu0 0.0
        %v618 = vand.u32 %v381, 4294901760
        %v619 = vsub.f32 %v381, %v618
        %v620 = vand.u32 %v619, 4294901760
        %v621 = vsub.f32 %v619, %v620
        %v622 = vand.u32 %v621, 4294901760
        %623 = vmatpush1.msra.mxu0 %v622
        %624 = vmatprep.subr.mxu0 0.0
        %v625 = vand.u32 %v382, 4294901760
        %v626 = vsub.f32 %v382, %v625
        %v627 = vand.u32 %v626, 4294901760
        %v628 = vsub.f32 %v626, %v627
        %v629 = vand.u32 %v628, 4294901760
        %630 = vmatpush1.msra.mxu0 %v629
        %631 = vmatprep.subr.mxu0 0.0
        %v632 = vand.u32 %v383, 4294901760
        %v633 = vsub.f32 %v383, %v632
        %v634 = vand.u32 %v633, 4294901760
        %v635 = vsub.f32 %v633, %v634
        %v636 = vand.u32 %v635, 4294901760
        %637 = vmatpush1.msra.mxu0 %v636
        %638 = vmatprep.subr.mxu0 0.0
        %v639 = vand.u32 %v384, 4294901760
        %v640 = vsub.f32 %v384, %v639
        %v641 = vand.u32 %v640, 4294901760
        %v642 = vsub.f32 %v640, %v641
        %v643 = vand.u32 %v642, 4294901760
        %644 = vmatpush1.msra.mxu0 %v643
        %645 = vmatprep.subr.mxu0 0.0
        %v646 = vand.u32 %v385, 4294901760
        %v647 = vsub.f32 %v385, %v646
        %v648 = vand.u32 %v647, 4294901760
        %v649 = vsub.f32 %v647, %v648
        %v650 = vand.u32 %v649, 4294901760
        %651 = vmatpush1.msra.mxu0 %v650
        %652 = vmatprep.subr.mxu0 0.0
        %v653 = vand.u32 %v386, 4294901760
        %v654 = vsub.f32 %v386, %v653
        %v655 = vand.u32 %v654, 4294901760
        %v656 = vsub.f32 %v654, %v655
        %v657 = vand.u32 %v656, 4294901760
        %658 = vmatpush1.msra.mxu0 %v657
        %659 = vmatprep.subr.mxu0 0.0
        %v660 = vand.u32 %v387, 4294901760
        %v661 = vsub.f32 %v387, %v660
        %v662 = vand.u32 %v661, 4294901760
        %v663 = vsub.f32 %v661, %v662
        %v664 = vand.u32 %v663, 4294901760
        %665 = vmatpush1.msra.mxu0 %v664
        %666 = vmatprep.subr.mxu0 0.0
        %v667 = vand.u32 %v388, 4294901760
        %v668 = vsub.f32 %v388, %v667
        %v669 = vand.u32 %v668, 4294901760
        %v670 = vsub.f32 %v668, %v669
        %v671 = vand.u32 %v670, 4294901760
        %672 = vmatpush1.msra.mxu0 %v671
        %673 = vmatprep.subr.mxu0 0.0
        %v674 = vand.u32 %v389, 4294901760
        %v675 = vsub.f32 %v389, %v674
        %v676 = vand.u32 %v675, 4294901760
        %v677 = vsub.f32 %v675, %v676
        %v678 = vand.u32 %v677, 4294901760
        %679 = vmatpush1.msra.mxu0 %v678
        %680 = vmatprep.subr.mxu0 0.0
        %v681 = vand.u32 %v390, 4294901760
        %v682 = vsub.f32 %v390, %v681
        %v683 = vand.u32 %v682, 4294901760
        %v684 = vsub.f32 %v682, %v683
        %v685 = vand.u32 %v684, 4294901760
        %686 = vmatpush1.msra.mxu0 %v685
        %687 = vmatprep.subr.mxu0 0.0
        %v688 = vand.u32 %v391, 4294901760
        %v689 = vsub.f32 %v391, %v688
        %v690 = vand.u32 %v689, 4294901760
        %v691 = vsub.f32 %v689, %v690
        %v692 = vand.u32 %v691, 4294901760
        %693 = vmatpush1.msra.mxu0 %v692
        %694 = vmatprep.subr.mxu0 0.0
        %v695 = vand.u32 %v392, 4294901760
        %v696 = vsub.f32 %v392, %v695
        %v697 = vand.u32 %v696, 4294901760
        %v698 = vsub.f32 %v696, %v697
        %v699 = vand.u32 %v698, 4294901760
        %700 = vmatpush1.msra.mxu0 %v699
        %701 = vmatprep.subr.mxu0 0.0
        %v702 = vand.u32 %v393, 4294901760
        %v703 = vsub.f32 %v393, %v702
        %v704 = vand.u32 %v703, 4294901760
        %v705 = vsub.f32 %v703, %v704
        %v706 = vand.u32 %v705, 4294901760
        %707 = vmatpush1.msra.mxu0 %v706
        %708 = vmatprep.subr.mxu0 0.0
        %v709 = vand.u32 %v394, 4294901760
        %v710 = vsub.f32 %v394, %v709
        %v711 = vand.u32 %v710, 4294901760
        %v712 = vsub.f32 %v710, %v711
        %v713 = vand.u32 %v712, 4294901760
        %714 = vmatpush1.msra.mxu0 %v713
        %715 = vmatprep.subr.mxu0 0.0
        %v716 = vand.u32 %v395, 4294901760
        %v717 = vsub.f32 %v395, %v716
        %v718 = vand.u32 %v717, 4294901760
        %v719 = vsub.f32 %v717, %v718
        %v720 = vand.u32 %v719, 4294901760
        %721 = vmatpush1.msra.mxu0 %v720
        %722 = vmatprep.subr.mxu0 0.0
        %v723 = vand.u32 %v396, 4294901760
        %v724 = vsub.f32 %v396, %v723
        %v725 = vand.u32 %v724, 4294901760
        %v726 = vsub.f32 %v724, %v725
        %v727 = vand.u32 %v726, 4294901760
        %728 = vmatpush1.msra.mxu0 %v727
        %729 = vmatprep.subr.mxu0 0.0
        %v730 = vand.u32 %v397, 4294901760
        %v731 = vsub.f32 %v397, %v730
        %v732 = vand.u32 %v731, 4294901760
        %v733 = vsub.f32 %v731, %v732
        %v734 = vand.u32 %v733, 4294901760
        %735 = vmatpush1.msra.mxu0 %v734
        %736 = vmatprep.subr.mxu0 0.0
        %v737 = vand.u32 %v398, 4294901760
        %v738 = vsub.f32 %v398, %v737
        %v739 = vand.u32 %v738, 4294901760
        %v740 = vsub.f32 %v738, %v739
        %v741 = vand.u32 %v740, 4294901760
        %742 = vmatpush1.msra.mxu0 %v741
        %743 = vmatprep.subr.mxu0 0.0
        %v744 = vand.u32 %v399, 4294901760
        %v745 = vsub.f32 %v399, %v744
        %v746 = vand.u32 %v745, 4294901760
        %v747 = vsub.f32 %v745, %v746
        %v748 = vand.u32 %v747, 4294901760
        %749 = vmatpush1.msra.mxu0 %v748
        %750 = vmatprep.subr.mxu0 0.0
        %v751 = vand.u32 %v400, 4294901760
        %v752 = vsub.f32 %v400, %v751
        %v753 = vand.u32 %v752, 4294901760
        %v754 = vsub.f32 %v752, %v753
        %v755 = vand.u32 %v754, 4294901760
        %756 = vmatpush1.msra.mxu0 %v755
        %757 = vmatprep.subr.mxu0 0.0
        %v758 = vand.u32 %v401, 4294901760
        %v759 = vsub.f32 %v401, %v758
        %v760 = vand.u32 %v759, 4294901760
        %v761 = vsub.f32 %v759, %v760
        %v762 = vand.u32 %v761, 4294901760
        %763 = vmatpush1.msra.mxu0 %v762
        %764 = vmatprep.subr.mxu0 0.0
        %v765 = vand.u32 %v402, 4294901760
        %v766 = vsub.f32 %v402, %v765
        %v767 = vand.u32 %v766, 4294901760
        %v768 = vsub.f32 %v766, %v767
        %v769 = vand.u32 %v768, 4294901760
        %770 = vmatpush1.msra.mxu0 %v769
        %771 = vmatprep.subr.mxu0 0.0
        %v772 = vand.u32 %v403, 4294901760
        %v773 = vsub.f32 %v403, %v772
        %v774 = vand.u32 %v773, 4294901760
        %v775 = vsub.f32 %v773, %v774
        %v776 = vand.u32 %v775, 4294901760
        %777 = vmatpush1.msra.mxu0 %v776
        %778 = vmatprep.subr.mxu0 0.0
        %v779 = vand.u32 %v404, 4294901760
        %v780 = vsub.f32 %v404, %v779
        %v781 = vand.u32 %v780, 4294901760
        %v782 = vsub.f32 %v780, %v781
        %v783 = vand.u32 %v782, 4294901760
        %784 = vmatpush1.msra.mxu0 %v783
        %v785 = vand.u32 %v370, 4294901760
        %786 = vmatprep.mubr.f32.mxu0 %v785
        %v787 = vand.u32 %v369, 4294901760
        %788 = vmatmul.mubr.f32.gmra.mrb[0].mxu0 %v787
        %v789 = vpop.f32.mrb[0].mxu0
        %v790 = vadd.f32 %v558, %v789
        %v791 = vpop.f32.mrb[0].mxu0
        %792 = vdwg.mxu0
        %793 = vmatprep.subr.mxu0 0.0
        %v794 = vand.u32 %v373, 4294901760
        %v795 = vsub.f32 %v373, %v794
        %796 = vmatpush1.msra.mxu0 %v795
        %797 = vmatprep.subr.mxu0 0.0
        %v798 = vand.u32 %v374, 4294901760
        %v799 = vsub.f32 %v374, %v798
        %800 = vmatpush1.msra.mxu0 %v799
        %801 = vmatprep.subr.mxu0 0.0
        %v802 = vand.u32 %v375, 4294901760
        %v803 = vsub.f32 %v375, %v802
        %804 = vmatpush1.msra.mxu0 %v803
        %805 = vmatprep.subr.mxu0 0.0
        %v806 = vand.u32 %v376, 4294901760
        %v807 = vsub.f32 %v376, %v806
        %808 = vmatpush1.msra.mxu0 %v807
        %809 = vmatprep.subr.mxu0 0.0
        %v810 = vand.u32 %v377, 4294901760
        %v811 = vsub.f32 %v377, %v810
        %812 = vmatpush1.msra.mxu0 %v811
        %813 = vmatprep.subr.mxu0 0.0
        %v814 = vand.u32 %v378, 4294901760
        %v815 = vsub.f32 %v378, %v814
        %816 = vmatpush1.msra.mxu0 %v815
        %817 = vmatprep.subr.mxu0 0.0
        %v818 = vand.u32 %v379, 4294901760
        %v819 = vsub.f32 %v379, %v818
        %820 = vmatpush1.msra.mxu0 %v819
        %821 = vmatprep.subr.mxu0 0.0
        %v822 = vand.u32 %v380, 4294901760
        %v823 = vsub.f32 %v380, %v822
        %824 = vmatpush1.msra.mxu0 %v823
        %825 = vmatprep.subr.mxu0 0.0
        %v826 = vand.u32 %v381, 4294901760
        %v827 = vsub.f32 %v381, %v826
        %828 = vmatpush1.msra.mxu0 %v827
        %829 = vmatprep.subr.mxu0 0.0
        %v830 = vand.u32 %v382, 4294901760
        %v831 = vsub.f32 %v382, %v830
        %832 = vmatpush1.msra.mxu0 %v831
        %833 = vmatprep.subr.mxu0 0.0
        %v834 = vand.u32 %v383, 4294901760
        %v835 = vsub.f32 %v383, %v834
        %836 = vmatpush1.msra.mxu0 %v835
        %837 = vmatprep.subr.mxu0 0.0
        %v838 = vand.u32 %v384, 4294901760
        %v839 = vsub.f32 %v384, %v838
        %840 = vmatpush1.msra.mxu0 %v839
        %841 = vmatprep.subr.mxu0 0.0
        %v842 = vand.u32 %v385, 4294901760
        %v843 = vsub.f32 %v385, %v842
        %844 = vmatpush1.msra.mxu0 %v843
        %845 = vmatprep.subr.mxu0 0.0
        %v846 = vand.u32 %v386, 4294901760
        %v847 = vsub.f32 %v386, %v846
        %848 = vmatpush1.msra.mxu0 %v847
        %849 = vmatprep.subr.mxu0 0.0
        %v850 = vand.u32 %v387, 4294901760
        %v851 = vsub.f32 %v387, %v850
        %852 = vmatpush1.msra.mxu0 %v851
        %853 = vmatprep.subr.mxu0 0.0
        %v854 = vand.u32 %v388, 4294901760
        %v855 = vsub.f32 %v388, %v854
        %856 = vmatpush1.msra.mxu0 %v855
        %857 = vmatprep.subr.mxu0 0.0
        %v858 = vand.u32 %v389, 4294901760
        %v859 = vsub.f32 %v389, %v858
        %860 = vmatpush1.msra.mxu0 %v859
        %861 = vmatprep.subr.mxu0 0.0
        %v862 = vand.u32 %v390, 4294901760
        %v863 = vsub.f32 %v390, %v862
        %864 = vmatpush1.msra.mxu0 %v863
        %865 = vmatprep.subr.mxu0 0.0
        %v866 = vand.u32 %v391, 4294901760
        %v867 = vsub.f32 %v391, %v866
        %868 = vmatpush1.msra.mxu0 %v867
        %869 = vmatprep.subr.mxu0 0.0
        %v870 = vand.u32 %v392, 4294901760
        %v871 = vsub.f32 %v392, %v870
        %872 = vmatpush1.msra.mxu0 %v871
        %873 = vmatprep.subr.mxu0 0.0
        %v874 = vand.u32 %v393, 4294901760
        %v875 = vsub.f32 %v393, %v874
        %876 = vmatpush1.msra.mxu0 %v875
        %877 = vmatprep.subr.mxu0 0.0
        %v878 = vand.u32 %v394, 4294901760
        %v879 = vsub.f32 %v394, %v878
        %880 = vmatpush1.msra.mxu0 %v879
        %881 = vmatprep.subr.mxu0 0.0
        %v882 = vand.u32 %v395, 4294901760
        %v883 = vsub.f32 %v395, %v882
        %884 = vmatpush1.msra.mxu0 %v883
        %885 = vmatprep.subr.mxu0 0.0
        %v886 = vand.u32 %v396, 4294901760
        %v887 = vsub.f32 %v396, %v886
        %888 = vmatpush1.msra.mxu0 %v887
        %889 = vmatprep.subr.mxu0 0.0
        %v890 = vand.u32 %v397, 4294901760
        %v891 = vsub.f32 %v397, %v890
        %892 = vmatpush1.msra.mxu0 %v891
        %893 = vmatprep.subr.mxu0 0.0
        %v894 = vand.u32 %v398, 4294901760
        %v895 = vsub.f32 %v398, %v894
        %896 = vmatpush1.msra.mxu0 %v895
        %897 = vmatprep.subr.mxu0 0.0
        %v898 = vand.u32 %v399, 4294901760
        %v899 = vsub.f32 %v399, %v898
        %900 = vmatpush1.msra.mxu0 %v899
        %901 = vmatprep.subr.mxu0 0.0
        %v902 = vand.u32 %v400, 4294901760
        %v903 = vsub.f32 %v400, %v902
        %904 = vmatpush1.msra.mxu0 %v903
        %905 = vmatprep.subr.mxu0 0.0
        %v906 = vand.u32 %v401, 4294901760
        %v907 = vsub.f32 %v401, %v906
        %908 = vmatpush1.msra.mxu0 %v907
        %909 = vmatprep.subr.mxu0 0.0
        %v910 = vand.u32 %v402, 4294901760
        %v911 = vsub.f32 %v402, %v910
        %912 = vmatpush1.msra.mxu0 %v911
        %913 = vmatprep.subr.mxu0 0.0
        %v914 = vand.u32 %v403, 4294901760
        %v915 = vsub.f32 %v403, %v914
        %916 = vmatpush1.msra.mxu0 %v915
        %917 = vmatprep.subr.mxu0 0.0
        %v918 = vand.u32 %v404, 4294901760
        %v919 = vsub.f32 %v404, %v918
        %920 = vmatpush1.msra.mxu0 %v919
        %v921 = vand.u32 %v370, 4294901760
        %v922 = vsub.f32 %v370, %v921
        %923 = vmatprep.mubr.f32.mxu0 %v922
        %v924 = vand.u32 %v369, 4294901760
        %v925 = vsub.f32 %v369, %v924
        %926 = vmatmul.mubr.f32.gmra.mrb[0].mxu0 %v925
        %v927 = vpop.f32.mrb[0].mxu0
        %v928 = vadd.f32 %v790, %v927
        %v929 = vpop.f32.mrb[0].mxu0
        %930 = vdwg.mxu0
        %931 = vmatprep.subr.mxu0 0.0
        %v932 = vand.u32 %v373, 4294901760
        %933 = vmatpush1.msra.mxu0 %v932
        %934 = vmatprep.subr.mxu0 0.0
        %v935 = vand.u32 %v374, 4294901760
        %936 = vmatpush1.msra.mxu0 %v935
        %937 = vmatprep.subr.mxu0 0.0
        %v938 = vand.u32 %v375, 4294901760
        %939 = vmatpush1.msra.mxu0 %v938
        %940 = vmatprep.subr.mxu0 0.0
        %v941 = vand.u32 %v376, 4294901760
        %942 = vmatpush1.msra.mxu0 %v941
        %943 = vmatprep.subr.mxu0 0.0
        %v944 = vand.u32 %v377, 4294901760
        %945 = vmatpush1.msra.mxu0 %v944
        %946 = vmatprep.subr.mxu0 0.0
        %v947 = vand.u32 %v378, 4294901760
        %948 = vmatpush1.msra.mxu0 %v947
        %949 = vmatprep.subr.mxu0 0.0
        %v950 = vand.u32 %v379, 4294901760
        %951 = vmatpush1.msra.mxu0 %v950
        %952 = vmatprep.subr.mxu0 0.0
        %v953 = vand.u32 %v380, 4294901760
        %954 = vmatpush1.msra.mxu0 %v953
        %955 = vmatprep.subr.mxu0 0.0
        %v956 = vand.u32 %v381, 4294901760
        %957 = vmatpush1.msra.mxu0 %v956
        %958 = vmatprep.subr.mxu0 0.0
        %v959 = vand.u32 %v382, 4294901760
        %960 = vmatpush1.msra.mxu0 %v959
        %961 = vmatprep.subr.mxu0 0.0
        %v962 = vand.u32 %v383, 4294901760
        %963 = vmatpush1.msra.mxu0 %v962
        %964 = vmatprep.subr.mxu0 0.0
        %v965 = vand.u32 %v384, 4294901760
        %966 = vmatpush1.msra.mxu0 %v965
        %967 = vmatprep.subr.mxu0 0.0
        %v968 = vand.u32 %v385, 4294901760
        %969 = vmatpush1.msra.mxu0 %v968
        %970 = vmatprep.subr.mxu0 0.0
        %v971 = vand.u32 %v386, 4294901760
        %972 = vmatpush1.msra.mxu0 %v971
        %973 = vmatprep.subr.mxu0 0.0
        %v974 = vand.u32 %v387, 4294901760
        %975 = vmatpush1.msra.mxu0 %v974
        %976 = vmatprep.subr.mxu0 0.0
        %v977 = vand.u32 %v388, 4294901760
        %978 = vmatpush1.msra.mxu0 %v977
        %979 = vmatprep.subr.mxu0 0.0
        %v980 = vand.u32 %v389, 4294901760
        %981 = vmatpush1.msra.mxu0 %v980
        %982 = vmatprep.subr.mxu0 0.0
        %v983 = vand.u32 %v390, 4294901760
        %984 = vmatpush1.msra.mxu0 %v983
        %985 = vmatprep.subr.mxu0 0.0
        %v986 = vand.u32 %v391, 4294901760
        %987 = vmatpush1.msra.mxu0 %v986
        %988 = vmatprep.subr.mxu0 0.0
        %v989 = vand.u32 %v392, 4294901760
        %990 = vmatpush1.msra.mxu0 %v989
        %991 = vmatprep.subr.mxu0 0.0
        %v992 = vand.u32 %v393, 4294901760
        %993 = vmatpush1.msra.mxu0 %v992
        %994 = vmatprep.subr.mxu0 0.0
        %v995 = vand.u32 %v394, 4294901760
        %996 = vmatpush1.msra.mxu0 %v995
        %997 = vmatprep.subr.mxu0 0.0
        %v998 = vand.u32 %v395, 4294901760
        %999 = vmatpush1.msra.mxu0 %v998
        %1000 = vmatprep.subr.mxu0 0.0
        %v1001 = vand.u32 %v396, 4294901760
        %1002 = vmatpush1.msra.mxu0 %v1001
        %1003 = vmatprep.subr.mxu0 0.0
        %v1004 = vand.u32 %v397, 4294901760
        %1005 = vmatpush1.msra.mxu0 %v1004
        %1006 = vmatprep.subr.mxu0 0.0
        %v1007 = vand.u32 %v398, 4294901760
        %1008 = vmatpush1.msra.mxu0 %v1007
        %1009 = vmatprep.subr.mxu0 0.0
        %v1010 = vand.u32 %v399, 4294901760
        %1011 = vmatpush1.msra.mxu0 %v1010
        %1012 = vmatprep.subr.mxu0 0.0
        %v1013 = vand.u32 %v400, 4294901760
        %1014 = vmatpush1.msra.mxu0 %v1013
        %1015 = vmatprep.subr.mxu0 0.0
        %v1016 = vand.u32 %v401, 4294901760
        %1017 = vmatpush1.msra.mxu0 %v1016
        %1018 = vmatprep.subr.mxu0 0.0
        %v1019 = vand.u32 %v402, 4294901760
        %1020 = vmatpush1.msra.mxu0 %v1019
        %1021 = vmatprep.subr.mxu0 0.0
        %v1022 = vand.u32 %v403, 4294901760
        %1023 = vmatpush1.msra.mxu0 %v1022
        %1024 = vmatprep.subr.mxu0 0.0
        %v1025 = vand.u32 %v404, 4294901760
        %1026 = vmatpush1.msra.mxu0 %v1025
        %v1027 = vand.u32 %v370, 4294901760
        %v1028 = vsub.f32 %v370, %v1027
        %v1029 = vand.u32 %v1028, 4294901760
        %1030 = vmatprep.mubr.f32.mxu0 %v1029
        %v1031 = vand.u32 %v369, 4294901760
        %v1032 = vsub.f32 %v369, %v1031
        %v1033 = vand.u32 %v1032, 4294901760
        %1034 = vmatmul.mubr.f32.gmra.mrb[0].mxu0 %v1033
        %v1035 = vpop.f32.mrb[0].mxu0
        %v1036 = vadd.f32 %v928, %v1035
        %v1037 = vpop.f32.mrb[0].mxu0
        %1038 = vdwg.mxu0
        %1039 = vmatprep.subr.mxu0 0.0
        %v1040 = vand.u32 %v373, 4294901760
        %v1041 = vsub.f32 %v373, %v1040
        %v1042 = vand.u32 %v1041, 4294901760
        %1043 = vmatpush1.msra.mxu0 %v1042
        %1044 = vmatprep.subr.mxu0 0.0
        %v1045 = vand.u32 %v374, 4294901760
        %v1046 = vsub.f32 %v374, %v1045
        %v1047 = vand.u32 %v1046, 4294901760
        %1048 = vmatpush1.msra.mxu0 %v1047
        %1049 = vmatprep.subr.mxu0 0.0
        %v1050 = vand.u32 %v375, 4294901760
        %v1051 = vsub.f32 %v375, %v1050
        %v1052 = vand.u32 %v1051, 4294901760
        %1053 = vmatpush1.msra.mxu0 %v1052
        %1054 = vmatprep.subr.mxu0 0.0
        %v1055 = vand.u32 %v376, 4294901760
        %v1056 = vsub.f32 %v376, %v1055
        %v1057 = vand.u32 %v1056, 4294901760
        %1058 = vmatpush1.msra.mxu0 %v1057
        %1059 = vmatprep.subr.mxu0 0.0
        %v1060 = vand.u32 %v377, 4294901760
        %v1061 = vsub.f32 %v377, %v1060
        %v1062 = vand.u32 %v1061, 4294901760
        %1063 = vmatpush1.msra.mxu0 %v1062
        %1064 = vmatprep.subr.mxu0 0.0
        %v1065 = vand.u32 %v378, 4294901760
        %v1066 = vsub.f32 %v378, %v1065
        %v1067 = vand.u32 %v1066, 4294901760
        %1068 = vmatpush1.msra.mxu0 %v1067
        %1069 = vmatprep.subr.mxu0 0.0
        %v1070 = vand.u32 %v379, 4294901760
        %v1071 = vsub.f32 %v379, %v1070
        %v1072 = vand.u32 %v1071, 4294901760
        %1073 = vmatpush1.msra.mxu0 %v1072
        %1074 = vmatprep.subr.mxu0 0.0
        %v1075 = vand.u32 %v380, 4294901760
        %v1076 = vsub.f32 %v380, %v1075
        %v1077 = vand.u32 %v1076, 4294901760
        %1078 = vmatpush1.msra.mxu0 %v1077
        %1079 = vmatprep.subr.mxu0 0.0
        %v1080 = vand.u32 %v381, 4294901760
        %v1081 = vsub.f32 %v381, %v1080
        %v1082 = vand.u32 %v1081, 4294901760
        %1083 = vmatpush1.msra.mxu0 %v1082
        %1084 = vmatprep.subr.mxu0 0.0
        %v1085 = vand.u32 %v382, 4294901760
        %v1086 = vsub.f32 %v382, %v1085
        %v1087 = vand.u32 %v1086, 4294901760
        %1088 = vmatpush1.msra.mxu0 %v1087
        %1089 = vmatprep.subr.mxu0 0.0
        %v1090 = vand.u32 %v383, 4294901760
        %v1091 = vsub.f32 %v383, %v1090
        %v1092 = vand.u32 %v1091, 4294901760
        %1093 = vmatpush1.msra.mxu0 %v1092
        %1094 = vmatprep.subr.mxu0 0.0
        %v1095 = vand.u32 %v384, 4294901760
        %v1096 = vsub.f32 %v384, %v1095
        %v1097 = vand.u32 %v1096, 4294901760
        %1098 = vmatpush1.msra.mxu0 %v1097
        %1099 = vmatprep.subr.mxu0 0.0
        %v1100 = vand.u32 %v385, 4294901760
        %v1101 = vsub.f32 %v385, %v1100
        %v1102 = vand.u32 %v1101, 4294901760
        %1103 = vmatpush1.msra.mxu0 %v1102
        %1104 = vmatprep.subr.mxu0 0.0
        %v1105 = vand.u32 %v386, 4294901760
        %v1106 = vsub.f32 %v386, %v1105
        %v1107 = vand.u32 %v1106, 4294901760
        %1108 = vmatpush1.msra.mxu0 %v1107
        %1109 = vmatprep.subr.mxu0 0.0
        %v1110 = vand.u32 %v387, 4294901760
        %v1111 = vsub.f32 %v387, %v1110
        %v1112 = vand.u32 %v1111, 4294901760
        %1113 = vmatpush1.msra.mxu0 %v1112
        %1114 = vmatprep.subr.mxu0 0.0
        %v1115 = vand.u32 %v388, 4294901760
        %v1116 = vsub.f32 %v388, %v1115
        %v1117 = vand.u32 %v1116, 4294901760
        %1118 = vmatpush1.msra.mxu0 %v1117
        %1119 = vmatprep.subr.mxu0 0.0
        %v1120 = vand.u32 %v389, 4294901760
        %v1121 = vsub.f32 %v389, %v1120
        %v1122 = vand.u32 %v1121, 4294901760
        %1123 = vmatpush1.msra.mxu0 %v1122
        %1124 = vmatprep.subr.mxu0 0.0
        %v1125 = vand.u32 %v390, 4294901760
        %v1126 = vsub.f32 %v390, %v1125
        %v1127 = vand.u32 %v1126, 4294901760
        %1128 = vmatpush1.msra.mxu0 %v1127
        %1129 = vmatprep.subr.mxu0 0.0
        %v1130 = vand.u32 %v391, 4294901760
        %v1131 = vsub.f32 %v391, %v1130
        %v1132 = vand.u32 %v1131, 4294901760
        %1133 = vmatpush1.msra.mxu0 %v1132
        %1134 = vmatprep.subr.mxu0 0.0
        %v1135 = vand.u32 %v392, 4294901760
        %v1136 = vsub.f32 %v392, %v1135
        %v1137 = vand.u32 %v1136, 4294901760
        %1138 = vmatpush1.msra.mxu0 %v1137
        %1139 = vmatprep.subr.mxu0 0.0
        %v1140 = vand.u32 %v393, 4294901760
        %v1141 = vsub.f32 %v393, %v1140
        %v1142 = vand.u32 %v1141, 4294901760
        %1143 = vmatpush1.msra.mxu0 %v1142
        %1144 = vmatprep.subr.mxu0 0.0
        %v1145 = vand.u32 %v394, 4294901760
        %v1146 = vsub.f32 %v394, %v1145
        %v1147 = vand.u32 %v1146, 4294901760
        %1148 = vmatpush1.msra.mxu0 %v1147
        %1149 = vmatprep.subr.mxu0 0.0
        %v1150 = vand.u32 %v395, 4294901760
        %v1151 = vsub.f32 %v395, %v1150
        %v1152 = vand.u32 %v1151, 4294901760
        %1153 = vmatpush1.msra.mxu0 %v1152
        %1154 = vmatprep.subr.mxu0 0.0
        %v1155 = vand.u32 %v396, 4294901760
        %v1156 = vsub.f32 %v396, %v1155
        %v1157 = vand.u32 %v1156, 4294901760
        %1158 = vmatpush1.msra.mxu0 %v1157
        %1159 = vmatprep.subr.mxu0 0.0
        %v1160 = vand.u32 %v397, 4294901760
        %v1161 = vsub.f32 %v397, %v1160
        %v1162 = vand.u32 %v1161, 4294901760
        %1163 = vmatpush1.msra.mxu0 %v1162
        %1164 = vmatprep.subr.mxu0 0.0
        %v1165 = vand.u32 %v398, 4294901760
        %v1166 = vsub.f32 %v398, %v1165
        %v1167 = vand.u32 %v1166, 4294901760
        %1168 = vmatpush1.msra.mxu0 %v1167
        %1169 = vmatprep.subr.mxu0 0.0
        %v1170 = vand.u32 %v399, 4294901760
        %v1171 = vsub.f32 %v399, %v1170
        %v1172 = vand.u32 %v1171, 4294901760
        %1173 = vmatpush1.msra.mxu0 %v1172
        %1174 = vmatprep.subr.mxu0 0.0
        %v1175 = vand.u32 %v400, 4294901760
        %v1176 = vsub.f32 %v400, %v1175
        %v1177 = vand.u32 %v1176, 4294901760
        %1178 = vmatpush1.msra.mxu0 %v1177
        %1179 = vmatprep.subr.mxu0 0.0
        %v1180 = vand.u32 %v401, 4294901760
        %v1181 = vsub.f32 %v401, %v1180
        %v1182 = vand.u32 %v1181, 4294901760
        %1183 = vmatpush1.msra.mxu0 %v1182
        %1184 = vmatprep.subr.mxu0 0.0
        %v1185 = vand.u32 %v402, 4294901760
        %v1186 = vsub.f32 %v402, %v1185
        %v1187 = vand.u32 %v1186, 4294901760
        %1188 = vmatpush1.msra.mxu0 %v1187
        %1189 = vmatprep.subr.mxu0 0.0
        %v1190 = vand.u32 %v403, 4294901760
        %v1191 = vsub.f32 %v403, %v1190
        %v1192 = vand.u32 %v1191, 4294901760
        %1193 = vmatpush1.msra.mxu0 %v1192
        %1194 = vmatprep.subr.mxu0 0.0
        %v1195 = vand.u32 %v404, 4294901760
        %v1196 = vsub.f32 %v404, %v1195
        %v1197 = vand.u32 %v1196, 4294901760
        %1198 = vmatpush1.msra.mxu0 %v1197
        %v1199 = vand.u32 %v370, 4294901760
        %1200 = vmatprep.mubr.f32.mxu0 %v1199
        %v1201 = vand.u32 %v369, 4294901760
        %1202 = vmatmul.mubr.f32.gmra.mrb[0].mxu0 %v1201
        %v1203 = vpop.f32.mrb[0].mxu0
        %v1204 = vadd.f32 %v1036, %v1203
        %v1205 = vpop.f32.mrb[0].mxu0
        %1206 = vdwg.mxu0
        %1207 = vmatprep.subr.mxu0 0.0
        %v1208 = vand.u32 %v373, 4294901760
        %1209 = vmatpush1.msra.mxu0 %v1208
        %1210 = vmatprep.subr.mxu0 0.0
        %v1211 = vand.u32 %v374, 4294901760
        %1212 = vmatpush1.msra.mxu0 %v1211
        %1213 = vmatprep.subr.mxu0 0.0
        %v1214 = vand.u32 %v375, 4294901760
        %1215 = vmatpush1.msra.mxu0 %v1214
        %1216 = vmatprep.subr.mxu0 0.0
        %v1217 = vand.u32 %v376, 4294901760
        %1218 = vmatpush1.msra.mxu0 %v1217
        %1219 = vmatprep.subr.mxu0 0.0
        %v1220 = vand.u32 %v377, 4294901760
        %1221 = vmatpush1.msra.mxu0 %v1220
        %1222 = vmatprep.subr.mxu0 0.0
        %v1223 = vand.u32 %v378, 4294901760
        %1224 = vmatpush1.msra.mxu0 %v1223
        %1225 = vmatprep.subr.mxu0 0.0
        %v1226 = vand.u32 %v379, 4294901760
        %1227 = vmatpush1.msra.mxu0 %v1226
        %1228 = vmatprep.subr.mxu0 0.0
        %v1229 = vand.u32 %v380, 4294901760
        %1230 = vmatpush1.msra.mxu0 %v1229
        %1231 = vmatprep.subr.mxu0 0.0
        %v1232 = vand.u32 %v381, 4294901760
        %1233 = vmatpush1.msra.mxu0 %v1232
        %1234 = vmatprep.subr.mxu0 0.0
        %v1235 = vand.u32 %v382, 4294901760
        %1236 = vmatpush1.msra.mxu0 %v1235
        %1237 = vmatprep.subr.mxu0 0.0
        %v1238 = vand.u32 %v383, 4294901760
        %1239 = vmatpush1.msra.mxu0 %v1238
        %1240 = vmatprep.subr.mxu0 0.0
        %v1241 = vand.u32 %v384, 4294901760
        %1242 = vmatpush1.msra.mxu0 %v1241
        %1243 = vmatprep.subr.mxu0 0.0
        %v1244 = vand.u32 %v385, 4294901760
        %1245 = vmatpush1.msra.mxu0 %v1244
        %1246 = vmatprep.subr.mxu0 0.0
        %v1247 = vand.u32 %v386, 4294901760
        %1248 = vmatpush1.msra.mxu0 %v1247
        %1249 = vmatprep.subr.mxu0 0.0
        %v1250 = vand.u32 %v387, 4294901760
        %1251 = vmatpush1.msra.mxu0 %v1250
        %1252 = vmatprep.subr.mxu0 0.0
        %v1253 = vand.u32 %v388, 4294901760
        %1254 = vmatpush1.msra.mxu0 %v1253
        %1255 = vmatprep.subr.mxu0 0.0
        %v1256 = vand.u32 %v389, 4294901760
        %1257 = vmatpush1.msra.mxu0 %v1256
        %1258 = vmatprep.subr.mxu0 0.0
        %v1259 = vand.u32 %v390, 4294901760
        %1260 = vmatpush1.msra.mxu0 %v1259
        %1261 = vmatprep.subr.mxu0 0.0
        %v1262 = vand.u32 %v391, 4294901760
        %1263 = vmatpush1.msra.mxu0 %v1262
        %1264 = vmatprep.subr.mxu0 0.0
        %v1265 = vand.u32 %v392, 4294901760
        %1266 = vmatpush1.msra.mxu0 %v1265
        %1267 = vmatprep.subr.mxu0 0.0
        %v1268 = vand.u32 %v393, 4294901760
        %1269 = vmatpush1.msra.mxu0 %v1268
        %1270 = vmatprep.subr.mxu0 0.0
        %v1271 = vand.u32 %v394, 4294901760
        %1272 = vmatpush1.msra.mxu0 %v1271
        %1273 = vmatprep.subr.mxu0 0.0
        %v1274 = vand.u32 %v395, 4294901760
        %1275 = vmatpush1.msra.mxu0 %v1274
        %1276 = vmatprep.subr.mxu0 0.0
        %v1277 = vand.u32 %v396, 4294901760
        %1278 = vmatpush1.msra.mxu0 %v1277
        %1279 = vmatprep.subr.mxu0 0.0
        %v1280 = vand.u32 %v397, 4294901760
        %1281 = vmatpush1.msra.mxu0 %v1280
        %1282 = vmatprep.subr.mxu0 0.0
        %v1283 = vand.u32 %v398, 4294901760
        %1284 = vmatpush1.msra.mxu0 %v1283
        %1285 = vmatprep.subr.mxu0 0.0
        %v1286 = vand.u32 %v399, 4294901760
        %1287 = vmatpush1.msra.mxu0 %v1286
        %1288 = vmatprep.subr.mxu0 0.0
        %v1289 = vand.u32 %v400, 4294901760
        %1290 = vmatpush1.msra.mxu0 %v1289
        %1291 = vmatprep.subr.mxu0 0.0
        %v1292 = vand.u32 %v401, 4294901760
        %1293 = vmatpush1.msra.mxu0 %v1292
        %1294 = vmatprep.subr.mxu0 0.0
        %v1295 = vand.u32 %v402, 4294901760
        %1296 = vmatpush1.msra.mxu0 %v1295
        %1297 = vmatprep.subr.mxu0 0.0
        %v1298 = vand.u32 %v403, 4294901760
        %1299 = vmatpush1.msra.mxu0 %v1298
        %1300 = vmatprep.subr.mxu0 0.0
        %v1301 = vand.u32 %v404, 4294901760
        %1302 = vmatpush1.msra.mxu0 %v1301
        %v1303 = vand.u32 %v370, 4294901760
        %1304 = vmatprep.mubr.f32.mxu0 %v1303
        %v1305 = vand.u32 %v369, 4294901760
        %1306 = vmatmul.mubr.f32.gmra.mrb[0].mxu0 %v1305
        %v1307 = vpop.f32.mrb[0].mxu0
        %v1308 = vadd.f32 %v1204, %v1307
        %v1309 = vpop.f32.mrb[0].mxu0
        %1310 = vdwg.mxu0
        %1311 = vmatprep.subr.mxu0 0.0
        %v1312 = vand.u32 %v405, 4294901760
        %1313 = vmatpush1.msra.mxu0 %v1312
        %1314 = vmatprep.subr.mxu0 0.0
        %v1315 = vand.u32 %v406, 4294901760
        %1316 = vmatpush1.msra.mxu0 %v1315
        %1317 = vmatprep.subr.mxu0 0.0
        %v1318 = vand.u32 %v407, 4294901760
        %1319 = vmatpush1.msra.mxu0 %v1318
        %1320 = vmatprep.subr.mxu0 0.0
        %v1321 = vand.u32 %v408, 4294901760
        %1322 = vmatpush1.msra.mxu0 %v1321
        %1323 = vmatprep.subr.mxu0 0.0
        %v1324 = vand.u32 %v409, 4294901760
        %1325 = vmatpush1.msra.mxu0 %v1324
        %1326 = vmatprep.subr.mxu0 0.0
        %v1327 = vand.u32 %v410, 4294901760
        %1328 = vmatpush1.msra.mxu0 %v1327
        %1329 = vmatprep.subr.mxu0 0.0
        %v1330 = vand.u32 %v411, 4294901760
        %1331 = vmatpush1.msra.mxu0 %v1330
        %1332 = vmatprep.subr.mxu0 0.0
        %v1333 = vand.u32 %v412, 4294901760
        %1334 = vmatpush1.msra.mxu0 %v1333
        %1335 = vmatprep.subr.mxu0 0.0
        %v1336 = vand.u32 %v413, 4294901760
        %1337 = vmatpush1.msra.mxu0 %v1336
        %1338 = vmatprep.subr.mxu0 0.0
        %v1339 = vand.u32 %v414, 4294901760
        %1340 = vmatpush1.msra.mxu0 %v1339
        %1341 = vmatprep.subr.mxu0 0.0
        %v1342 = vand.u32 %v415, 4294901760
        %1343 = vmatpush1.msra.mxu0 %v1342
        %1344 = vmatprep.subr.mxu0 0.0
        %v1345 = vand.u32 %v416, 4294901760
        %1346 = vmatpush1.msra.mxu0 %v1345
        %1347 = vmatprep.subr.mxu0 0.0
        %v1348 = vand.u32 %v417, 4294901760
        %1349 = vmatpush1.msra.mxu0 %v1348
        %1350 = vmatprep.subr.mxu0 0.0
        %v1351 = vand.u32 %v418, 4294901760
        %1352 = vmatpush1.msra.mxu0 %v1351
        %1353 = vmatprep.subr.mxu0 0.0
        %v1354 = vand.u32 %v419, 4294901760
        %1355 = vmatpush1.msra.mxu0 %v1354
        %1356 = vmatprep.subr.mxu0 0.0
        %v1357 = vand.u32 %v420, 4294901760
        %1358 = vmatpush1.msra.mxu0 %v1357
        %1359 = vmatprep.subr.mxu0 0.0
        %v1360 = vand.u32 %v421, 4294901760
        %1361 = vmatpush1.msra.mxu0 %v1360
        %1362 = vmatprep.subr.mxu0 0.0
        %v1363 = vand.u32 %v422, 4294901760
        %1364 = vmatpush1.msra.mxu0 %v1363
        %1365 = vmatprep.subr.mxu0 0.0
        %v1366 = vand.u32 %v423, 4294901760
        %1367 = vmatpush1.msra.mxu0 %v1366
        %1368 = vmatprep.subr.mxu0 0.0
        %v1369 = vand.u32 %v424, 4294901760
        %1370 = vmatpush1.msra.mxu0 %v1369
        %1371 = vmatprep.subr.mxu0 0.0
        %v1372 = vand.u32 %v425, 4294901760
        %1373 = vmatpush1.msra.mxu0 %v1372
        %1374 = vmatprep.subr.mxu0 0.0
        %v1375 = vand.u32 %v426, 4294901760
        %1376 = vmatpush1.msra.mxu0 %v1375
        %1377 = vmatprep.subr.mxu0 0.0
        %v1378 = vand.u32 %v427, 4294901760
        %1379 = vmatpush1.msra.mxu0 %v1378
        %1380 = vmatprep.subr.mxu0 0.0
        %v1381 = vand.u32 %v428, 4294901760
        %1382 = vmatpush1.msra.mxu0 %v1381
        %1383 = vmatprep.subr.mxu0 0.0
        %v1384 = vand.u32 %v429, 4294901760
        %1385 = vmatpush1.msra.mxu0 %v1384
        %1386 = vmatprep.subr.mxu0 0.0
        %v1387 = vand.u32 %v430, 4294901760
        %1388 = vmatpush1.msra.mxu0 %v1387
        %1389 = vmatprep.subr.mxu0 0.0
        %v1390 = vand.u32 %v431, 4294901760
        %1391 = vmatpush1.msra.mxu0 %v1390
        %1392 = vmatprep.subr.mxu0 0.0
        %v1393 = vand.u32 %v432, 4294901760
        %1394 = vmatpush1.msra.mxu0 %v1393
        %1395 = vmatprep.subr.mxu0 0.0
        %v1396 = vand.u32 %v447, 4294901760
        %1397 = vmatpush1.msra.mxu0 %v1396
        %1398 = vmatprep.subr.mxu0 0.0
        %1399 = vmatpush1.msra.mxu0 0.0
        %1400 = vmatprep.subr.mxu0 0.0
        %1401 = vmatpush1.msra.mxu0 0.0
        %1402 = vmatprep.subr.mxu0 0.0
        %1403 = vmatpush1.msra.mxu0 0.0
        %v1404 = vand.u32 %v443, 4294901760
        %v1405 = vsub.f32 %v443, %v1404
        %v1406 = vand.u32 %v1405, 4294901760
        %v1407 = vsub.f32 %v1405, %v1406
        %v1408 = vand.u32 %v1407, 4294901760
        %1409 = vmatprep.mubr.f32.mxu0 %v1408
        %v1410 = vand.u32 %v371, 4294901760
        %v1411 = vsub.f32 %v371, %v1410
        %v1412 = vand.u32 %v1411, 4294901760
        %v1413 = vsub.f32 %v1411, %v1412
        %v1414 = vand.u32 %v1413, 4294901760
        %1415 = vmatmul.mubr.f32.gmra.mrb[0].mxu0 %v1414
        %v1416 = vpop.f32.mrb[0].mxu0
        %v1417 = vadd.f32 %v1308, %v1416
        %v1418 = vpop.f32.mrb[0].mxu0
        %1419 = vdwg.mxu0
        %1420 = vmatprep.subr.mxu0 0.0
        %v1421 = vand.u32 %v405, 4294901760
        %v1422 = vsub.f32 %v405, %v1421
        %v1423 = vand.u32 %v1422, 4294901760
        %v1424 = vsub.f32 %v1422, %v1423
        %v1425 = vand.u32 %v1424, 4294901760
        %1426 = vmatpush1.msra.mxu0 %v1425
        %1427 = vmatprep.subr.mxu0 0.0
        %v1428 = vand.u32 %v406, 4294901760
        %v1429 = vsub.f32 %v406, %v1428
        %v1430 = vand.u32 %v1429, 4294901760
        %v1431 = vsub.f32 %v1429, %v1430
        %v1432 = vand.u32 %v1431, 4294901760
        %1433 = vmatpush1.msra.mxu0 %v1432
        %1434 = vmatprep.subr.mxu0 0.0
        %v1435 = vand.u32 %v407, 4294901760
        %v1436 = vsub.f32 %v407, %v1435
        %v1437 = vand.u32 %v1436, 4294901760
        %v1438 = vsub.f32 %v1436, %v1437
        %v1439 = vand.u32 %v1438, 4294901760
        %1440 = vmatpush1.msra.mxu0 %v1439
        %1441 = vmatprep.subr.mxu0 0.0
        %v1442 = vand.u32 %v408, 4294901760
        %v1443 = vsub.f32 %v408, %v1442
        %v1444 = vand.u32 %v1443, 4294901760
        %v1445 = vsub.f32 %v1443, %v1444
        %v1446 = vand.u32 %v1445, 4294901760
        %1447 = vmatpush1.msra.mxu0 %v1446
        %1448 = vmatprep.subr.mxu0 0.0
        %v1449 = vand.u32 %v409, 4294901760
        %v1450 = vsub.f32 %v409, %v1449
        %v1451 = vand.u32 %v1450, 4294901760
        %v1452 = vsub.f32 %v1450, %v1451
        %v1453 = vand.u32 %v1452, 4294901760
        %1454 = vmatpush1.msra.mxu0 %v1453
        %1455 = vmatprep.subr.mxu0 0.0
        %v1456 = vand.u32 %v410, 4294901760
        %v1457 = vsub.f32 %v410, %v1456
        %v1458 = vand.u32 %v1457, 4294901760
        %v1459 = vsub.f32 %v1457, %v1458
        %v1460 = vand.u32 %v1459, 4294901760
        %1461 = vmatpush1.msra.mxu0 %v1460
        %1462 = vmatprep.subr.mxu0 0.0
        %v1463 = vand.u32 %v411, 4294901760
        %v1464 = vsub.f32 %v411, %v1463
        %v1465 = vand.u32 %v1464, 4294901760
        %v1466 = vsub.f32 %v1464, %v1465
        %v1467 = vand.u32 %v1466, 4294901760
        %1468 = vmatpush1.msra.mxu0 %v1467
        %1469 = vmatprep.subr.mxu0 0.0
        %v1470 = vand.u32 %v412, 4294901760
        %v1471 = vsub.f32 %v412, %v1470
        %v1472 = vand.u32 %v1471, 4294901760
        %v1473 = vsub.f32 %v1471, %v1472
        %v1474 = vand.u32 %v1473, 4294901760
        %1475 = vmatpush1.msra.mxu0 %v1474
        %1476 = vmatprep.subr.mxu0 0.0
        %v1477 = vand.u32 %v413, 4294901760
        %v1478 = vsub.f32 %v413, %v1477
        %v1479 = vand.u32 %v1478, 4294901760
        %v1480 = vsub.f32 %v1478, %v1479
        %v1481 = vand.u32 %v1480, 4294901760
        %1482 = vmatpush1.msra.mxu0 %v1481
        %1483 = vmatprep.subr.mxu0 0.0
        %v1484 = vand.u32 %v414, 4294901760
        %v1485 = vsub.f32 %v414, %v1484
        %v1486 = vand.u32 %v1485, 4294901760
        %v1487 = vsub.f32 %v1485, %v1486
        %v1488 = vand.u32 %v1487, 4294901760
        %1489 = vmatpush1.msra.mxu0 %v1488
        %1490 = vmatprep.subr.mxu0 0.0
        %v1491 = vand.u32 %v415, 4294901760
        %v1492 = vsub.f32 %v415, %v1491
        %v1493 = vand.u32 %v1492, 4294901760
        %v1494 = vsub.f32 %v1492, %v1493
        %v1495 = vand.u32 %v1494, 4294901760
        %1496 = vmatpush1.msra.mxu0 %v1495
        %1497 = vmatprep.subr.mxu0 0.0
        %v1498 = vand.u32 %v416, 4294901760
        %v1499 = vsub.f32 %v416, %v1498
        %v1500 = vand.u32 %v1499, 4294901760
        %v1501 = vsub.f32 %v1499, %v1500
        %v1502 = vand.u32 %v1501, 4294901760
        %1503 = vmatpush1.msra.mxu0 %v1502
        %1504 = vmatprep.subr.mxu0 0.0
        %v1505 = vand.u32 %v417, 4294901760
        %v1506 = vsub.f32 %v417, %v1505
        %v1507 = vand.u32 %v1506, 4294901760
        %v1508 = vsub.f32 %v1506, %v1507
        %v1509 = vand.u32 %v1508, 4294901760
        %1510 = vmatpush1.msra.mxu0 %v1509
        %1511 = vmatprep.subr.mxu0 0.0
        %v1512 = vand.u32 %v418, 4294901760
        %v1513 = vsub.f32 %v418, %v1512
        %v1514 = vand.u32 %v1513, 4294901760
        %v1515 = vsub.f32 %v1513, %v1514
        %v1516 = vand.u32 %v1515, 4294901760
        %1517 = vmatpush1.msra.mxu0 %v1516
        %1518 = vmatprep.subr.mxu0 0.0
        %v1519 = vand.u32 %v419, 4294901760
        %v1520 = vsub.f32 %v419, %v1519
        %v1521 = vand.u32 %v1520, 4294901760
        %v1522 = vsub.f32 %v1520, %v1521
        %v1523 = vand.u32 %v1522, 4294901760
        %1524 = vmatpush1.msra.mxu0 %v1523
        %1525 = vmatprep.subr.mxu0 0.0
        %v1526 = vand.u32 %v420, 4294901760
        %v1527 = vsub.f32 %v420, %v1526
        %v1528 = vand.u32 %v1527, 4294901760
        %v1529 = vsub.f32 %v1527, %v1528
        %v1530 = vand.u32 %v1529, 4294901760
        %1531 = vmatpush1.msra.mxu0 %v1530
        %1532 = vmatprep.subr.mxu0 0.0
        %v1533 = vand.u32 %v421, 4294901760
        %v1534 = vsub.f32 %v421, %v1533
        %v1535 = vand.u32 %v1534, 4294901760
        %v1536 = vsub.f32 %v1534, %v1535
        %v1537 = vand.u32 %v1536, 4294901760
        %1538 = vmatpush1.msra.mxu0 %v1537
        %1539 = vmatprep.subr.mxu0 0.0
        %v1540 = vand.u32 %v422, 4294901760
        %v1541 = vsub.f32 %v422, %v1540
        %v1542 = vand.u32 %v1541, 4294901760
        %v1543 = vsub.f32 %v1541, %v1542
        %v1544 = vand.u32 %v1543, 4294901760
        %1545 = vmatpush1.msra.mxu0 %v1544
        %1546 = vmatprep.subr.mxu0 0.0
        %v1547 = vand.u32 %v423, 4294901760
        %v1548 = vsub.f32 %v423, %v1547
        %v1549 = vand.u32 %v1548, 4294901760
        %v1550 = vsub.f32 %v1548, %v1549
        %v1551 = vand.u32 %v1550, 4294901760
        %1552 = vmatpush1.msra.mxu0 %v1551
        %1553 = vmatprep.subr.mxu0 0.0
        %v1554 = vand.u32 %v424, 4294901760
        %v1555 = vsub.f32 %v424, %v1554
        %v1556 = vand.u32 %v1555, 4294901760
        %v1557 = vsub.f32 %v1555, %v1556
        %v1558 = vand.u32 %v1557, 4294901760
        %1559 = vmatpush1.msra.mxu0 %v1558
        %1560 = vmatprep.subr.mxu0 0.0
        %v1561 = vand.u32 %v425, 4294901760
        %v1562 = vsub.f32 %v425, %v1561
        %v1563 = vand.u32 %v1562, 4294901760
        %v1564 = vsub.f32 %v1562, %v1563
        %v1565 = vand.u32 %v1564, 4294901760
        %1566 = vmatpush1.msra.mxu0 %v1565
        %1567 = vmatprep.subr.mxu0 0.0
        %v1568 = vand.u32 %v426, 4294901760
        %v1569 = vsub.f32 %v426, %v1568
        %v1570 = vand.u32 %v1569, 4294901760
        %v1571 = vsub.f32 %v1569, %v1570
        %v1572 = vand.u32 %v1571, 4294901760
        %1573 = vmatpush1.msra.mxu0 %v1572
        %1574 = vmatprep.subr.mxu0 0.0
        %v1575 = vand.u32 %v427, 4294901760
        %v1576 = vsub.f32 %v427, %v1575
        %v1577 = vand.u32 %v1576, 4294901760
        %v1578 = vsub.f32 %v1576, %v1577
        %v1579 = vand.u32 %v1578, 4294901760
        %1580 = vmatpush1.msra.mxu0 %v1579
        %1581 = vmatprep.subr.mxu0 0.0
        %v1582 = vand.u32 %v428, 4294901760
        %v1583 = vsub.f32 %v428, %v1582
        %v1584 = vand.u32 %v1583, 4294901760
        %v1585 = vsub.f32 %v1583, %v1584
        %v1586 = vand.u32 %v1585, 4294901760
        %1587 = vmatpush1.msra.mxu0 %v1586
        %1588 = vmatprep.subr.mxu0 0.0
        %v1589 = vand.u32 %v429, 4294901760
        %v1590 = vsub.f32 %v429, %v1589
        %v1591 = vand.u32 %v1590, 4294901760
        %v1592 = vsub.f32 %v1590, %v1591
        %v1593 = vand.u32 %v1592, 4294901760
        %1594 = vmatpush1.msra.mxu0 %v1593
        %1595 = vmatprep.subr.mxu0 0.0
        %v1596 = vand.u32 %v430, 4294901760
        %v1597 = vsub.f32 %v430, %v1596
        %v1598 = vand.u32 %v1597, 4294901760
        %v1599 = vsub.f32 %v1597, %v1598
        %v1600 = vand.u32 %v1599, 4294901760
        %1601 = vmatpush1.msra.mxu0 %v1600
        %1602 = vmatprep.subr.mxu0 0.0
        %v1603 = vand.u32 %v431, 4294901760
        %v1604 = vsub.f32 %v431, %v1603
        %v1605 = vand.u32 %v1604, 4294901760
        %v1606 = vsub.f32 %v1604, %v1605
        %v1607 = vand.u32 %v1606, 4294901760
        %1608 = vmatpush1.msra.mxu0 %v1607
        %1609 = vmatprep.subr.mxu0 0.0
        %v1610 = vand.u32 %v432, 4294901760
        %v1611 = vsub.f32 %v432, %v1610
        %v1612 = vand.u32 %v1611, 4294901760
        %v1613 = vsub.f32 %v1611, %v1612
        %v1614 = vand.u32 %v1613, 4294901760
        %1615 = vmatpush1.msra.mxu0 %v1614
        %1616 = vmatprep.subr.mxu0 0.0
        %v1617 = vand.u32 %v447, 4294901760
        %v1618 = vsub.f32 %v447, %v1617
        %v1619 = vand.u32 %v1618, 4294901760
        %v1620 = vsub.f32 %v1618, %v1619
        %v1621 = vand.u32 %v1620, 4294901760
        %1622 = vmatpush1.msra.mxu0 %v1621
        %1623 = vmatprep.subr.mxu0 0.0
        %1624 = vmatpush1.msra.mxu0 0.0
        %1625 = vmatprep.subr.mxu0 0.0
        %1626 = vmatpush1.msra.mxu0 0.0
        %1627 = vmatprep.subr.mxu0 0.0
        %1628 = vmatpush1.msra.mxu0 0.0
        %v1629 = vand.u32 %v443, 4294901760
        %1630 = vmatprep.mubr.f32.mxu0 %v1629
        %v1631 = vand.u32 %v371, 4294901760
        %1632 = vmatmul.mubr.f32.gmra.mrb[0].mxu0 %v1631
        %v1633 = vpop.f32.mrb[0].mxu0
        %v1634 = vadd.f32 %v1417, %v1633
        %v1635 = vpop.f32.mrb[0].mxu0
        %1636 = vdwg.mxu0
        %1637 = vmatprep.subr.mxu0 0.0
        %v1638 = vand.u32 %v405, 4294901760
        %v1639 = vsub.f32 %v405, %v1638
        %1640 = vmatpush1.msra.mxu0 %v1639
        %1641 = vmatprep.subr.mxu0 0.0
        %v1642 = vand.u32 %v406, 4294901760
        %v1643 = vsub.f32 %v406, %v1642
        %1644 = vmatpush1.msra.mxu0 %v1643
        %1645 = vmatprep.subr.mxu0 0.0
        %v1646 = vand.u32 %v407, 4294901760
        %v1647 = vsub.f32 %v407, %v1646
        %1648 = vmatpush1.msra.mxu0 %v1647
        %1649 = vmatprep.subr.mxu0 0.0
        %v1650 = vand.u32 %v408, 4294901760
        %v1651 = vsub.f32 %v408, %v1650
        %1652 = vmatpush1.msra.mxu0 %v1651
        %1653 = vmatprep.subr.mxu0 0.0
        %v1654 = vand.u32 %v409, 4294901760
        %v1655 = vsub.f32 %v409, %v1654
        %1656 = vmatpush1.msra.mxu0 %v1655
        %1657 = vmatprep.subr.mxu0 0.0
        %v1658 = vand.u32 %v410, 4294901760
        %v1659 = vsub.f32 %v410, %v1658
        %1660 = vmatpush1.msra.mxu0 %v1659
        %1661 = vmatprep.subr.mxu0 0.0
        %v1662 = vand.u32 %v411, 4294901760
        %v1663 = vsub.f32 %v411, %v1662
        %1664 = vmatpush1.msra.mxu0 %v1663
        %1665 = vmatprep.subr.mxu0 0.0
        %v1666 = vand.u32 %v412, 4294901760
        %v1667 = vsub.f32 %v412, %v1666
        %1668 = vmatpush1.msra.mxu0 %v1667
        %1669 = vmatprep.subr.mxu0 0.0
        %v1670 = vand.u32 %v413, 4294901760
        %v1671 = vsub.f32 %v413, %v1670
        %1672 = vmatpush1.msra.mxu0 %v1671
        %1673 = vmatprep.subr.mxu0 0.0
        %v1674 = vand.u32 %v414, 4294901760
        %v1675 = vsub.f32 %v414, %v1674
        %1676 = vmatpush1.msra.mxu0 %v1675
        %1677 = vmatprep.subr.mxu0 0.0
        %v1678 = vand.u32 %v415, 4294901760
        %v1679 = vsub.f32 %v415, %v1678
        %1680 = vmatpush1.msra.mxu0 %v1679
        %1681 = vmatprep.subr.mxu0 0.0
        %v1682 = vand.u32 %v416, 4294901760
        %v1683 = vsub.f32 %v416, %v1682
        %1684 = vmatpush1.msra.mxu0 %v1683
        %1685 = vmatprep.subr.mxu0 0.0
        %v1686 = vand.u32 %v417, 4294901760
        %v1687 = vsub.f32 %v417, %v1686
        %1688 = vmatpush1.msra.mxu0 %v1687
        %1689 = vmatprep.subr.mxu0 0.0
        %v1690 = vand.u32 %v418, 4294901760
        %v1691 = vsub.f32 %v418, %v1690
        %1692 = vmatpush1.msra.mxu0 %v1691
        %1693 = vmatprep.subr.mxu0 0.0
        %v1694 = vand.u32 %v419, 4294901760
        %v1695 = vsub.f32 %v419, %v1694
        %1696 = vmatpush1.msra.mxu0 %v1695
        %1697 = vmatprep.subr.mxu0 0.0
        %v1698 = vand.u32 %v420, 4294901760
        %v1699 = vsub.f32 %v420, %v1698
        %1700 = vmatpush1.msra.mxu0 %v1699
        %1701 = vmatprep.subr.mxu0 0.0
        %v1702 = vand.u32 %v421, 4294901760
        %v1703 = vsub.f32 %v421, %v1702
        %1704 = vmatpush1.msra.mxu0 %v1703
        %1705 = vmatprep.subr.mxu0 0.0
        %v1706 = vand.u32 %v422, 4294901760
        %v1707 = vsub.f32 %v422, %v1706
        %1708 = vmatpush1.msra.mxu0 %v1707
        %1709 = vmatprep.subr.mxu0 0.0
        %v1710 = vand.u32 %v423, 4294901760
        %v1711 = vsub.f32 %v423, %v1710
        %1712 = vmatpush1.msra.mxu0 %v1711
        %1713 = vmatprep.subr.mxu0 0.0
        %v1714 = vand.u32 %v424, 4294901760
        %v1715 = vsub.f32 %v424, %v1714
        %1716 = vmatpush1.msra.mxu0 %v1715
        %1717 = vmatprep.subr.mxu0 0.0
        %v1718 = vand.u32 %v425, 4294901760
        %v1719 = vsub.f32 %v425, %v1718
        %1720 = vmatpush1.msra.mxu0 %v1719
        %1721 = vmatprep.subr.mxu0 0.0
        %v1722 = vand.u32 %v426, 4294901760
        %v1723 = vsub.f32 %v426, %v1722
        %1724 = vmatpush1.msra.mxu0 %v1723
        %1725 = vmatprep.subr.mxu0 0.0
        %v1726 = vand.u32 %v427, 4294901760
        %v1727 = vsub.f32 %v427, %v1726
        %1728 = vmatpush1.msra.mxu0 %v1727
        %1729 = vmatprep.subr.mxu0 0.0
        %v1730 = vand.u32 %v428, 4294901760
        %v1731 = vsub.f32 %v428, %v1730
        %1732 = vmatpush1.msra.mxu0 %v1731
        %1733 = vmatprep.subr.mxu0 0.0
        %v1734 = vand.u32 %v429, 4294901760
        %v1735 = vsub.f32 %v429, %v1734
        %1736 = vmatpush1.msra.mxu0 %v1735
        %1737 = vmatprep.subr.mxu0 0.0
        %v1738 = vand.u32 %v430, 4294901760
        %v1739 = vsub.f32 %v430, %v1738
        %1740 = vmatpush1.msra.mxu0 %v1739
        %1741 = vmatprep.subr.mxu0 0.0
        %v1742 = vand.u32 %v431, 4294901760
        %v1743 = vsub.f32 %v431, %v1742
        %1744 = vmatpush1.msra.mxu0 %v1743
        %1745 = vmatprep.subr.mxu0 0.0
        %v1746 = vand.u32 %v432, 4294901760
        %v1747 = vsub.f32 %v432, %v1746
        %1748 = vmatpush1.msra.mxu0 %v1747
        %1749 = vmatprep.subr.mxu0 0.0
        %v1750 = vand.u32 %v447, 4294901760
        %v1751 = vsub.f32 %v447, %v1750
        %1752 = vmatpush1.msra.mxu0 %v1751
        %1753 = vmatprep.subr.mxu0 0.0
        %1754 = vmatpush1.msra.mxu0 0.0
        %1755 = vmatprep.subr.mxu0 0.0
        %1756 = vmatpush1.msra.mxu0 0.0
        %1757 = vmatprep.subr.mxu0 0.0
        %1758 = vmatpush1.msra.mxu0 0.0
        %v1759 = vand.u32 %v443, 4294901760
        %v1760 = vsub.f32 %v443, %v1759
        %1761 = vmatprep.mubr.f32.mxu0 %v1760
        %v1762 = vand.u32 %v371, 4294901760
        %v1763 = vsub.f32 %v371, %v1762
        %1764 = vmatmul.mubr.f32.gmra.mrb[0].mxu0 %v1763
        %v1765 = vpop.f32.mrb[0].mxu0
        %v1766 = vadd.f32 %v1634, %v1765
        %v1767 = vpop.f32.mrb[0].mxu0
        %1768 = vdwg.mxu0
        %1769 = vmatprep.subr.mxu0 0.0
        %v1770 = vand.u32 %v405, 4294901760
        %1771 = vmatpush1.msra.mxu0 %v1770
        %1772 = vmatprep.subr.mxu0 0.0
        %v1773 = vand.u32 %v406, 4294901760
        %1774 = vmatpush1.msra.mxu0 %v1773
        %1775 = vmatprep.subr.mxu0 0.0
        %v1776 = vand.u32 %v407, 4294901760
        %1777 = vmatpush1.msra.mxu0 %v1776
        %1778 = vmatprep.subr.mxu0 0.0
        %v1779 = vand.u32 %v408, 4294901760
        %1780 = vmatpush1.msra.mxu0 %v1779
        %1781 = vmatprep.subr.mxu0 0.0
        %v1782 = vand.u32 %v409, 4294901760
        %1783 = vmatpush1.msra.mxu0 %v1782
        %1784 = vmatprep.subr.mxu0 0.0
        %v1785 = vand.u32 %v410, 4294901760
        %1786 = vmatpush1.msra.mxu0 %v1785
        %1787 = vmatprep.subr.mxu0 0.0
        %v1788 = vand.u32 %v411, 4294901760
        %1789 = vmatpush1.msra.mxu0 %v1788
        %1790 = vmatprep.subr.mxu0 0.0
        %v1791 = vand.u32 %v412, 4294901760
        %1792 = vmatpush1.msra.mxu0 %v1791
        %1793 = vmatprep.subr.mxu0 0.0
        %v1794 = vand.u32 %v413, 4294901760
        %1795 = vmatpush1.msra.mxu0 %v1794
        %1796 = vmatprep.subr.mxu0 0.0
        %v1797 = vand.u32 %v414, 4294901760
        %1798 = vmatpush1.msra.mxu0 %v1797
        %1799 = vmatprep.subr.mxu0 0.0
        %v1800 = vand.u32 %v415, 4294901760
        %1801 = vmatpush1.msra.mxu0 %v1800
        %1802 = vmatprep.subr.mxu0 0.0
        %v1803 = vand.u32 %v416, 4294901760
        %1804 = vmatpush1.msra.mxu0 %v1803
        %1805 = vmatprep.subr.mxu0 0.0
        %v1806 = vand.u32 %v417, 4294901760
        %1807 = vmatpush1.msra.mxu0 %v1806
        %1808 = vmatprep.subr.mxu0 0.0
        %v1809 = vand.u32 %v418, 4294901760
        %1810 = vmatpush1.msra.mxu0 %v1809
        %1811 = vmatprep.subr.mxu0 0.0
        %v1812 = vand.u32 %v419, 4294901760
        %1813 = vmatpush1.msra.mxu0 %v1812
        %1814 = vmatprep.subr.mxu0 0.0
        %v1815 = vand.u32 %v420, 4294901760
        %1816 = vmatpush1.msra.mxu0 %v1815
        %1817 = vmatprep.subr.mxu0 0.0
        %v1818 = vand.u32 %v421, 4294901760
        %1819 = vmatpush1.msra.mxu0 %v1818
        %1820 = vmatprep.subr.mxu0 0.0
        %v1821 = vand.u32 %v422, 4294901760
        %1822 = vmatpush1.msra.mxu0 %v1821
        %1823 = vmatprep.subr.mxu0 0.0
        %v1824 = vand.u32 %v423, 4294901760
        %1825 = vmatpush1.msra.mxu0 %v1824
        %1826 = vmatprep.subr.mxu0 0.0
        %v1827 = vand.u32 %v424, 4294901760
        %1828 = vmatpush1.msra.mxu0 %v1827
        %1829 = vmatprep.subr.mxu0 0.0
        %v1830 = vand.u32 %v425, 4294901760
        %1831 = vmatpush1.msra.mxu0 %v1830
        %1832 = vmatprep.subr.mxu0 0.0
        %v1833 = vand.u32 %v426, 4294901760
        %1834 = vmatpush1.msra.mxu0 %v1833
        %1835 = vmatprep.subr.mxu0 0.0
        %v1836 = vand.u32 %v427, 4294901760
        %1837 = vmatpush1.msra.mxu0 %v1836
        %1838 = vmatprep.subr.mxu0 0.0
        %v1839 = vand.u32 %v428, 4294901760
        %1840 = vmatpush1.msra.mxu0 %v1839
        %1841 = vmatprep.subr.mxu0 0.0
        %v1842 = vand.u32 %v429, 4294901760
        %1843 = vmatpush1.msra.mxu0 %v1842
        %1844 = vmatprep.subr.mxu0 0.0
        %v1845 = vand.u32 %v430, 4294901760
        %1846 = vmatpush1.msra.mxu0 %v1845
        %1847 = vmatprep.subr.mxu0 0.0
        %v1848 = vand.u32 %v431, 4294901760
        %1849 = vmatpush1.msra.mxu0 %v1848
        %1850 = vmatprep.subr.mxu0 0.0
        %v1851 = vand.u32 %v432, 4294901760
        %1852 = vmatpush1.msra.mxu0 %v1851
        %1853 = vmatprep.subr.mxu0 0.0
        %v1854 = vand.u32 %v447, 4294901760
        %1855 = vmatpush1.msra.mxu0 %v1854
        %1856 = vmatprep.subr.mxu0 0.0
        %1857 = vmatpush1.msra.mxu0 0.0
        %1858 = vmatprep.subr.mxu0 0.0
        %1859 = vmatpush1.msra.mxu0 0.0
        %1860 = vmatprep.subr.mxu0 0.0
        %1861 = vmatpush1.msra.mxu0 0.0
        %v1862 = vand.u32 %v443, 4294901760
        %v1863 = vsub.f32 %v443, %v1862
        %v1864 = vand.u32 %v1863, 4294901760
        %1865 = vmatprep.mubr.f32.mxu0 %v1864
        %v1866 = vand.u32 %v371, 4294901760
        %v1867 = vsub.f32 %v371, %v1866
        %v1868 = vand.u32 %v1867, 4294901760
        %1869 = vmatmul.mubr.f32.gmra.mrb[0].mxu0 %v1868
        %v1870 = vpop.f32.mrb[0].mxu0
        %v1871 = vadd.f32 %v1766, %v1870
        %v1872 = vpop.f32.mrb[0].mxu0
        %1873 = vdwg.mxu0
        %1874 = vmatprep.subr.mxu0 0.0
        %v1875 = vand.u32 %v405, 4294901760
        %v1876 = vsub.f32 %v405, %v1875
        %v1877 = vand.u32 %v1876, 4294901760
        %1878 = vmatpush1.msra.mxu0 %v1877
        %1879 = vmatprep.subr.mxu0 0.0
        %v1880 = vand.u32 %v406, 4294901760
        %v1881 = vsub.f32 %v406, %v1880
        %v1882 = vand.u32 %v1881, 4294901760
        %1883 = vmatpush1.msra.mxu0 %v1882
        %1884 = vmatprep.subr.mxu0 0.0
        %v1885 = vand.u32 %v407, 4294901760
        %v1886 = vsub.f32 %v407, %v1885
        %v1887 = vand.u32 %v1886, 4294901760
        %1888 = vmatpush1.msra.mxu0 %v1887
        %1889 = vmatprep.subr.mxu0 0.0
        %v1890 = vand.u32 %v408, 4294901760
        %v1891 = vsub.f32 %v408, %v1890
        %v1892 = vand.u32 %v1891, 4294901760
        %1893 = vmatpush1.msra.mxu0 %v1892
        %1894 = vmatprep.subr.mxu0 0.0
        %v1895 = vand.u32 %v409, 4294901760
        %v1896 = vsub.f32 %v409, %v1895
        %v1897 = vand.u32 %v1896, 4294901760
        %1898 = vmatpush1.msra.mxu0 %v1897
        %1899 = vmatprep.subr.mxu0 0.0
        %v1900 = vand.u32 %v410, 4294901760
        %v1901 = vsub.f32 %v410, %v1900
        %v1902 = vand.u32 %v1901, 4294901760
        %1903 = vmatpush1.msra.mxu0 %v1902
        %1904 = vmatprep.subr.mxu0 0.0
        %v1905 = vand.u32 %v411, 4294901760
        %v1906 = vsub.f32 %v411, %v1905
        %v1907 = vand.u32 %v1906, 4294901760
        %1908 = vmatpush1.msra.mxu0 %v1907
        %1909 = vmatprep.subr.mxu0 0.0
        %v1910 = vand.u32 %v412, 4294901760
        %v1911 = vsub.f32 %v412, %v1910
        %v1912 = vand.u32 %v1911, 4294901760
        %1913 = vmatpush1.msra.mxu0 %v1912
        %1914 = vmatprep.subr.mxu0 0.0
        %v1915 = vand.u32 %v413, 4294901760
        %v1916 = vsub.f32 %v413, %v1915
        %v1917 = vand.u32 %v1916, 4294901760
        %1918 = vmatpush1.msra.mxu0 %v1917
        %1919 = vmatprep.subr.mxu0 0.0
        %v1920 = vand.u32 %v414, 4294901760
        %v1921 = vsub.f32 %v414, %v1920
        %v1922 = vand.u32 %v1921, 4294901760
        %1923 = vmatpush1.msra.mxu0 %v1922
        %1924 = vmatprep.subr.mxu0 0.0
        %v1925 = vand.u32 %v415, 4294901760
        %v1926 = vsub.f32 %v415, %v1925
        %v1927 = vand.u32 %v1926, 4294901760
        %1928 = vmatpush1.msra.mxu0 %v1927
        %1929 = vmatprep.subr.mxu0 0.0
        %v1930 = vand.u32 %v416, 4294901760
        %v1931 = vsub.f32 %v416, %v1930
        %v1932 = vand.u32 %v1931, 4294901760
        %1933 = vmatpush1.msra.mxu0 %v1932
        %1934 = vmatprep.subr.mxu0 0.0
        %v1935 = vand.u32 %v417, 4294901760
        %v1936 = vsub.f32 %v417, %v1935
        %v1937 = vand.u32 %v1936, 4294901760
        %1938 = vmatpush1.msra.mxu0 %v1937
        %1939 = vmatprep.subr.mxu0 0.0
        %v1940 = vand.u32 %v418, 4294901760
        %v1941 = vsub.f32 %v418, %v1940
        %v1942 = vand.u32 %v1941, 4294901760
        %1943 = vmatpush1.msra.mxu0 %v1942
        %1944 = vmatprep.subr.mxu0 0.0
        %v1945 = vand.u32 %v419, 4294901760
        %v1946 = vsub.f32 %v419, %v1945
        %v1947 = vand.u32 %v1946, 4294901760
        %1948 = vmatpush1.msra.mxu0 %v1947
        %1949 = vmatprep.subr.mxu0 0.0
        %v1950 = vand.u32 %v420, 4294901760
        %v1951 = vsub.f32 %v420, %v1950
        %v1952 = vand.u32 %v1951, 4294901760
        %1953 = vmatpush1.msra.mxu0 %v1952
        %1954 = vmatprep.subr.mxu0 0.0
        %v1955 = vand.u32 %v421, 4294901760
        %v1956 = vsub.f32 %v421, %v1955
        %v1957 = vand.u32 %v1956, 4294901760
        %1958 = vmatpush1.msra.mxu0 %v1957
        %1959 = vmatprep.subr.mxu0 0.0
        %v1960 = vand.u32 %v422, 4294901760
        %v1961 = vsub.f32 %v422, %v1960
        %v1962 = vand.u32 %v1961, 4294901760
        %1963 = vmatpush1.msra.mxu0 %v1962
        %1964 = vmatprep.subr.mxu0 0.0
        %v1965 = vand.u32 %v423, 4294901760
        %v1966 = vsub.f32 %v423, %v1965
        %v1967 = vand.u32 %v1966, 4294901760
        %1968 = vmatpush1.msra.mxu0 %v1967
        %1969 = vmatprep.subr.mxu0 0.0
        %v1970 = vand.u32 %v424, 4294901760
        %v1971 = vsub.f32 %v424, %v1970
        %v1972 = vand.u32 %v1971, 4294901760
        %1973 = vmatpush1.msra.mxu0 %v1972
        %1974 = vmatprep.subr.mxu0 0.0
        %v1975 = vand.u32 %v425, 4294901760
        %v1976 = vsub.f32 %v425, %v1975
        %v1977 = vand.u32 %v1976, 4294901760
        %1978 = vmatpush1.msra.mxu0 %v1977
        %1979 = vmatprep.subr.mxu0 0.0
        %v1980 = vand.u32 %v426, 4294901760
        %v1981 = vsub.f32 %v426, %v1980
        %v1982 = vand.u32 %v1981, 4294901760
        %1983 = vmatpush1.msra.mxu0 %v1982
        %1984 = vmatprep.subr.mxu0 0.0
        %v1985 = vand.u32 %v427, 4294901760
        %v1986 = vsub.f32 %v427, %v1985
        %v1987 = vand.u32 %v1986, 4294901760
        %1988 = vmatpush1.msra.mxu0 %v1987
        %1989 = vmatprep.subr.mxu0 0.0
        %v1990 = vand.u32 %v428, 4294901760
        %v1991 = vsub.f32 %v428, %v1990
        %v1992 = vand.u32 %v1991, 4294901760
        %1993 = vmatpush1.msra.mxu0 %v1992
        %1994 = vmatprep.subr.mxu0 0.0
        %v1995 = vand.u32 %v429, 4294901760
        %v1996 = vsub.f32 %v429, %v1995
        %v1997 = vand.u32 %v1996, 4294901760
        %1998 = vmatpush1.msra.mxu0 %v1997
        %1999 = vmatprep.subr.mxu0 0.0
        %v2000 = vand.u32 %v430, 4294901760
        %v2001 = vsub.f32 %v430, %v2000
        %v2002 = vand.u32 %v2001, 4294901760
        %2003 = vmatpush1.msra.mxu0 %v2002
        %2004 = vmatprep.subr.mxu0 0.0
        %v2005 = vand.u32 %v431, 4294901760
        %v2006 = vsub.f32 %v431, %v2005
        %v2007 = vand.u32 %v2006, 4294901760
        %2008 = vmatpush1.msra.mxu0 %v2007
        %2009 = vmatprep.subr.mxu0 0.0
        %v2010 = vand.u32 %v432, 4294901760
        %v2011 = vsub.f32 %v432, %v2010
        %v2012 = vand.u32 %v2011, 4294901760
        %2013 = vmatpush1.msra.mxu0 %v2012
        %2014 = vmatprep.subr.mxu0 0.0
        %v2015 = vand.u32 %v447, 4294901760
        %v2016 = vsub.f32 %v447, %v2015
        %v2017 = vand.u32 %v2016, 4294901760
        %2018 = vmatpush1.msra.mxu0 %v2017
        %2019 = vmatprep.subr.mxu0 0.0
        %2020 = vmatpush1.msra.mxu0 0.0
        %2021 = vmatprep.subr.mxu0 0.0
        %2022 = vmatpush1.msra.mxu0 0.0
        %2023 = vmatprep.subr.mxu0 0.0
        %2024 = vmatpush1.msra.mxu0 0.0
        %v2025 = vand.u32 %v443, 4294901760
        %2026 = vmatprep.mubr.f32.mxu0 %v2025
        %v2027 = vand.u32 %v371, 4294901760
        %2028 = vmatmul.mubr.f32.gmra.mrb[0].mxu0 %v2027
        %v2029 = vpop.f32.mrb[0].mxu0
        %v2030 = vadd.f32 %v1871, %v2029
        %v2031 = vpop.f32.mrb[0].mxu0
        %2032 = vdwg.mxu0
        %2033 = vmatprep.subr.mxu0 0.0
        %v2034 = vand.u32 %v405, 4294901760
        %2035 = vmatpush1.msra.mxu0 %v2034
        %2036 = vmatprep.subr.mxu0 0.0
        %v2037 = vand.u32 %v406, 4294901760
        %2038 = vmatpush1.msra.mxu0 %v2037
        %2039 = vmatprep.subr.mxu0 0.0
        %v2040 = vand.u32 %v407, 4294901760
        %2041 = vmatpush1.msra.mxu0 %v2040
        %2042 = vmatprep.subr.mxu0 0.0
        %v2043 = vand.u32 %v408, 4294901760
        %2044 = vmatpush1.msra.mxu0 %v2043
        %2045 = vmatprep.subr.mxu0 0.0
        %v2046 = vand.u32 %v409, 4294901760
        %2047 = vmatpush1.msra.mxu0 %v2046
        %2048 = vmatprep.subr.mxu0 0.0
        %v2049 = vand.u32 %v410, 4294901760
        %2050 = vmatpush1.msra.mxu0 %v2049
        %2051 = vmatprep.subr.mxu0 0.0
        %v2052 = vand.u32 %v411, 4294901760
        %2053 = vmatpush1.msra.mxu0 %v2052
        %2054 = vmatprep.subr.mxu0 0.0
        %v2055 = vand.u32 %v412, 4294901760
        %2056 = vmatpush1.msra.mxu0 %v2055
        %2057 = vmatprep.subr.mxu0 0.0
        %v2058 = vand.u32 %v413, 4294901760
        %2059 = vmatpush1.msra.mxu0 %v2058
        %2060 = vmatprep.subr.mxu0 0.0
        %v2061 = vand.u32 %v414, 4294901760
        %2062 = vmatpush1.msra.mxu0 %v2061
        %2063 = vmatprep.subr.mxu0 0.0
        %v2064 = vand.u32 %v415, 4294901760
        %2065 = vmatpush1.msra.mxu0 %v2064
        %2066 = vmatprep.subr.mxu0 0.0
        %v2067 = vand.u32 %v416, 4294901760
        %2068 = vmatpush1.msra.mxu0 %v2067
        %2069 = vmatprep.subr.mxu0 0.0
        %v2070 = vand.u32 %v417, 4294901760
        %2071 = vmatpush1.msra.mxu0 %v2070
        %2072 = vmatprep.subr.mxu0 0.0
        %v2073 = vand.u32 %v418, 4294901760
        %2074 = vmatpush1.msra.mxu0 %v2073
        %2075 = vmatprep.subr.mxu0 0.0
        %v2076 = vand.u32 %v419, 4294901760
        %2077 = vmatpush1.msra.mxu0 %v2076
        %2078 = vmatprep.subr.mxu0 0.0
        %v2079 = vand.u32 %v420, 4294901760
        %2080 = vmatpush1.msra.mxu0 %v2079
        %2081 = vmatprep.subr.mxu0 0.0
        %v2082 = vand.u32 %v421, 4294901760
        %2083 = vmatpush1.msra.mxu0 %v2082
        %2084 = vmatprep.subr.mxu0 0.0
        %v2085 = vand.u32 %v422, 4294901760
        %2086 = vmatpush1.msra.mxu0 %v2085
        %2087 = vmatprep.subr.mxu0 0.0
        %v2088 = vand.u32 %v423, 4294901760
        %2089 = vmatpush1.msra.mxu0 %v2088
        %2090 = vmatprep.subr.mxu0 0.0
        %v2091 = vand.u32 %v424, 4294901760
        %2092 = vmatpush1.msra.mxu0 %v2091
        %2093 = vmatprep.subr.mxu0 0.0
        %v2094 = vand.u32 %v425, 4294901760
        %2095 = vmatpush1.msra.mxu0 %v2094
        %2096 = vmatprep.subr.mxu0 0.0
        %v2097 = vand.u32 %v426, 4294901760
        %2098 = vmatpush1.msra.mxu0 %v2097
        %2099 = vmatprep.subr.mxu0 0.0
        %v2100 = vand.u32 %v427, 4294901760
        %2101 = vmatpush1.msra.mxu0 %v2100
        %2102 = vmatprep.subr.mxu0 0.0
        %v2103 = vand.u32 %v428, 4294901760
        %2104 = vmatpush1.msra.mxu0 %v2103
        %2105 = vmatprep.subr.mxu0 0.0
        %v2106 = vand.u32 %v429, 4294901760
        %2107 = vmatpush1.msra.mxu0 %v2106
        %2108 = vmatprep.subr.mxu0 0.0
        %v2109 = vand.u32 %v430, 4294901760
        %2110 = vmatpush1.msra.mxu0 %v2109
        %2111 = vmatprep.subr.mxu0 0.0
        %v2112 = vand.u32 %v431, 4294901760
        %2113 = vmatpush1.msra.mxu0 %v2112
        %2114 = vmatprep.subr.mxu0 0.0
        %v2115 = vand.u32 %v432, 4294901760
        %2116 = vmatpush1.msra.mxu0 %v2115
        %2117 = vmatprep.subr.mxu0 0.0
        %v2118 = vand.u32 %v447, 4294901760
        %2119 = vmatpush1.msra.mxu0 %v2118
        %2120 = vmatprep.subr.mxu0 0.0
        %2121 = vmatpush1.msra.mxu0 0.0
        %2122 = vmatprep.subr.mxu0 0.0
        %2123 = vmatpush1.msra.mxu0 0.0
        %2124 = vmatprep.subr.mxu0 0.0
        %2125 = vmatpush1.msra.mxu0 0.0
        %v2126 = vand.u32 %v443, 4294901760
        %2127 = vmatprep.mubr.f32.mxu0 %v2126
        %v2128 = vand.u32 %v371, 4294901760
        %2129 = vmatmul.mubr.f32.gmra.mrb[0].mxu0 %v2128
        %v2130 = vpop.f32.mrb[0].mxu0
        %v2131 = vadd.f32 %v2030, %v2130
        %v2132 = vpop.f32.mrb[0].mxu0
        %2133 = vdwg.mxu0
        %v2134 = vmax.f32 %v2131, 0.0
        %v2135 = vld [vmem:[%s4] sm:$0x1]
        %v2136 = vld [vmem:[%s3] sm:$0x1]
        %2138 = vset.pattern.permute.xlu0 0
        %2139 = vperm.xlu0 %2138, %v2134
        %v2140 = vpop.permute.xlu0 %2139
        %v2142 = vlaneseq
        %v2143 = vshrl.u32 %v2142, 7
        %v2144 = vsub.s32 0, %v2143
        %v2145 = vrot.slane %v2136, %v2144
        %v2146 = vmul.f32 %v2140, %v2145
        %v2148 = vlaneseq
        %v2149 = vshrl.u32 %v2148, 7
        %v2150 = vsub.s32 0, %v2149
        %v2151 = vrot.slane %v2135, %v2150
        %v2153 = vadd.f32 %v2151, %v2146
        %v2154 = vld [vmem:[%s3 + $0x1] sm:$0x1]
        %2155 = vset.pattern.permute.xlu0 1
        %2156 = vperm.xlu0 %2155, %v2134
        %v2157 = vpop.permute.xlu0 %2156
        %v2159 = vlaneseq
        %v2160 = vshrl.u32 %v2159, 7
        %v2161 = vsub.s32 0, %v2160
        %v2162 = vrot.slane %v2154, %v2161
        %v2163 = vmul.f32 %v2157, %v2162
        %v2164 = vadd.f32 %v2153, %v2163
        %v2165 = vld [vmem:[%s3 + $0x2] sm:$0x1]
        %2166 = vset.pattern.permute.xlu0 2
        %2167 = vperm.xlu0 %2166, %v2134
        %v2168 = vpop.permute.xlu0 %2167
        %v2170 = vlaneseq
        %v2171 = vshrl.u32 %v2170, 7
        %v2172 = vsub.s32 0, %v2171
        %v2173 = vrot.slane %v2165, %v2172
        %v2174 = vmul.f32 %v2168, %v2173
        %v2175 = vadd.f32 %v2164, %v2174
        %v2176 = vld [vmem:[%s3 + $0x3] sm:$0x1]
        %2177 = vset.pattern.permute.xlu0 3
        %2178 = vperm.xlu0 %2177, %v2134
        %v2179 = vpop.permute.xlu0 %2178
        %v2181 = vlaneseq
        %v2182 = vshrl.u32 %v2181, 7
        %v2183 = vsub.s32 0, %v2182
        %v2184 = vrot.slane %v2176, %v2183
        %v2185 = vmul.f32 %v2179, %v2184
        %v2186 = vadd.f32 %v2175, %v2185
        %v2187 = vld [vmem:[%s3 + $0x4] sm:$0x1]
        %2188 = vset.pattern.permute.xlu0 4
        %2189 = vperm.xlu0 %2188, %v2134
        %v2190 = vpop.permute.xlu0 %2189
        %v2192 = vlaneseq
        %v2193 = vshrl.u32 %v2192, 7
        %v2194 = vsub.s32 0, %v2193
        %v2195 = vrot.slane %v2187, %v2194
        %v2196 = vmul.f32 %v2190, %v2195
        %v2197 = vadd.f32 %v2186, %v2196
        %v2198 = vld [vmem:[%s3 + $0x5] sm:$0x1]
        %2199 = vset.pattern.permute.xlu0 5
        %2200 = vperm.xlu0 %2199, %v2134
        %v2201 = vpop.permute.xlu0 %2200
        %v2203 = vlaneseq
        %v2204 = vshrl.u32 %v2203, 7
        %v2205 = vsub.s32 0, %v2204
        %v2206 = vrot.slane %v2198, %v2205
        %v2207 = vmul.f32 %v2201, %v2206
        %v2208 = vadd.f32 %v2197, %v2207
        %v2209 = vld [vmem:[%s3 + $0x6] sm:$0x1]
        %2210 = vset.pattern.permute.xlu0 6
        %2211 = vperm.xlu0 %2210, %v2134
        %v2212 = vpop.permute.xlu0 %2211
        %v2214 = vlaneseq
        %v2215 = vshrl.u32 %v2214, 7
        %v2216 = vsub.s32 0, %v2215
        %v2217 = vrot.slane %v2209, %v2216
        %v2218 = vmul.f32 %v2212, %v2217
        %v2219 = vadd.f32 %v2208, %v2218
        %v2220 = vld [vmem:[%s3 + $0x7] sm:$0x1]
        %2221 = vset.pattern.permute.xlu0 7
        %2222 = vperm.xlu0 %2221, %v2134
        %v2223 = vpop.permute.xlu0 %2222
        %v2225 = vlaneseq
        %v2226 = vshrl.u32 %v2225, 7
        %v2227 = vsub.s32 0, %v2226
        %v2228 = vrot.slane %v2220, %v2227
        %v2229 = vmul.f32 %v2223, %v2228
        %v2230 = vadd.f32 %v2219, %v2229
        %v2231 = vld [vmem:[%s6] sm:$0x1]
        %v2232 = vld [vmem:[%s5] sm:$0x1]
        %2234 = vset.pattern.permute.xlu0 0
        %2235 = vperm.xlu0 %2234, %v2230
        %v2236 = vpop.permute.xlu0 %2235
        %v2238 = vlaneseq
        %v2239 = vshrl.u32 %v2238, 7
        %v2240 = vsub.s32 0, %v2239
        %v2241 = vrot.slane %v2232, %v2240
        %v2242 = vmul.f32 %v2236, %v2241
        %v2244 = vlaneseq
        %v2245 = vshrl.u32 %v2244, 7
        %v2246 = vsub.s32 0, %v2245
        %v2247 = vrot.slane %v2231, %v2246
        %v2249 = vadd.f32 %v2247, %v2242
        %v2250 = vld [vmem:[%s5 + $0x1] sm:$0x1]
        %2251 = vset.pattern.permute.xlu0 1
        %2252 = vperm.xlu0 %2251, %v2230
        %v2253 = vpop.permute.xlu0 %2252
        %v2255 = vlaneseq
        %v2256 = vshrl.u32 %v2255, 7
        %v2257 = vsub.s32 0, %v2256
        %v2258 = vrot.slane %v2250, %v2257
        %v2259 = vmul.f32 %v2253, %v2258
        %v2260 = vadd.f32 %v2249, %v2259
        %v2261 = vmax.f32 %v2260, 0.0
        %v2262 = vld [vmem:[%s7] sm:$0xff]
        %v2263 = vld [vmem:[%s7 + $0x8] sm:$0xff]
        %v2264 = vld [vmem:[%s7 + $0x10] sm:$0xff]
        %v2265 = vld [vmem:[%s7 + $0x18] sm:$0xff]
        %v2266 = vld [vmem:[%s8] sm:$0xf]
        %v2268 = vlaneseq
        %v2269 = vshrl.u32 %v2268, 7
        %v2270 = vsub.s32 0, %v2269
        %v2271 = vrot.slane %v2266, %v2270
        %v2272 = vlaneseq
        %v2273 = vshrl.u32 %v2272, 7
        %v2274 = vsub.s32 1, %v2273
        %v2275 = vrot.slane %v2266, %v2274
        %v2276 = vlaneseq
        %v2277 = vshrl.u32 %v2276, 7
        %v2278 = vsub.s32 2, %v2277
        %v2279 = vrot.slane %v2266, %v2278
        %v2280 = vlaneseq
        %v2281 = vshrl.u32 %v2280, 7
        %v2282 = vsub.s32 3, %v2281
        %v2283 = vrot.slane %v2266, %v2282
        %vm2288 = vcmask 64512
        %v2290 = vsel %vm2288, %v2261, 0
        %v2292 = vand.u32 %v2263, 4294901760
        %2293 = vmatprep.subr.mxu0 %v2292
        %v2294 = vand.u32 %v2262, 4294901760
        %2295 = vmatpush1.msra.mxu0 %v2294
        %2296 = vmatprep.subr.mxu0 0.0
        %2297 = vmatpush1.msra.mxu0 0.0
        %2298 = vmatprep.subr.mxu0 0.0
        %2299 = vmatpush1.msra.mxu0 0.0
        %2300 = vmatprep.subr.mxu0 0.0
        %2301 = vmatpush1.msra.mxu0 0.0
        %2302 = vmatprep.subr.mxu0 0.0
        %2303 = vmatpush1.msra.mxu0 0.0
        %2304 = vmatprep.subr.mxu0 0.0
        %2305 = vmatpush1.msra.mxu0 0.0
        %2306 = vmatprep.subr.mxu0 0.0
        %2307 = vmatpush1.msra.mxu0 0.0
        %2308 = vmatprep.subr.mxu0 0.0
        %2309 = vmatpush1.msra.mxu0 0.0
        %2310 = vmatprep.subr.mxu0 0.0
        %2311 = vmatpush1.msra.mxu0 0.0
        %2312 = vmatprep.subr.mxu0 0.0
        %2313 = vmatpush1.msra.mxu0 0.0
        %2314 = vmatprep.subr.mxu0 0.0
        %2315 = vmatpush1.msra.mxu0 0.0
        %2316 = vmatprep.subr.mxu0 0.0
        %2317 = vmatpush1.msra.mxu0 0.0
        %2318 = vmatprep.subr.mxu0 0.0
        %2319 = vmatpush1.msra.mxu0 0.0
        %2320 = vmatprep.subr.mxu0 0.0
        %2321 = vmatpush1.msra.mxu0 0.0
        %2322 = vmatprep.subr.mxu0 0.0
        %2323 = vmatpush1.msra.mxu0 0.0
        %2324 = vmatprep.subr.mxu0 0.0
        %2325 = vmatpush1.msra.mxu0 0.0
        %2326 = vmatprep.subr.mxu0 0.0
        %2327 = vmatpush1.msra.mxu0 0.0
        %2328 = vmatprep.subr.mxu0 0.0
        %2329 = vmatpush1.msra.mxu0 0.0
        %2330 = vmatprep.subr.mxu0 0.0
        %2331 = vmatpush1.msra.mxu0 0.0
        %2332 = vmatprep.subr.mxu0 0.0
        %2333 = vmatpush1.msra.mxu0 0.0
        %2334 = vmatprep.subr.mxu0 0.0
        %2335 = vmatpush1.msra.mxu0 0.0
        %2336 = vmatprep.subr.mxu0 0.0
        %2337 = vmatpush1.msra.mxu0 0.0
        %2338 = vmatprep.subr.mxu0 0.0
        %2339 = vmatpush1.msra.mxu0 0.0
        %2340 = vmatprep.subr.mxu0 0.0
        %2341 = vmatpush1.msra.mxu0 0.0
        %2342 = vmatprep.subr.mxu0 0.0
        %2343 = vmatpush1.msra.mxu0 0.0
        %2344 = vmatprep.subr.mxu0 0.0
        %2345 = vmatpush1.msra.mxu0 0.0
        %2346 = vmatprep.subr.mxu0 0.0
        %2347 = vmatpush1.msra.mxu0 0.0
        %2348 = vmatprep.subr.mxu0 0.0
        %2349 = vmatpush1.msra.mxu0 0.0
        %2350 = vmatprep.subr.mxu0 0.0
        %2351 = vmatpush1.msra.mxu0 0.0
        %2352 = vmatprep.subr.mxu0 0.0
        %2353 = vmatpush1.msra.mxu0 0.0
        %2354 = vmatprep.subr.mxu0 0.0
        %2355 = vmatpush1.msra.mxu0 0.0
        %2356 = vmatprep.subr.mxu0 0.0
        %2357 = vmatpush1.msra.mxu0 0.0
        %2358 = vmatprep.mubr.f32.mxu0 0.0
        %v2359 = vand.u32 %v2290, 4294901760
        %v2360 = vsub.f32 %v2290, %v2359
        %v2361 = vand.u32 %v2360, 4294901760
        %v2362 = vsub.f32 %v2360, %v2361
        %v2363 = vand.u32 %v2362, 4294901760
        %2364 = vmatmul.mubr.f32.gmra.mrb[0].mxu0 %v2363
        %v2365 = vpop.f32.mrb[0].mxu0
        %v2366 = vadd.f32 %v2271, %v2365
        %v2367 = vpop.f32.mrb[0].mxu0
        %v2368 = vadd.f32 %v2275, %v2367
        %2369 = vdwg.mxu0
        %v2370 = vand.u32 %v2263, 4294901760
        %v2371 = vsub.f32 %v2263, %v2370
        %v2372 = vand.u32 %v2371, 4294901760
        %v2373 = vsub.f32 %v2371, %v2372
        %v2374 = vand.u32 %v2373, 4294901760
        %2375 = vmatprep.subr.mxu0 %v2374
        %v2376 = vand.u32 %v2262, 4294901760
        %v2377 = vsub.f32 %v2262, %v2376
        %v2378 = vand.u32 %v2377, 4294901760
        %v2379 = vsub.f32 %v2377, %v2378
        %v2380 = vand.u32 %v2379, 4294901760
        %2381 = vmatpush1.msra.mxu0 %v2380
        %2382 = vmatprep.subr.mxu0 0.0
        %2383 = vmatpush1.msra.mxu0 0.0
        %2384 = vmatprep.subr.mxu0 0.0
        %2385 = vmatpush1.msra.mxu0 0.0
        %2386 = vmatprep.subr.mxu0 0.0
        %2387 = vmatpush1.msra.mxu0 0.0
        %2388 = vmatprep.subr.mxu0 0.0
        %2389 = vmatpush1.msra.mxu0 0.0
        %2390 = vmatprep.subr.mxu0 0.0
        %2391 = vmatpush1.msra.mxu0 0.0
        %2392 = vmatprep.subr.mxu0 0.0
        %2393 = vmatpush1.msra.mxu0 0.0
        %2394 = vmatprep.subr.mxu0 0.0
        %2395 = vmatpush1.msra.mxu0 0.0
        %2396 = vmatprep.subr.mxu0 0.0
        %2397 = vmatpush1.msra.mxu0 0.0
        %2398 = vmatprep.subr.mxu0 0.0
        %2399 = vmatpush1.msra.mxu0 0.0
        %2400 = vmatprep.subr.mxu0 0.0
        %2401 = vmatpush1.msra.mxu0 0.0
        %2402 = vmatprep.subr.mxu0 0.0
        %2403 = vmatpush1.msra.mxu0 0.0
        %2404 = vmatprep.subr.mxu0 0.0
        %2405 = vmatpush1.msra.mxu0 0.0
        %2406 = vmatprep.subr.mxu0 0.0
        %2407 = vmatpush1.msra.mxu0 0.0
        %2408 = vmatprep.subr.mxu0 0.0
        %2409 = vmatpush1.msra.mxu0 0.0
        %2410 = vmatprep.subr.mxu0 0.0
        %2411 = vmatpush1.msra.mxu0 0.0
        %2412 = vmatprep.subr.mxu0 0.0
        %2413 = vmatpush1.msra.mxu0 0.0
        %2414 = vmatprep.subr.mxu0 0.0
        %2415 = vmatpush1.msra.mxu0 0.0
        %2416 = vmatprep.subr.mxu0 0.0
        %2417 = vmatpush1.msra.mxu0 0.0
        %2418 = vmatprep.subr.mxu0 0.0
        %2419 = vmatpush1.msra.mxu0 0.0
        %2420 = vmatprep.subr.mxu0 0.0
        %2421 = vmatpush1.msra.mxu0 0.0
        %2422 = vmatprep.subr.mxu0 0.0
        %2423 = vmatpush1.msra.mxu0 0.0
        %2424 = vmatprep.subr.mxu0 0.0
        %2425 = vmatpush1.msra.mxu0 0.0
        %2426 = vmatprep.subr.mxu0 0.0
        %2427 = vmatpush1.msra.mxu0 0.0
        %2428 = vmatprep.subr.mxu0 0.0
        %2429 = vmatpush1.msra.mxu0 0.0
        %2430 = vmatprep.subr.mxu0 0.0
        %2431 = vmatpush1.msra.mxu0 0.0
        %2432 = vmatprep.subr.mxu0 0.0
        %2433 = vmatpush1.msra.mxu0 0.0
        %2434 = vmatprep.subr.mxu0 0.0
        %2435 = vmatpush1.msra.mxu0 0.0
        %2436 = vmatprep.subr.mxu0 0.0
        %2437 = vmatpush1.msra.mxu0 0.0
        %2438 = vmatprep.subr.mxu0 0.0
        %2439 = vmatpush1.msra.mxu0 0.0
        %2440 = vmatprep.subr.mxu0 0.0
        %2441 = vmatpush1.msra.mxu0 0.0
        %2442 = vmatprep.subr.mxu0 0.0
        %2443 = vmatpush1.msra.mxu0 0.0
        %2444 = vmatprep.mubr.f32.mxu0 0.0
        %v2445 = vand.u32 %v2290, 4294901760
        %2446 = vmatmul.mubr.f32.gmra.mrb[0].mxu0 %v2445
        %v2447 = vpop.f32.mrb[0].mxu0
        %v2448 = vadd.f32 %v2366, %v2447
        %v2449 = vpop.f32.mrb[0].mxu0
        %v2450 = vadd.f32 %v2368, %v2449
        %2451 = vdwg.mxu0
        %v2452 = vand.u32 %v2263, 4294901760
        %v2453 = vsub.f32 %v2263, %v2452
        %2454 = vmatprep.subr.mxu0 %v2453
        %v2455 = vand.u32 %v2262, 4294901760
        %v2456 = vsub.f32 %v2262, %v2455
        %2457 = vmatpush1.msra.mxu0 %v2456
        %2458 = vmatprep.subr.mxu0 0.0
        %2459 = vmatpush1.msra.mxu0 0.0
        %2460 = vmatprep.subr.mxu0 0.0
        %2461 = vmatpush1.msra.mxu0 0.0
        %2462 = vmatprep.subr.mxu0 0.0
        %2463 = vmatpush1.msra.mxu0 0.0
        %2464 = vmatprep.subr.mxu0 0.0
        %2465 = vmatpush1.msra.mxu0 0.0
        %2466 = vmatprep.subr.mxu0 0.0
        %2467 = vmatpush1.msra.mxu0 0.0
        %2468 = vmatprep.subr.mxu0 0.0
        %2469 = vmatpush1.msra.mxu0 0.0
        %2470 = vmatprep.subr.mxu0 0.0
        %2471 = vmatpush1.msra.mxu0 0.0
        %2472 = vmatprep.subr.mxu0 0.0
        %2473 = vmatpush1.msra.mxu0 0.0
        %2474 = vmatprep.subr.mxu0 0.0
        %2475 = vmatpush1.msra.mxu0 0.0
        %2476 = vmatprep.subr.mxu0 0.0
        %2477 = vmatpush1.msra.mxu0 0.0
        %2478 = vmatprep.subr.mxu0 0.0
        %2479 = vmatpush1.msra.mxu0 0.0
        %2480 = vmatprep.subr.mxu0 0.0
        %2481 = vmatpush1.msra.mxu0 0.0
        %2482 = vmatprep.subr.mxu0 0.0
        %2483 = vmatpush1.msra.mxu0 0.0
        %2484 = vmatprep.subr.mxu0 0.0
        %2485 = vmatpush1.msra.mxu0 0.0
        %2486 = vmatprep.subr.mxu0 0.0
        %2487 = vmatpush1.msra.mxu0 0.0
        %2488 = vmatprep.subr.mxu0 0.0
        %2489 = vmatpush1.msra.mxu0 0.0
        %2490 = vmatprep.subr.mxu0 0.0
        %2491 = vmatpush1.msra.mxu0 0.0
        %2492 = vmatprep.subr.mxu0 0.0
        %2493 = vmatpush1.msra.mxu0 0.0
        %2494 = vmatprep.subr.mxu0 0.0
        %2495 = vmatpush1.msra.mxu0 0.0
        %2496 = vmatprep.subr.mxu0 0.0
        %2497 = vmatpush1.msra.mxu0 0.0
        %2498 = vmatprep.subr.mxu0 0.0
        %2499 = vmatpush1.msra.mxu0 0.0
        %2500 = vmatprep.subr.mxu0 0.0
        %2501 = vmatpush1.msra.mxu0 0.0
        %2502 = vmatprep.subr.mxu0 0.0
        %2503 = vmatpush1.msra.mxu0 0.0
        %2504 = vmatprep.subr.mxu0 0.0
        %2505 = vmatpush1.msra.mxu0 0.0
        %2506 = vmatprep.subr.mxu0 0.0
        %2507 = vmatpush1.msra.mxu0 0.0
        %2508 = vmatprep.subr.mxu0 0.0
        %2509 = vmatpush1.msra.mxu0 0.0
        %2510 = vmatprep.subr.mxu0 0.0
        %2511 = vmatpush1.msra.mxu0 0.0
        %2512 = vmatprep.subr.mxu0 0.0
        %2513 = vmatpush1.msra.mxu0 0.0
        %2514 = vmatprep.subr.mxu0 0.0
        %2515 = vmatpush1.msra.mxu0 0.0
        %2516 = vmatprep.subr.mxu0 0.0
        %2517 = vmatpush1.msra.mxu0 0.0
        %2518 = vmatprep.subr.mxu0 0.0
        %2519 = vmatpush1.msra.mxu0 0.0
        %2520 = vmatprep.mubr.f32.mxu0 0.0
        %v2521 = vand.u32 %v2290, 4294901760
        %v2522 = vsub.f32 %v2290, %v2521
        %2523 = vmatmul.mubr.f32.gmra.mrb[0].mxu0 %v2522
        %v2524 = vpop.f32.mrb[0].mxu0
        %v2525 = vadd.f32 %v2448, %v2524
        %v2526 = vpop.f32.mrb[0].mxu0
        %v2527 = vadd.f32 %v2450, %v2526
        %2528 = vdwg.mxu0
        %v2529 = vand.u32 %v2263, 4294901760
        %2530 = vmatprep.subr.mxu0 %v2529
        %v2531 = vand.u32 %v2262, 4294901760
        %2532 = vmatpush1.msra.mxu0 %v2531
        %2533 = vmatprep.subr.mxu0 0.0
        %2534 = vmatpush1.msra.mxu0 0.0
        %2535 = vmatprep.subr.mxu0 0.0
        %2536 = vmatpush1.msra.mxu0 0.0
        %2537 = vmatprep.subr.mxu0 0.0
        %2538 = vmatpush1.msra.mxu0 0.0
        %2539 = vmatprep.subr.mxu0 0.0
        %2540 = vmatpush1.msra.mxu0 0.0
        %2541 = vmatprep.subr.mxu0 0.0
        %2542 = vmatpush1.msra.mxu0 0.0
        %2543 = vmatprep.subr.mxu0 0.0
        %2544 = vmatpush1.msra.mxu0 0.0
        %2545 = vmatprep.subr.mxu0 0.0
        %2546 = vmatpush1.msra.mxu0 0.0
        %2547 = vmatprep.subr.mxu0 0.0
        %2548 = vmatpush1.msra.mxu0 0.0
        %2549 = vmatprep.subr.mxu0 0.0
        %2550 = vmatpush1.msra.mxu0 0.0
        %2551 = vmatprep.subr.mxu0 0.0
        %2552 = vmatpush1.msra.mxu0 0.0
        %2553 = vmatprep.subr.mxu0 0.0
        %2554 = vmatpush1.msra.mxu0 0.0
        %2555 = vmatprep.subr.mxu0 0.0
        %2556 = vmatpush1.msra.mxu0 0.0
        %2557 = vmatprep.subr.mxu0 0.0
        %2558 = vmatpush1.msra.mxu0 0.0
        %2559 = vmatprep.subr.mxu0 0.0
        %2560 = vmatpush1.msra.mxu0 0.0
        %2561 = vmatprep.subr.mxu0 0.0
        %2562 = vmatpush1.msra.mxu0 0.0
        %2563 = vmatprep.subr.mxu0 0.0
        %2564 = vmatpush1.msra.mxu0 0.0
        %2565 = vmatprep.subr.mxu0 0.0
        %2566 = vmatpush1.msra.mxu0 0.0
        %2567 = vmatprep.subr.mxu0 0.0
        %2568 = vmatpush1.msra.mxu0 0.0
        %2569 = vmatprep.subr.mxu0 0.0
        %2570 = vmatpush1.msra.mxu0 0.0
        %2571 = vmatprep.subr.mxu0 0.0
        %2572 = vmatpush1.msra.mxu0 0.0
        %2573 = vmatprep.subr.mxu0 0.0
        %2574 = vmatpush1.msra.mxu0 0.0
        %2575 = vmatprep.subr.mxu0 0.0
        %2576 = vmatpush1.msra.mxu0 0.0
        %2577 = vmatprep.subr.mxu0 0.0
        %2578 = vmatpush1.msra.mxu0 0.0
        %2579 = vmatprep.subr.mxu0 0.0
        %2580 = vmatpush1.msra.mxu0 0.0
        %2581 = vmatprep.subr.mxu0 0.0
        %2582 = vmatpush1.msra.mxu0 0.0
        %2583 = vmatprep.subr.mxu0 0.0
        %2584 = vmatpush1.msra.mxu0 0.0
        %2585 = vmatprep.subr.mxu0 0.0
        %2586 = vmatpush1.msra.mxu0 0.0
        %2587 = vmatprep.subr.mxu0 0.0
        %2588 = vmatpush1.msra.mxu0 0.0
        %2589 = vmatprep.subr.mxu0 0.0
        %2590 = vmatpush1.msra.mxu0 0.0
        %2591 = vmatprep.subr.mxu0 0.0
        %2592 = vmatpush1.msra.mxu0 0.0
        %2593 = vmatprep.subr.mxu0 0.0
        %2594 = vmatpush1.msra.mxu0 0.0
        %2595 = vmatprep.mubr.f32.mxu0 0.0
        %v2596 = vand.u32 %v2290, 4294901760
        %v2597 = vsub.f32 %v2290, %v2596
        %v2598 = vand.u32 %v2597, 4294901760
        %2599 = vmatmul.mubr.f32.gmra.mrb[0].mxu0 %v2598
        %v2600 = vpop.f32.mrb[0].mxu0
        %v2601 = vadd.f32 %v2525, %v2600
        %v2602 = vpop.f32.mrb[0].mxu0
        %v2603 = vadd.f32 %v2527, %v2602
        %2604 = vdwg.mxu0
        %v2605 = vand.u32 %v2263, 4294901760
        %v2606 = vsub.f32 %v2263, %v2605
        %v2607 = vand.u32 %v2606, 4294901760
        %2608 = vmatprep.subr.mxu0 %v2607
        %v2609 = vand.u32 %v2262, 4294901760
        %v2610 = vsub.f32 %v2262, %v2609
        %v2611 = vand.u32 %v2610, 4294901760
        %2612 = vmatpush1.msra.mxu0 %v2611
        %2613 = vmatprep.subr.mxu0 0.0
        %2614 = vmatpush1.msra.mxu0 0.0
        %2615 = vmatprep.subr.mxu0 0.0
        %2616 = vmatpush1.msra.mxu0 0.0
        %2617 = vmatprep.subr.mxu0 0.0
        %2618 = vmatpush1.msra.mxu0 0.0
        %2619 = vmatprep.subr.mxu0 0.0
        %2620 = vmatpush1.msra.mxu0 0.0
        %2621 = vmatprep.subr.mxu0 0.0
        %2622 = vmatpush1.msra.mxu0 0.0
        %2623 = vmatprep.subr.mxu0 0.0
        %2624 = vmatpush1.msra.mxu0 0.0
        %2625 = vmatprep.subr.mxu0 0.0
        %2626 = vmatpush1.msra.mxu0 0.0
        %2627 = vmatprep.subr.mxu0 0.0
        %2628 = vmatpush1.msra.mxu0 0.0
        %2629 = vmatprep.subr.mxu0 0.0
        %2630 = vmatpush1.msra.mxu0 0.0
        %2631 = vmatprep.subr.mxu0 0.0
        %2632 = vmatpush1.msra.mxu0 0.0
        %2633 = vmatprep.subr.mxu0 0.0
        %2634 = vmatpush1.msra.mxu0 0.0
        %2635 = vmatprep.subr.mxu0 0.0
        %2636 = vmatpush1.msra.mxu0 0.0
        %2637 = vmatprep.subr.mxu0 0.0
        %2638 = vmatpush1.msra.mxu0 0.0
        %2639 = vmatprep.subr.mxu0 0.0
        %2640 = vmatpush1.msra.mxu0 0.0
        %2641 = vmatprep.subr.mxu0 0.0
        %2642 = vmatpush1.msra.mxu0 0.0
        %2643 = vmatprep.subr.mxu0 0.0
        %2644 = vmatpush1.msra.mxu0 0.0
        %2645 = vmatprep.subr.mxu0 0.0
        %2646 = vmatpush1.msra.mxu0 0.0
        %2647 = vmatprep.subr.mxu0 0.0
        %2648 = vmatpush1.msra.mxu0 0.0
        %2649 = vmatprep.subr.mxu0 0.0
        %2650 = vmatpush1.msra.mxu0 0.0
        %2651 = vmatprep.subr.mxu0 0.0
        %2652 = vmatpush1.msra.mxu0 0.0
        %2653 = vmatprep.subr.mxu0 0.0
        %2654 = vmatpush1.msra.mxu0 0.0
        %2655 = vmatprep.subr.mxu0 0.0
        %2656 = vmatpush1.msra.mxu0 0.0
        %2657 = vmatprep.subr.mxu0 0.0
        %2658 = vmatpush1.msra.mxu0 0.0
        %2659 = vmatprep.subr.mxu0 0.0
        %2660 = vmatpush1.msra.mxu0 0.0
        %2661 = vmatprep.subr.mxu0 0.0
        %2662 = vmatpush1.msra.mxu0 0.0
        %2663 = vmatprep.subr.mxu0 0.0
        %2664 = vmatpush1.msra.mxu0 0.0
        %2665 = vmatprep.subr.mxu0 0.0
        %2666 = vmatpush1.msra.mxu0 0.0
        %2667 = vmatprep.subr.mxu0 0.0
        %2668 = vmatpush1.msra.mxu0 0.0
        %2669 = vmatprep.subr.mxu0 0.0
        %2670 = vmatpush1.msra.mxu0 0.0
        %2671 = vmatprep.subr.mxu0 0.0
        %2672 = vmatpush1.msra.mxu0 0.0
        %2673 = vmatprep.subr.mxu0 0.0
        %2674 = vmatpush1.msra.mxu0 0.0
        %2675 = vmatprep.mubr.f32.mxu0 0.0
        %v2676 = vand.u32 %v2290, 4294901760
        %2677 = vmatmul.mubr.f32.gmra.mrb[0].mxu0 %v2676
        %v2678 = vpop.f32.mrb[0].mxu0
        %v2679 = vadd.f32 %v2601, %v2678
        %v2680 = vpop.f32.mrb[0].mxu0
        %v2681 = vadd.f32 %v2603, %v2680
        %2682 = vdwg.mxu0
        %v2683 = vand.u32 %v2263, 4294901760
        %2684 = vmatprep.subr.mxu0 %v2683
        %v2685 = vand.u32 %v2262, 4294901760
        %2686 = vmatpush1.msra.mxu0 %v2685
        %2687 = vmatprep.subr.mxu0 0.0
        %2688 = vmatpush1.msra.mxu0 0.0
        %2689 = vmatprep.subr.mxu0 0.0
        %2690 = vmatpush1.msra.mxu0 0.0
        %2691 = vmatprep.subr.mxu0 0.0
        %2692 = vmatpush1.msra.mxu0 0.0
        %2693 = vmatprep.subr.mxu0 0.0
        %2694 = vmatpush1.msra.mxu0 0.0
        %2695 = vmatprep.subr.mxu0 0.0
        %2696 = vmatpush1.msra.mxu0 0.0
        %2697 = vmatprep.subr.mxu0 0.0
        %2698 = vmatpush1.msra.mxu0 0.0
        %2699 = vmatprep.subr.mxu0 0.0
        %2700 = vmatpush1.msra.mxu0 0.0
        %2701 = vmatprep.subr.mxu0 0.0
        %2702 = vmatpush1.msra.mxu0 0.0
        %2703 = vmatprep.subr.mxu0 0.0
        %2704 = vmatpush1.msra.mxu0 0.0
        %2705 = vmatprep.subr.mxu0 0.0
        %2706 = vmatpush1.msra.mxu0 0.0
        %2707 = vmatprep.subr.mxu0 0.0
        %2708 = vmatpush1.msra.mxu0 0.0
        %2709 = vmatprep.subr.mxu0 0.0
        %2710 = vmatpush1.msra.mxu0 0.0
        %2711 = vmatprep.subr.mxu0 0.0
        %2712 = vmatpush1.msra.mxu0 0.0
        %2713 = vmatprep.subr.mxu0 0.0
        %2714 = vmatpush1.msra.mxu0 0.0
        %2715 = vmatprep.subr.mxu0 0.0
        %2716 = vmatpush1.msra.mxu0 0.0
        %2717 = vmatprep.subr.mxu0 0.0
        %2718 = vmatpush1.msra.mxu0 0.0
        %2719 = vmatprep.subr.mxu0 0.0
        %2720 = vmatpush1.msra.mxu0 0.0
        %2721 = vmatprep.subr.mxu0 0.0
        %2722 = vmatpush1.msra.mxu0 0.0
        %2723 = vmatprep.subr.mxu0 0.0
        %2724 = vmatpush1.msra.mxu0 0.0
        %2725 = vmatprep.subr.mxu0 0.0
        %2726 = vmatpush1.msra.mxu0 0.0
        %2727 = vmatprep.subr.mxu0 0.0
        %2728 = vmatpush1.msra.mxu0 0.0
        %2729 = vmatprep.subr.mxu0 0.0
        %2730 = vmatpush1.msra.mxu0 0.0
        %2731 = vmatprep.subr.mxu0 0.0
        %2732 = vmatpush1.msra.mxu0 0.0
        %2733 = vmatprep.subr.mxu0 0.0
        %2734 = vmatpush1.msra.mxu0 0.0
        %2735 = vmatprep.subr.mxu0 0.0
        %2736 = vmatpush1.msra.mxu0 0.0
        %2737 = vmatprep.subr.mxu0 0.0
        %2738 = vmatpush1.msra.mxu0 0.0
        %2739 = vmatprep.subr.mxu0 0.0
        %2740 = vmatpush1.msra.mxu0 0.0
        %2741 = vmatprep.subr.mxu0 0.0
        %2742 = vmatpush1.msra.mxu0 0.0
        %2743 = vmatprep.subr.mxu0 0.0
        %2744 = vmatpush1.msra.mxu0 0.0
        %2745 = vmatprep.subr.mxu0 0.0
        %2746 = vmatpush1.msra.mxu0 0.0
        %2747 = vmatprep.subr.mxu0 0.0
        %2748 = vmatpush1.msra.mxu0 0.0
        %2749 = vmatprep.mubr.f32.mxu0 0.0
        %v2750 = vand.u32 %v2290, 4294901760
        %2751 = vmatmul.mubr.f32.gmra.mrb[0].mxu0 %v2750
        %v2752 = vpop.f32.mrb[0].mxu0
        %v2753 = vadd.f32 %v2679, %v2752
        %v2754 = vpop.f32.mrb[0].mxu0
        %v2755 = vadd.f32 %v2681, %v2754
        %2756 = vdwg.mxu0
        %v2757 = vand.u32 %v2265, 4294901760
        %2758 = vmatprep.subr.mxu0 %v2757
        %v2759 = vand.u32 %v2264, 4294901760
        %2760 = vmatpush1.msra.mxu0 %v2759
        %2761 = vmatprep.subr.mxu0 0.0
        %2762 = vmatpush1.msra.mxu0 0.0
        %2763 = vmatprep.subr.mxu0 0.0
        %2764 = vmatpush1.msra.mxu0 0.0
        %2765 = vmatprep.subr.mxu0 0.0
        %2766 = vmatpush1.msra.mxu0 0.0
        %2767 = vmatprep.subr.mxu0 0.0
        %2768 = vmatpush1.msra.mxu0 0.0
        %2769 = vmatprep.subr.mxu0 0.0
        %2770 = vmatpush1.msra.mxu0 0.0
        %2771 = vmatprep.subr.mxu0 0.0
        %2772 = vmatpush1.msra.mxu0 0.0
        %2773 = vmatprep.subr.mxu0 0.0
        %2774 = vmatpush1.msra.mxu0 0.0
        %2775 = vmatprep.subr.mxu0 0.0
        %2776 = vmatpush1.msra.mxu0 0.0
        %2777 = vmatprep.subr.mxu0 0.0
        %2778 = vmatpush1.msra.mxu0 0.0
        %2779 = vmatprep.subr.mxu0 0.0
        %2780 = vmatpush1.msra.mxu0 0.0
        %2781 = vmatprep.subr.mxu0 0.0
        %2782 = vmatpush1.msra.mxu0 0.0
        %2783 = vmatprep.subr.mxu0 0.0
        %2784 = vmatpush1.msra.mxu0 0.0
        %2785 = vmatprep.subr.mxu0 0.0
        %2786 = vmatpush1.msra.mxu0 0.0
        %2787 = vmatprep.subr.mxu0 0.0
        %2788 = vmatpush1.msra.mxu0 0.0
        %2789 = vmatprep.subr.mxu0 0.0
        %2790 = vmatpush1.msra.mxu0 0.0
        %2791 = vmatprep.subr.mxu0 0.0
        %2792 = vmatpush1.msra.mxu0 0.0
        %2793 = vmatprep.subr.mxu0 0.0
        %2794 = vmatpush1.msra.mxu0 0.0
        %2795 = vmatprep.subr.mxu0 0.0
        %2796 = vmatpush1.msra.mxu0 0.0
        %2797 = vmatprep.subr.mxu0 0.0
        %2798 = vmatpush1.msra.mxu0 0.0
        %2799 = vmatprep.subr.mxu0 0.0
        %2800 = vmatpush1.msra.mxu0 0.0
        %2801 = vmatprep.subr.mxu0 0.0
        %2802 = vmatpush1.msra.mxu0 0.0
        %2803 = vmatprep.subr.mxu0 0.0
        %2804 = vmatpush1.msra.mxu0 0.0
        %2805 = vmatprep.subr.mxu0 0.0
        %2806 = vmatpush1.msra.mxu0 0.0
        %2807 = vmatprep.subr.mxu0 0.0
        %2808 = vmatpush1.msra.mxu0 0.0
        %2809 = vmatprep.subr.mxu0 0.0
        %2810 = vmatpush1.msra.mxu0 0.0
        %2811 = vmatprep.subr.mxu0 0.0
        %2812 = vmatpush1.msra.mxu0 0.0
        %2813 = vmatprep.subr.mxu0 0.0
        %2814 = vmatpush1.msra.mxu0 0.0
        %2815 = vmatprep.subr.mxu0 0.0
        %2816 = vmatpush1.msra.mxu0 0.0
        %2817 = vmatprep.subr.mxu0 0.0
        %2818 = vmatpush1.msra.mxu0 0.0
        %2819 = vmatprep.subr.mxu0 0.0
        %2820 = vmatpush1.msra.mxu0 0.0
        %2821 = vmatprep.subr.mxu0 0.0
        %2822 = vmatpush1.msra.mxu0 0.0
        %2823 = vmatprep.mubr.f32.mxu0 0.0
        %v2824 = vand.u32 %v2290, 4294901760
        %v2825 = vsub.f32 %v2290, %v2824
        %v2826 = vand.u32 %v2825, 4294901760
        %v2827 = vsub.f32 %v2825, %v2826
        %v2828 = vand.u32 %v2827, 4294901760
        %2829 = vmatmul.mubr.f32.gmra.mrb[0].mxu0 %v2828
        %v2830 = vpop.f32.mrb[0].mxu0
        %v2831 = vadd.f32 %v2279, %v2830
        %v2832 = vpop.f32.mrb[0].mxu0
        %v2833 = vadd.f32 %v2283, %v2832
        %2834 = vdwg.mxu0
        %v2835 = vand.u32 %v2265, 4294901760
        %v2836 = vsub.f32 %v2265, %v2835
        %v2837 = vand.u32 %v2836, 4294901760
        %v2838 = vsub.f32 %v2836, %v2837
        %v2839 = vand.u32 %v2838, 4294901760
        %2840 = vmatprep.subr.mxu0 %v2839
        %v2841 = vand.u32 %v2264, 4294901760
        %v2842 = vsub.f32 %v2264, %v2841
        %v2843 = vand.u32 %v2842, 4294901760
        %v2844 = vsub.f32 %v2842, %v2843
        %v2845 = vand.u32 %v2844, 4294901760
        %2846 = vmatpush1.msra.mxu0 %v2845
        %2847 = vmatprep.subr.mxu0 0.0
        %2848 = vmatpush1.msra.mxu0 0.0
        %2849 = vmatprep.subr.mxu0 0.0
        %2850 = vmatpush1.msra.mxu0 0.0
        %2851 = vmatprep.subr.mxu0 0.0
        %2852 = vmatpush1.msra.mxu0 0.0
        %2853 = vmatprep.subr.mxu0 0.0
        %2854 = vmatpush1.msra.mxu0 0.0
        %2855 = vmatprep.subr.mxu0 0.0
        %2856 = vmatpush1.msra.mxu0 0.0
        %2857 = vmatprep.subr.mxu0 0.0
        %2858 = vmatpush1.msra.mxu0 0.0
        %2859 = vmatprep.subr.mxu0 0.0
        %2860 = vmatpush1.msra.mxu0 0.0
        %2861 = vmatprep.subr.mxu0 0.0
        %2862 = vmatpush1.msra.mxu0 0.0
        %2863 = vmatprep.subr.mxu0 0.0
        %2864 = vmatpush1.msra.mxu0 0.0
        %2865 = vmatprep.subr.mxu0 0.0
        %2866 = vmatpush1.msra.mxu0 0.0
        %2867 = vmatprep.subr.mxu0 0.0
        %2868 = vmatpush1.msra.mxu0 0.0
        %2869 = vmatprep.subr.mxu0 0.0
        %2870 = vmatpush1.msra.mxu0 0.0
        %2871 = vmatprep.subr.mxu0 0.0
        %2872 = vmatpush1.msra.mxu0 0.0
        %2873 = vmatprep.subr.mxu0 0.0
        %2874 = vmatpush1.msra.mxu0 0.0
        %2875 = vmatprep.subr.mxu0 0.0
        %2876 = vmatpush1.msra.mxu0 0.0
        %2877 = vmatprep.subr.mxu0 0.0
        %2878 = vmatpush1.msra.mxu0 0.0
        %2879 = vmatprep.subr.mxu0 0.0
        %2880 = vmatpush1.msra.mxu0 0.0
        %2881 = vmatprep.subr.mxu0 0.0
        %2882 = vmatpush1.msra.mxu0 0.0
        %2883 = vmatprep.subr.mxu0 0.0
        %2884 = vmatpush1.msra.mxu0 0.0
        %2885 = vmatprep.subr.mxu0 0.0
        %2886 = vmatpush1.msra.mxu0 0.0
        %2887 = vmatprep.subr.mxu0 0.0
        %2888 = vmatpush1.msra.mxu0 0.0
        %2889 = vmatprep.subr.mxu0 0.0
        %2890 = vmatpush1.msra.mxu0 0.0
        %2891 = vmatprep.subr.mxu0 0.0
        %2892 = vmatpush1.msra.mxu0 0.0
        %2893 = vmatprep.subr.mxu0 0.0
        %2894 = vmatpush1.msra.mxu0 0.0
        %2895 = vmatprep.subr.mxu0 0.0
        %2896 = vmatpush1.msra.mxu0 0.0
        %2897 = vmatprep.subr.mxu0 0.0
        %2898 = vmatpush1.msra.mxu0 0.0
        %2899 = vmatprep.subr.mxu0 0.0
        %2900 = vmatpush1.msra.mxu0 0.0
        %2901 = vmatprep.subr.mxu0 0.0
        %2902 = vmatpush1.msra.mxu0 0.0
        %2903 = vmatprep.subr.mxu0 0.0
        %2904 = vmatpush1.msra.mxu0 0.0
        %2905 = vmatprep.subr.mxu0 0.0
        %2906 = vmatpush1.msra.mxu0 0.0
        %2907 = vmatprep.subr.mxu0 0.0
        %2908 = vmatpush1.msra.mxu0 0.0
        %2909 = vmatprep.mubr.f32.mxu0 0.0
        %v2910 = vand.u32 %v2290, 4294901760
        %2911 = vmatmul.mubr.f32.gmra.mrb[0].mxu0 %v2910
        %v2912 = vpop.f32.mrb[0].mxu0
        %v2913 = vadd.f32 %v2831, %v2912
        %v2914 = vpop.f32.mrb[0].mxu0
        %v2915 = vadd.f32 %v2833, %v2914
        %2916 = vdwg.mxu0
        %v2917 = vand.u32 %v2265, 4294901760
        %v2918 = vsub.f32 %v2265, %v2917
        %2919 = vmatprep.subr.mxu0 %v2918
        %v2920 = vand.u32 %v2264, 4294901760
        %v2921 = vsub.f32 %v2264, %v2920
        %2922 = vmatpush1.msra.mxu0 %v2921
        %2923 = vmatprep.subr.mxu0 0.0
        %2924 = vmatpush1.msra.mxu0 0.0
        %2925 = vmatprep.subr.mxu0 0.0
        %2926 = vmatpush1.msra.mxu0 0.0
        %2927 = vmatprep.subr.mxu0 0.0
        %2928 = vmatpush1.msra.mxu0 0.0
        %2929 = vmatprep.subr.mxu0 0.0
        %2930 = vmatpush1.msra.mxu0 0.0
        %2931 = vmatprep.subr.mxu0 0.0
        %2932 = vmatpush1.msra.mxu0 0.0
        %2933 = vmatprep.subr.mxu0 0.0
        %2934 = vmatpush1.msra.mxu0 0.0
        %2935 = vmatprep.subr.mxu0 0.0
        %2936 = vmatpush1.msra.mxu0 0.0
        %2937 = vmatprep.subr.mxu0 0.0
        %2938 = vmatpush1.msra.mxu0 0.0
        %2939 = vmatprep.subr.mxu0 0.0
        %2940 = vmatpush1.msra.mxu0 0.0
        %2941 = vmatprep.subr.mxu0 0.0
        %2942 = vmatpush1.msra.mxu0 0.0
        %2943 = vmatprep.subr.mxu0 0.0
        %2944 = vmatpush1.msra.mxu0 0.0
        %2945 = vmatprep.subr.mxu0 0.0
        %2946 = vmatpush1.msra.mxu0 0.0
        %2947 = vmatprep.subr.mxu0 0.0
        %2948 = vmatpush1.msra.mxu0 0.0
        %2949 = vmatprep.subr.mxu0 0.0
        %2950 = vmatpush1.msra.mxu0 0.0
        %2951 = vmatprep.subr.mxu0 0.0
        %2952 = vmatpush1.msra.mxu0 0.0
        %2953 = vmatprep.subr.mxu0 0.0
        %2954 = vmatpush1.msra.mxu0 0.0
        %2955 = vmatprep.subr.mxu0 0.0
        %2956 = vmatpush1.msra.mxu0 0.0
        %2957 = vmatprep.subr.mxu0 0.0
        %2958 = vmatpush1.msra.mxu0 0.0
        %2959 = vmatprep.subr.mxu0 0.0
        %2960 = vmatpush1.msra.mxu0 0.0
        %2961 = vmatprep.subr.mxu0 0.0
        %2962 = vmatpush1.msra.mxu0 0.0
        %2963 = vmatprep.subr.mxu0 0.0
        %2964 = vmatpush1.msra.mxu0 0.0
        %2965 = vmatprep.subr.mxu0 0.0
        %2966 = vmatpush1.msra.mxu0 0.0
        %2967 = vmatprep.subr.mxu0 0.0
        %2968 = vmatpush1.msra.mxu0 0.0
        %2969 = vmatprep.subr.mxu0 0.0
        %2970 = vmatpush1.msra.mxu0 0.0
        %2971 = vmatprep.subr.mxu0 0.0
        %2972 = vmatpush1.msra.mxu0 0.0
        %2973 = vmatprep.subr.mxu0 0.0
        %2974 = vmatpush1.msra.mxu0 0.0
        %2975 = vmatprep.subr.mxu0 0.0
        %2976 = vmatpush1.msra.mxu0 0.0
        %2977 = vmatprep.subr.mxu0 0.0
        %2978 = vmatpush1.msra.mxu0 0.0
        %2979 = vmatprep.subr.mxu0 0.0
        %2980 = vmatpush1.msra.mxu0 0.0
        %2981 = vmatprep.subr.mxu0 0.0
        %2982 = vmatpush1.msra.mxu0 0.0
        %2983 = vmatprep.subr.mxu0 0.0
        %2984 = vmatpush1.msra.mxu0 0.0
        %2985 = vmatprep.mubr.f32.mxu0 0.0
        %v2986 = vand.u32 %v2290, 4294901760
        %v2987 = vsub.f32 %v2290, %v2986
        %2988 = vmatmul.mubr.f32.gmra.mrb[0].mxu0 %v2987
        %v2989 = vpop.f32.mrb[0].mxu0
        %v2990 = vadd.f32 %v2913, %v2989
        %v2991 = vpop.f32.mrb[0].mxu0
        %v2992 = vadd.f32 %v2915, %v2991
        %2993 = vdwg.mxu0
        %v2994 = vand.u32 %v2265, 4294901760
        %2995 = vmatprep.subr.mxu0 %v2994
        %v2996 = vand.u32 %v2264, 4294901760
        %2997 = vmatpush1.msra.mxu0 %v2996
        %2998 = vmatprep.subr.mxu0 0.0
        %2999 = vmatpush1.msra.mxu0 0.0
        %3000 = vmatprep.subr.mxu0 0.0
        %3001 = vmatpush1.msra.mxu0 0.0
        %3002 = vmatprep.subr.mxu0 0.0
        %3003 = vmatpush1.msra.mxu0 0.0
        %3004 = vmatprep.subr.mxu0 0.0
        %3005 = vmatpush1.msra.mxu0 0.0
        %3006 = vmatprep.subr.mxu0 0.0
        %3007 = vmatpush1.msra.mxu0 0.0
        %3008 = vmatprep.subr.mxu0 0.0
        %3009 = vmatpush1.msra.mxu0 0.0
        %3010 = vmatprep.subr.mxu0 0.0
        %3011 = vmatpush1.msra.mxu0 0.0
        %3012 = vmatprep.subr.mxu0 0.0
        %3013 = vmatpush1.msra.mxu0 0.0
        %3014 = vmatprep.subr.mxu0 0.0
        %3015 = vmatpush1.msra.mxu0 0.0
        %3016 = vmatprep.subr.mxu0 0.0
        %3017 = vmatpush1.msra.mxu0 0.0
        %3018 = vmatprep.subr.mxu0 0.0
        %3019 = vmatpush1.msra.mxu0 0.0
        %3020 = vmatprep.subr.mxu0 0.0
        %3021 = vmatpush1.msra.mxu0 0.0
        %3022 = vmatprep.subr.mxu0 0.0
        %3023 = vmatpush1.msra.mxu0 0.0
        %3024 = vmatprep.subr.mxu0 0.0
        %3025 = vmatpush1.msra.mxu0 0.0
        %3026 = vmatprep.subr.mxu0 0.0
        %3027 = vmatpush1.msra.mxu0 0.0
        %3028 = vmatprep.subr.mxu0 0.0
        %3029 = vmatpush1.msra.mxu0 0.0
        %3030 = vmatprep.subr.mxu0 0.0
        %3031 = vmatpush1.msra.mxu0 0.0
        %3032 = vmatprep.subr.mxu0 0.0
        %3033 = vmatpush1.msra.mxu0 0.0
        %3034 = vmatprep.subr.mxu0 0.0
        %3035 = vmatpush1.msra.mxu0 0.0
        %3036 = vmatprep.subr.mxu0 0.0
        %3037 = vmatpush1.msra.mxu0 0.0
        %3038 = vmatprep.subr.mxu0 0.0
        %3039 = vmatpush1.msra.mxu0 0.0
        %3040 = vmatprep.subr.mxu0 0.0
        %3041 = vmatpush1.msra.mxu0 0.0
        %3042 = vmatprep.subr.mxu0 0.0
        %3043 = vmatpush1.msra.mxu0 0.0
        %3044 = vmatprep.subr.mxu0 0.0
        %3045 = vmatpush1.msra.mxu0 0.0
        %3046 = vmatprep.subr.mxu0 0.0
        %3047 = vmatpush1.msra.mxu0 0.0
        %3048 = vmatprep.subr.mxu0 0.0
        %3049 = vmatpush1.msra.mxu0 0.0
        %3050 = vmatprep.subr.mxu0 0.0
        %3051 = vmatpush1.msra.mxu0 0.0
        %3052 = vmatprep.subr.mxu0 0.0
        %3053 = vmatpush1.msra.mxu0 0.0
        %3054 = vmatprep.subr.mxu0 0.0
        %3055 = vmatpush1.msra.mxu0 0.0
        %3056 = vmatprep.subr.mxu0 0.0
        %3057 = vmatpush1.msra.mxu0 0.0
        %3058 = vmatprep.subr.mxu0 0.0
        %3059 = vmatpush1.msra.mxu0 0.0
        %3060 = vmatprep.mubr.f32.mxu0 0.0
        %v3061 = vand.u32 %v2290, 4294901760
        %v3062 = vsub.f32 %v2290, %v3061
        %v3063 = vand.u32 %v3062, 4294901760
        %3064 = vmatmul.mubr.f32.gmra.mrb[0].mxu0 %v3063
        %v3065 = vpop.f32.mrb[0].mxu0
        %v3066 = vadd.f32 %v2990, %v3065
        %v3067 = vpop.f32.mrb[0].mxu0
        %v3068 = vadd.f32 %v2992, %v3067
        %3069 = vdwg.mxu0
        %v3070 = vand.u32 %v2265, 4294901760
        %v3071 = vsub.f32 %v2265, %v3070
        %v3072 = vand.u32 %v3071, 4294901760
        %3073 = vmatprep.subr.mxu0 %v3072
        %v3074 = vand.u32 %v2264, 4294901760
        %v3075 = vsub.f32 %v2264, %v3074
        %v3076 = vand.u32 %v3075, 4294901760
        %3077 = vmatpush1.msra.mxu0 %v3076
        %3078 = vmatprep.subr.mxu0 0.0
        %3079 = vmatpush1.msra.mxu0 0.0
        %3080 = vmatprep.subr.mxu0 0.0
        %3081 = vmatpush1.msra.mxu0 0.0
        %3082 = vmatprep.subr.mxu0 0.0
        %3083 = vmatpush1.msra.mxu0 0.0
        %3084 = vmatprep.subr.mxu0 0.0
        %3085 = vmatpush1.msra.mxu0 0.0
        %3086 = vmatprep.subr.mxu0 0.0
        %3087 = vmatpush1.msra.mxu0 0.0
        %3088 = vmatprep.subr.mxu0 0.0
        %3089 = vmatpush1.msra.mxu0 0.0
        %3090 = vmatprep.subr.mxu0 0.0
        %3091 = vmatpush1.msra.mxu0 0.0
        %3092 = vmatprep.subr.mxu0 0.0
        %3093 = vmatpush1.msra.mxu0 0.0
        %3094 = vmatprep.subr.mxu0 0.0
        %3095 = vmatpush1.msra.mxu0 0.0
        %3096 = vmatprep.subr.mxu0 0.0
        %3097 = vmatpush1.msra.mxu0 0.0
        %3098 = vmatprep.subr.mxu0 0.0
        %3099 = vmatpush1.msra.mxu0 0.0
        %3100 = vmatprep.subr.mxu0 0.0
        %3101 = vmatpush1.msra.mxu0 0.0
        %3102 = vmatprep.subr.mxu0 0.0
        %3103 = vmatpush1.msra.mxu0 0.0
        %3104 = vmatprep.subr.mxu0 0.0
        %3105 = vmatpush1.msra.mxu0 0.0
        %3106 = vmatprep.subr.mxu0 0.0
        %3107 = vmatpush1.msra.mxu0 0.0
        %3108 = vmatprep.subr.mxu0 0.0
        %3109 = vmatpush1.msra.mxu0 0.0
        %3110 = vmatprep.subr.mxu0 0.0
        %3111 = vmatpush1.msra.mxu0 0.0
        %3112 = vmatprep.subr.mxu0 0.0
        %3113 = vmatpush1.msra.mxu0 0.0
        %3114 = vmatprep.subr.mxu0 0.0
        %3115 = vmatpush1.msra.mxu0 0.0
        %3116 = vmatprep.subr.mxu0 0.0
        %3117 = vmatpush1.msra.mxu0 0.0
        %3118 = vmatprep.subr.mxu0 0.0
        %3119 = vmatpush1.msra.mxu0 0.0
        %3120 = vmatprep.subr.mxu0 0.0
        %3121 = vmatpush1.msra.mxu0 0.0
        %3122 = vmatprep.subr.mxu0 0.0
        %3123 = vmatpush1.msra.mxu0 0.0
        %3124 = vmatprep.subr.mxu0 0.0
        %3125 = vmatpush1.msra.mxu0 0.0
        %3126 = vmatprep.subr.mxu0 0.0
        %3127 = vmatpush1.msra.mxu0 0.0
        %3128 = vmatprep.subr.mxu0 0.0
        %3129 = vmatpush1.msra.mxu0 0.0
        %3130 = vmatprep.subr.mxu0 0.0
        %3131 = vmatpush1.msra.mxu0 0.0
        %3132 = vmatprep.subr.mxu0 0.0
        %3133 = vmatpush1.msra.mxu0 0.0
        %3134 = vmatprep.subr.mxu0 0.0
        %3135 = vmatpush1.msra.mxu0 0.0
        %3136 = vmatprep.subr.mxu0 0.0
        %3137 = vmatpush1.msra.mxu0 0.0
        %3138 = vmatprep.subr.mxu0 0.0
        %3139 = vmatpush1.msra.mxu0 0.0
        %3140 = vmatprep.mubr.f32.mxu0 0.0
        %v3141 = vand.u32 %v2290, 4294901760
        %3142 = vmatmul.mubr.f32.gmra.mrb[0].mxu0 %v3141
        %v3143 = vpop.f32.mrb[0].mxu0
        %v3144 = vadd.f32 %v3066, %v3143
        %v3145 = vpop.f32.mrb[0].mxu0
        %v3146 = vadd.f32 %v3068, %v3145
        %3147 = vdwg.mxu0
        %v3148 = vand.u32 %v2265, 4294901760
        %3149 = vmatprep.subr.mxu0 %v3148
        %v3150 = vand.u32 %v2264, 4294901760
        %3151 = vmatpush1.msra.mxu0 %v3150
        %3152 = vmatprep.subr.mxu0 0.0
        %3153 = vmatpush1.msra.mxu0 0.0
        %3154 = vmatprep.subr.mxu0 0.0
        %3155 = vmatpush1.msra.mxu0 0.0
        %3156 = vmatprep.subr.mxu0 0.0
        %3157 = vmatpush1.msra.mxu0 0.0
        %3158 = vmatprep.subr.mxu0 0.0
        %3159 = vmatpush1.msra.mxu0 0.0
        %3160 = vmatprep.subr.mxu0 0.0
        %3161 = vmatpush1.msra.mxu0 0.0
        %3162 = vmatprep.subr.mxu0 0.0
        %3163 = vmatpush1.msra.mxu0 0.0
        %3164 = vmatprep.subr.mxu0 0.0
        %3165 = vmatpush1.msra.mxu0 0.0
        %3166 = vmatprep.subr.mxu0 0.0
        %3167 = vmatpush1.msra.mxu0 0.0
        %3168 = vmatprep.subr.mxu0 0.0
        %3169 = vmatpush1.msra.mxu0 0.0
        %3170 = vmatprep.subr.mxu0 0.0
        %3171 = vmatpush1.msra.mxu0 0.0
        %3172 = vmatprep.subr.mxu0 0.0
        %3173 = vmatpush1.msra.mxu0 0.0
        %3174 = vmatprep.subr.mxu0 0.0
        %3175 = vmatpush1.msra.mxu0 0.0
        %3176 = vmatprep.subr.mxu0 0.0
        %3177 = vmatpush1.msra.mxu0 0.0
        %3178 = vmatprep.subr.mxu0 0.0
        %3179 = vmatpush1.msra.mxu0 0.0
        %3180 = vmatprep.subr.mxu0 0.0
        %3181 = vmatpush1.msra.mxu0 0.0
        %3182 = vmatprep.subr.mxu0 0.0
        %3183 = vmatpush1.msra.mxu0 0.0
        %3184 = vmatprep.subr.mxu0 0.0
        %3185 = vmatpush1.msra.mxu0 0.0
        %3186 = vmatprep.subr.mxu0 0.0
        %3187 = vmatpush1.msra.mxu0 0.0
        %3188 = vmatprep.subr.mxu0 0.0
        %3189 = vmatpush1.msra.mxu0 0.0
        %3190 = vmatprep.subr.mxu0 0.0
        %3191 = vmatpush1.msra.mxu0 0.0
        %3192 = vmatprep.subr.mxu0 0.0
        %3193 = vmatpush1.msra.mxu0 0.0
        %3194 = vmatprep.subr.mxu0 0.0
        %3195 = vmatpush1.msra.mxu0 0.0
        %3196 = vmatprep.subr.mxu0 0.0
        %3197 = vmatpush1.msra.mxu0 0.0
        %3198 = vmatprep.subr.mxu0 0.0
        %3199 = vmatpush1.msra.mxu0 0.0
        %3200 = vmatprep.subr.mxu0 0.0
        %3201 = vmatpush1.msra.mxu0 0.0
        %3202 = vmatprep.subr.mxu0 0.0
        %3203 = vmatpush1.msra.mxu0 0.0
        %3204 = vmatprep.subr.mxu0 0.0
        %3205 = vmatpush1.msra.mxu0 0.0
        %3206 = vmatprep.subr.mxu0 0.0
        %3207 = vmatpush1.msra.mxu0 0.0
        %3208 = vmatprep.subr.mxu0 0.0
        %3209 = vmatpush1.msra.mxu0 0.0
        %3210 = vmatprep.subr.mxu0 0.0
        %3211 = vmatpush1.msra.mxu0 0.0
        %3212 = vmatprep.subr.mxu0 0.0
        %3213 = vmatpush1.msra.mxu0 0.0
        %3214 = vmatprep.mubr.f32.mxu0 0.0
        %v3215 = vand.u32 %v2290, 4294901760
        %3216 = vmatmul.mubr.f32.gmra.mrb[0].mxu0 %v3215
        %v3217 = vpop.f32.mrb[0].mxu0
        %v3218 = vadd.f32 %v3144, %v3217
        %v3219 = vpop.f32.mrb[0].mxu0
        %v3220 = vadd.f32 %v3146, %v3219
        %3221 = vdwg.mxu0
        %3222 = vst [vmem:[%s363] sm:$0xff] %v2230
        %3223 = vst [vmem:[%s356] sm:$0xff] %v2753
        %3224 = vst [vmem:[%s356 + $0x8] sm:$0xff] %v2755
        %3225 = vst [vmem:[%s356 + $0x10] sm:$0xff] %v3218
        %3226 = vst.msk [vmem:[%s356 + $0x18] sm:$0xff] %vm441, %v3220
        %s3227 = sand.u32 %s230, 1
        %s3228 = scalar_lea.sflag [#allocation3], %s3227
        %s3229 = sand.u32 %s230, 1
        %s3230 = smul.addr %s3229, 32
        %s3231 = scalar_lea.vmem [#allocation2], %s3230
        %s3232 = sand.u32 %s256, 1
        %s3233 = scalar_lea.sflag [#allocation5], %s3232
        %s3234 = sand.u32 %s256, 1
        %s3235 = smul.addr %s3234, 8
        %s3236 = scalar_lea.vmem [#allocation4], %s3235
        // Predicated region
        $region57: #{tpu_custom_call.1} parent=55 // pred_check
          %p3237 = pneg %p240
        $region58: #{tpu_custom_call.1} parent=55 // pred_check_branch
          %3239 = sbr.rel (%p3237) target = $region60
        $region59: #{tpu_custom_call.1} parent=55 // pred_region
          %s3241 = ssub.s32 512, 512
          %3242 = vsyncadd %s3228, %s3241
          %s3243 = smul.addr %s28, 4
          %s3244 = smul.addr %s3243, 128
          %s3245 = scalar_lea.hbm %s9, %s3244
          %s3247 = sshll.u32 %s3231, 4
          %s3248 = int_to_ptr.vmem [resolvable:$true] %s3247
          %3250 = dma.vmem_to_hbm [thread:$0]  %s3248, 512, %s3245, %s3228
        $region60: #{tpu_custom_call.1} parent=55 // pred_fallthru
          _
        // Predicated region
        $region61: #{tpu_custom_call.1} parent=55 // pred_check
          %p3251 = pneg %p266
        $region62: #{tpu_custom_call.1} parent=55 // pred_check_branch
          %3253 = sbr.rel (%p3251) target = $region64
        $region63: #{tpu_custom_call.1} parent=55 // pred_region
          %s3255 = ssub.s32 128, 128
          %3256 = vsyncadd %s3233, %s3255
          %s3257 = smul.addr %s28, 128
          %s3258 = scalar_lea.hbm %s10, %s3257
          %s3260 = sshll.u32 %s3236, 4
          %s3261 = int_to_ptr.vmem [resolvable:$true] %s3260
          %3263 = dma.vmem_to_hbm [thread:$0]  %s3261, 128, %s3258, %s3233
        $region64: #{tpu_custom_call.1} parent=55 // pred_fallthru
          _
      $region56: #{tpu_custom_call.1} parent=5 // pred_fallthru
        _
      %p3264 = scmp.le.s32.totalorder 2, %s23
      // Predicated region
      $region65: #{tpu_custom_call.1} parent=5 // pred_check
        %p3265 = pneg %p3264
      $region66: #{tpu_custom_call.1} parent=5 // pred_check_branch
        %3267 = sbr.rel (%p3265) target = $region68
      $region67: #{tpu_custom_call.1} parent=5 // pred_region
        %s3268 = ssub.s32 %s23, 2
        // Predicated region
        $region69: #{tpu_custom_call.1} parent=67 // pred_check
          %p3269 = pneg %p246
        $region70: #{tpu_custom_call.1} parent=67 // pred_check_branch
          %3271 = sbr.rel (%p3269) target = $region72
        $region71: #{tpu_custom_call.1} parent=67 // pred_region
          %s3272 = sand.u32 %s231, 1
          %s3273 = scalar_lea.sflag [#allocation3], %s3272
          %s3274 = sand.u32 %s231, 1
          %s3275 = smul.addr %s3274, 32
          %s3276 = scalar_lea.vmem [#allocation2], %s3275
          %3277 = dma.done %s3273, 512
        $region72: #{tpu_custom_call.1} parent=67 // pred_fallthru
          _
        // Predicated region
        $region73: #{tpu_custom_call.1} parent=67 // pred_check
          %p3278 = pneg %p272
        $region74: #{tpu_custom_call.1} parent=67 // pred_check_branch
          %3280 = sbr.rel (%p3278) target = $region76
        $region75: #{tpu_custom_call.1} parent=67 // pred_region
          %s3281 = sand.u32 %s257, 1
          %s3282 = scalar_lea.sflag [#allocation5], %s3281
          %s3283 = sand.u32 %s257, 1
          %s3284 = smul.addr %s3283, 8
          %s3285 = scalar_lea.vmem [#allocation4], %s3284
          %3286 = dma.done %s3282, 128
        $region76: #{tpu_custom_call.1} parent=67 // pred_fallthru
          _
      $region68: #{tpu_custom_call.1} parent=5 // pred_fallthru
        _
    $region6: #{tpu_custom_call.1} parent=1 // loop_footer
      %s27 = sadd.s32 1, %s23
    $region7: #{tpu_custom_call.1} parent=1 // loop_footer_branch
      %22 = sbr.rel target = $region3
    $region8: #{tpu_custom_call.1} parent=1 // loop_exit
      _
    %3287 = vsyncpa [#allocation3], 1
    %s3288 = scalar_lea.sflag [#allocation3], 1
    %3289 = vsyncpa %s3288, 1
    %3290 = vsyncpa [#allocation5], 1
    %s3291 = scalar_lea.sflag [#allocation5], 1
    %3292 = vsyncpa %s3291, 1

</llo_original>
